<compile_context>
chip_gen: v6e
topology: v6e:2x2x1
jax: 0.10.0
libtpu: 0.0.40
codegen_flags: <defaults>
</compile_context>

<pallas_src>
import functools

import jax
import jax.numpy as jnp
from jax import lax
from jax.experimental import pallas as pl
from jax.experimental.pallas import tpu as pltpu


def _discriminator_kernel(x_ref, wih_ref, whh_ref, b_ref,
                          w1_ref, b1_ref, w2_ref, b2_ref,
                          out_ref, xp_ref, hh_ref, *, bp, t_steps):
    """Fused LSTM recurrence + FC head for all time steps.

    x_ref:   (T*BP, I)    time-major, batch padded to BP, flattened
    wih_ref: (4, I, H)    stacked per-gate input weights (i, f, g, o)
    whh_ref: (4, H, H)    stacked per-gate recurrent weights
    b_ref:   (4, 1, H)    per-gate bias (b_ih + b_hh)
    w1/b1:   (H, 16)/(1, 16)   fc layer 1
    w2/b2:   (16, 1)/(1, 1)    fc layer 2
    out_ref: (T*BP, 1)    sigmoid logits, written once
    xp_ref:  (4, T*BP, H) scratch: hoisted input projection per gate
    hh_ref:  (T*BP, H)    scratch: h_t history for the batched FC head
    """
    h_dim = whh_ref.shape[1]
    x_all = x_ref[...]                                            # (T*BP, I)

    # --- Hoisted input projection: no recurrence dependence, one pass/gate.
    for k in range(4):
        xp_ref[k] = (jnp.dot(x_all, wih_ref[k],
                             preferred_element_type=jnp.float32)
                     + b_ref[k])                                  # (T*BP, H)

    # --- Sequential LSTM recurrence, fully unrolled (T is small & static).
    def step(t, carry):
        h, c = carry
        row = pl.multiple_of(t * bp, bp)
        sl = pl.ds(row, bp)
        i_g = jax.nn.sigmoid(
            xp_ref[0, sl, :]
            + jnp.dot(h, whh_ref[0], preferred_element_type=jnp.float32))
        f_g = jax.nn.sigmoid(
            xp_ref[1, sl, :]
            + jnp.dot(h, whh_ref[1], preferred_element_type=jnp.float32))
        g_g = jnp.tanh(
            xp_ref[2, sl, :]
            + jnp.dot(h, whh_ref[2], preferred_element_type=jnp.float32))
        o_g = jax.nn.sigmoid(
            xp_ref[3, sl, :]
            + jnp.dot(h, whh_ref[3], preferred_element_type=jnp.float32))
        c_new = f_g * c + i_g * g_g
        h_new = o_g * jnp.tanh(c_new)
        hh_ref[sl, :] = h_new
        return h_new, c_new

    h0 = jnp.zeros((bp, h_dim), jnp.float32)
    c0 = jnp.zeros((bp, h_dim), jnp.float32)
    lax.fori_loop(0, t_steps, step, (h0, c0), unroll=True)

    # --- Hoisted FC head: one batched pass over all (T*BP) hidden states.
    h_all = hh_ref[...]                                           # (T*BP, H)
    hid = jnp.maximum(
        jnp.dot(h_all, w1_ref[...], preferred_element_type=jnp.float32)
        + b1_ref[...], 0.0)                                       # (T*BP, 16)
    logit = (jnp.dot(hid, w2_ref[...], preferred_element_type=jnp.float32)
             + b2_ref[...])                                       # (T*BP, 1)
    out_ref[...] = jax.nn.sigmoid(logit)


def discriminator_forward(x, params):
    """x: (B, T, I) float32 -> (B, T) float32."""
    B, T, I = x.shape
    H = params["w_hh"].shape[1]
    BP = max(8, ((B + 7) // 8) * 8)            # pad batch to a sublane group

    # Time-major, batch-padded, flattened input: row index = t*BP + b.
    x_tm = jnp.transpose(x, (1, 0, 2)).astype(jnp.float32)        # (T, B, I)
    x_tm = jnp.pad(x_tm, ((0, 0), (0, BP - B), (0, 0)))           # (T, BP, I)
    x_flat = x_tm.reshape(T * BP, I)

    # Stacked per-gate weights (PyTorch gate order i, f, g, o along dim 0).
    wih = params["w_ih"].reshape(4, H, I).transpose(0, 2, 1).astype(jnp.float32)
    whh = params["w_hh"].reshape(4, H, H).transpose(0, 2, 1).astype(jnp.float32)
    b = (params["b_ih"] + params["b_hh"]).reshape(4, 1, H).astype(jnp.float32)
    w1 = params["fc1_w"].T.astype(jnp.float32)                    # (H, 16)
    b1 = params["fc1_b"].reshape(1, 16).astype(jnp.float32)
    w2 = params["fc2_w"].T.astype(jnp.float32)                    # (16, 1)
    b2 = params["fc2_b"].reshape(1, 1).astype(jnp.float32)

    out = pl.pallas_call(
        functools.partial(_discriminator_kernel, bp=BP, t_steps=T),
        out_shape=jax.ShapeDtypeStruct((T * BP, 1), jnp.float32),
        scratch_shapes=[
            pltpu.VMEM((4, T * BP, H), jnp.float32),   # hoisted input projection
            pltpu.VMEM((T * BP, H), jnp.float32),      # h_t history for FC head
        ],
    )(x_flat, wih, whh, b, w1, b1, w2, b2)

    # Crop padding and restore (B, T) layout in the wrapper (free).
    return out[:, 0].reshape(T, BP)[:, :B].T


def reference_forward(x, params):
    """Pure-JAX reference (PyTorch LSTM + fc semantics)."""
    H = params["w_hh"].shape[1]
    B = x.shape[0]
    wih, whh = params["w_ih"], params["w_hh"]
    b = params["b_ih"] + params["b_hh"]

    def step(carry, x_t):
        h, c = carry
        gates = x_t @ wih.T + h @ whh.T + b
        i = jax.nn.sigmoid(gates[:, 0 * H:1 * H])
        f = jax.nn.sigmoid(gates[:, 1 * H:2 * H])
        g = jnp.tanh(gates[:, 2 * H:3 * H])
        o = jax.nn.sigmoid(gates[:, 3 * H:4 * H])
        c = f * c + i * g
        h = o * jnp.tanh(c)
        return (h, c), h

    init = (jnp.zeros((B, H), jnp.float32), jnp.zeros((B, H), jnp.float32))
    _, hs = jax.lax.scan(step, init, jnp.transpose(x, (1, 0, 2)))
    hs = jnp.transpose(hs, (1, 0, 2))                              # (B, T, H)
    hid = jnp.maximum(hs @ params["fc1_w"].T + params["fc1_b"], 0.0)
    out = jax.nn.sigmoid(hid @ params["fc2_w"].T + params["fc2_b"])
    return out[..., 0]                                             # squeeze(2)


def init_params(key, input_size, hidden, condition_size):
    ks = jax.random.split(key, 8)
    s = 1.0 / jnp.sqrt(hidden)
    u = lambda k, shape: jax.random.uniform(k, shape, jnp.float32, -s, s)
    params = {
        "w_ih": u(ks[0], (4 * hidden, input_size)),
        "w_hh": u(ks[1], (4 * hidden, hidden)),
        "b_ih": u(ks[2], (4 * hidden,)),
        "b_hh": u(ks[3], (4 * hidden,)),
        "fc1_w": u(ks[4], (16, hidden)),
        "fc1_b": u(ks[5], (16,)),
        "fc2_w": u(ks[6], (1, 16)),
        "fc2_b": u(ks[7], (1,)),
    }
    # TODO(synk): CondRNN.embedding (Linear(condition_size, hidden)) is defined
    # in __init__ but never used in forward, so it is intentionally omitted.
    return params


if __name__ == "__main__":
    B, T, INPUT_SIZE, HIDDEN_D, COND_SIZE = 4, 8, 8, 32, 6

    key = jax.random.PRNGKey(0)
    kx, kc, kp = jax.random.split(key, 3)
    x = jax.random.normal(kx, (B, T, INPUT_SIZE), jnp.float32)
    condition = jax.random.normal(kc, (B, COND_SIZE), jnp.float32)  # unused in forward
    params = init_params(kp, INPUT_SIZE, HIDDEN_D, COND_SIZE)

    y = discriminator_forward(x, params)
    y = jax.block_until_ready(y)

    y_ref = jax.block_until_ready(reference_forward(x, params))
    assert y.shape == (B, T), y.shape
    assert jnp.allclose(y, y_ref, atol=1e-5, rtol=1e-5), float(jnp.max(jnp.abs(y - y_ref)))

    print("KERNEL_OK")
</pallas_src>

<mosaic_0001>
module attributes {stable_mosaic.version = 11 : i64} {
  func.func @_discriminator_kernel(%arg0: memref<64x8xf32, #tpu.memory_space<vmem>>, %arg1: memref<4x8x32xf32, #tpu.memory_space<vmem>>, %arg2: memref<4x32x32xf32, #tpu.memory_space<vmem>>, %arg3: memref<4x1x32xf32, #tpu.memory_space<vmem>>, %arg4: memref<32x16xf32, #tpu.memory_space<vmem>>, %arg5: memref<1x16xf32, #tpu.memory_space<vmem>>, %arg6: memref<16x1xf32, #tpu.memory_space<vmem>>, %arg7: memref<1x1xf32, #tpu.memory_space<vmem>>, %arg8: memref<64x1xf32, #tpu.memory_space<vmem>>, %arg9: memref<4x64x32xf32, #tpu.memory_space<vmem>>, %arg10: memref<64x32xf32, #tpu.memory_space<vmem>>) attributes {dimension_semantics = [], scalar_prefetch = 0 : i64, scratch_operands = 2 : i64, tpu.core_type = #tpu.core_type<tc>} {
    %c0 = arith.constant 0 : index
    %c0_0 = arith.constant 0 : index
    %0 = vector.load %arg0[%c0, %c0_0] : memref<64x8xf32, #tpu.memory_space<vmem>>, vector<64x8xf32>
    %c0_1 = arith.constant 0 : index
    %c0_2 = arith.constant 0 : index
    %c0_3 = arith.constant 0 : index
    %1 = vector.load %arg1[%c0_1, %c0_2, %c0_3] : memref<4x8x32xf32, #tpu.memory_space<vmem>>, vector<1x8x32xf32>
    %2 = vector.shape_cast %1 : vector<1x8x32xf32> to vector<8x32xf32>
    %cst = arith.constant dense<0.000000e+00> : vector<64x32xf32>
    %3 = tpu.matmul %0, %2, %cst {dimension_numbers = #tpu.dot_dimension_numbers<[1], [0], [0], [1], [0, 0, 1, 1], [], []>} : vector<64x8xf32>, vector<8x32xf32>, vector<64x32xf32> -> vector<64x32xf32>
    %c0_4 = arith.constant 0 : index
    %c0_5 = arith.constant 0 : index
    %c0_6 = arith.constant 0 : index
    %4 = vector.load %arg3[%c0_4, %c0_5, %c0_6] : memref<4x1x32xf32, #tpu.memory_space<vmem>>, vector<1x1x32xf32>
    %5 = vector.shape_cast %4 : vector<1x1x32xf32> to vector<1x32xf32>
    %6 = vector.broadcast %5 : vector<1x32xf32> to vector<64x32xf32>
    %7 = arith.addf %3, %6 : vector<64x32xf32>
    %c0_7 = arith.constant 0 : index
    %c0_8 = arith.constant 0 : index
    %c0_9 = arith.constant 0 : index
    %8 = vector.load %arg9[%c0_7, %c0_8, %c0_9] : memref<4x64x32xf32, #tpu.memory_space<vmem>>, vector<1x64x32xf32>
    %9 = vector.shape_cast %8 : vector<1x64x32xf32> to vector<64x32xf32>
    %10 = vector.shape_cast %7 : vector<64x32xf32> to vector<1x64x32xf32>
    tpu.vector_store %arg9[%c0_7, %c0_8, %c0_9], %10 {strides = array<i32>} : memref<4x64x32xf32, #tpu.memory_space<vmem>>, vector<1x64x32xf32>,
    %c1 = arith.constant 1 : index
    %c0_10 = arith.constant 0 : index
    %c0_11 = arith.constant 0 : index
    %11 = vector.load %arg1[%c1, %c0_10, %c0_11] : memref<4x8x32xf32, #tpu.memory_space<vmem>>, vector<1x8x32xf32>
    %12 = vector.shape_cast %11 : vector<1x8x32xf32> to vector<8x32xf32>
    %cst_12 = arith.constant dense<0.000000e+00> : vector<64x32xf32>
    %13 = tpu.matmul %0, %12, %cst_12 {dimension_numbers = #tpu.dot_dimension_numbers<[1], [0], [0], [1], [0, 0, 1, 1], [], []>} : vector<64x8xf32>, vector<8x32xf32>, vector<64x32xf32> -> vector<64x32xf32>
    %c1_13 = arith.constant 1 : index
    %c0_14 = arith.constant 0 : index
    %c0_15 = arith.constant 0 : index
    %14 = vector.load %arg3[%c1_13, %c0_14, %c0_15] : memref<4x1x32xf32, #tpu.memory_space<vmem>>, vector<1x1x32xf32>
    %15 = vector.shape_cast %14 : vector<1x1x32xf32> to vector<1x32xf32>
    %16 = vector.broadcast %15 : vector<1x32xf32> to vector<64x32xf32>
    %17 = arith.addf %13, %16 : vector<64x32xf32>
    %c1_16 = arith.constant 1 : index
    %c0_17 = arith.constant 0 : index
    %c0_18 = arith.constant 0 : index
    %18 = vector.load %arg9[%c1_16, %c0_17, %c0_18] : memref<4x64x32xf32, #tpu.memory_space<vmem>>, vector<1x64x32xf32>
    %19 = vector.shape_cast %18 : vector<1x64x32xf32> to vector<64x32xf32>
    %20 = vector.shape_cast %17 : vector<64x32xf32> to vector<1x64x32xf32>
    tpu.vector_store %arg9[%c1_16, %c0_17, %c0_18], %20 {strides = array<i32>} : memref<4x64x32xf32, #tpu.memory_space<vmem>>, vector<1x64x32xf32>,
    %c2 = arith.constant 2 : index
    %c0_19 = arith.constant 0 : index
    %c0_20 = arith.constant 0 : index
    %21 = vector.load %arg1[%c2, %c0_19, %c0_20] : memref<4x8x32xf32, #tpu.memory_space<vmem>>, vector<1x8x32xf32>
    %22 = vector.shape_cast %21 : vector<1x8x32xf32> to vector<8x32xf32>
    %cst_21 = arith.constant dense<0.000000e+00> : vector<64x32xf32>
    %23 = tpu.matmul %0, %22, %cst_21 {dimension_numbers = #tpu.dot_dimension_numbers<[1], [0], [0], [1], [0, 0, 1, 1], [], []>} : vector<64x8xf32>, vector<8x32xf32>, vector<64x32xf32> -> vector<64x32xf32>
    %c2_22 = arith.constant 2 : index
    %c0_23 = arith.constant 0 : index
    %c0_24 = arith.constant 0 : index
    %24 = vector.load %arg3[%c2_22, %c0_23, %c0_24] : memref<4x1x32xf32, #tpu.memory_space<vmem>>, vector<1x1x32xf32>
    %25 = vector.shape_cast %24 : vector<1x1x32xf32> to vector<1x32xf32>
    %26 = vector.broadcast %25 : vector<1x32xf32> to vector<64x32xf32>
    %27 = arith.addf %23, %26 : vector<64x32xf32>
    %c2_25 = arith.constant 2 : index
    %c0_26 = arith.constant 0 : index
    %c0_27 = arith.constant 0 : index
    %28 = vector.load %arg9[%c2_25, %c0_26, %c0_27] : memref<4x64x32xf32, #tpu.memory_space<vmem>>, vector<1x64x32xf32>
    %29 = vector.shape_cast %28 : vector<1x64x32xf32> to vector<64x32xf32>
    %30 = vector.shape_cast %27 : vector<64x32xf32> to vector<1x64x32xf32>
    tpu.vector_store %arg9[%c2_25, %c0_26, %c0_27], %30 {strides = array<i32>} : memref<4x64x32xf32, #tpu.memory_space<vmem>>, vector<1x64x32xf32>,
    %c3 = arith.constant 3 : index
    %c0_28 = arith.constant 0 : index
    %c0_29 = arith.constant 0 : index
    %31 = vector.load %arg1[%c3, %c0_28, %c0_29] : memref<4x8x32xf32, #tpu.memory_space<vmem>>, vector<1x8x32xf32>
    %32 = vector.shape_cast %31 : vector<1x8x32xf32> to vector<8x32xf32>
    %cst_30 = arith.constant dense<0.000000e+00> : vector<64x32xf32>
    %33 = tpu.matmul %0, %32, %cst_30 {dimension_numbers = #tpu.dot_dimension_numbers<[1], [0], [0], [1], [0, 0, 1, 1], [], []>} : vector<64x8xf32>, vector<8x32xf32>, vector<64x32xf32> -> vector<64x32xf32>
    %c3_31 = arith.constant 3 : index
    %c0_32 = arith.constant 0 : index
    %c0_33 = arith.constant 0 : index
    %34 = vector.load %arg3[%c3_31, %c0_32, %c0_33] : memref<4x1x32xf32, #tpu.memory_space<vmem>>, vector<1x1x32xf32>
    %35 = vector.shape_cast %34 : vector<1x1x32xf32> to vector<1x32xf32>
    %36 = vector.broadcast %35 : vector<1x32xf32> to vector<64x32xf32>
    %37 = arith.addf %33, %36 : vector<64x32xf32>
    %c3_34 = arith.constant 3 : index
    %c0_35 = arith.constant 0 : index
    %c0_36 = arith.constant 0 : index
    %38 = vector.load %arg9[%c3_34, %c0_35, %c0_36] : memref<4x64x32xf32, #tpu.memory_space<vmem>>, vector<1x64x32xf32>
    %39 = vector.shape_cast %38 : vector<1x64x32xf32> to vector<64x32xf32>
    %40 = vector.shape_cast %37 : vector<64x32xf32> to vector<1x64x32xf32>
    tpu.vector_store %arg9[%c3_34, %c0_35, %c0_36], %40 {strides = array<i32>} : memref<4x64x32xf32, #tpu.memory_space<vmem>>, vector<1x64x32xf32>,
    %cst_37 = arith.constant 0.000000e+00 : f32
    %41 = vector.broadcast %cst_37 : f32 to vector<8x32xf32>
    %cst_38 = arith.constant 0.000000e+00 : f32
    %42 = vector.broadcast %cst_38 : f32 to vector<8x32xf32>
    %c0_i32 = arith.constant 0 : i32
    %c8_i32 = arith.constant 8 : i32
    %43 = arith.muli %c0_i32, %c8_i32 : i32
    %44 = tpu.assume_multiple %43, 8 : i32
    %c0_39 = arith.constant 0 : index
    %45 = arith.index_cast %44 : i32 to index
    %c0_40 = arith.constant 0 : index
    %46 = vector.load %arg9[%c0_39, %45, %c0_40] : memref<4x64x32xf32, #tpu.memory_space<vmem>>, vector<1x8x32xf32>
    %47 = vector.shape_cast %46 : vector<1x8x32xf32> to vector<8x32xf32>
    %c0_41 = arith.constant 0 : index
    %c0_42 = arith.constant 0 : index
    %c0_43 = arith.constant 0 : index
    %48 = vector.load %arg2[%c0_41, %c0_42, %c0_43] : memref<4x32x32xf32, #tpu.memory_space<vmem>>, vector<1x32x32xf32>
    %49 = vector.shape_cast %48 : vector<1x32x32xf32> to vector<32x32xf32>
    %cst_44 = arith.constant dense<0.000000e+00> : vector<8x32xf32>
    %50 = tpu.matmul %41, %49, %cst_44 {dimension_numbers = #tpu.dot_dimension_numbers<[1], [0], [0], [1], [0, 0, 1, 1], [], []>} : vector<8x32xf32>, vector<32x32xf32>, vector<8x32xf32> -> vector<8x32xf32>
    %51 = arith.addf %47, %50 : vector<8x32xf32>
    %52 = arith.negf %51 : vector<8x32xf32>
    %53 = math.exp %52 : vector<8x32xf32>
    %cst_45 = arith.constant 1.000000e+00 : f32
    %54 = vector.broadcast %cst_45 : f32 to vector<8x32xf32>
    %55 = arith.addf %54, %53 : vector<8x32xf32>
    %56 = arith.divf %54, %55 : vector<8x32xf32>
    %c1_46 = arith.constant 1 : index
    %57 = arith.index_cast %44 : i32 to index
    %c0_47 = arith.constant 0 : index
    %58 = vector.load %arg9[%c1_46, %57, %c0_47] : memref<4x64x32xf32, #tpu.memory_space<vmem>>, vector<1x8x32xf32>
    %59 = vector.shape_cast %58 : vector<1x8x32xf32> to vector<8x32xf32>
    %c1_48 = arith.constant 1 : index
    %c0_49 = arith.constant 0 : index
    %c0_50 = arith.constant 0 : index
    %60 = vector.load %arg2[%c1_48, %c0_49, %c0_50] : memref<4x32x32xf32, #tpu.memory_space<vmem>>, vector<1x32x32xf32>
    %61 = vector.shape_cast %60 : vector<1x32x32xf32> to vector<32x32xf32>
    %cst_51 = arith.constant dense<0.000000e+00> : vector<8x32xf32>
    %62 = tpu.matmul %41, %61, %cst_51 {dimension_numbers = #tpu.dot_dimension_numbers<[1], [0], [0], [1], [0, 0, 1, 1], [], []>} : vector<8x32xf32>, vector<32x32xf32>, vector<8x32xf32> -> vector<8x32xf32>
    %63 = arith.addf %59, %62 : vector<8x32xf32>
    %64 = arith.negf %63 : vector<8x32xf32>
    %65 = math.exp %64 : vector<8x32xf32>
    %cst_52 = arith.constant 1.000000e+00 : f32
    %66 = vector.broadcast %cst_52 : f32 to vector<8x32xf32>
    %67 = arith.addf %66, %65 : vector<8x32xf32>
    %68 = arith.divf %66, %67 : vector<8x32xf32>
    %c2_53 = arith.constant 2 : index
    %69 = arith.index_cast %44 : i32 to index
    %c0_54 = arith.constant 0 : index
    %70 = vector.load %arg9[%c2_53, %69, %c0_54] : memref<4x64x32xf32, #tpu.memory_space<vmem>>, vector<1x8x32xf32>
    %71 = vector.shape_cast %70 : vector<1x8x32xf32> to vector<8x32xf32>
    %c2_55 = arith.constant 2 : index
    %c0_56 = arith.constant 0 : index
    %c0_57 = arith.constant 0 : index
    %72 = vector.load %arg2[%c2_55, %c0_56, %c0_57] : memref<4x32x32xf32, #tpu.memory_space<vmem>>, vector<1x32x32xf32>
    %73 = vector.shape_cast %72 : vector<1x32x32xf32> to vector<32x32xf32>
    %cst_58 = arith.constant dense<0.000000e+00> : vector<8x32xf32>
    %74 = tpu.matmul %41, %73, %cst_58 {dimension_numbers = #tpu.dot_dimension_numbers<[1], [0], [0], [1], [0, 0, 1, 1], [], []>} : vector<8x32xf32>, vector<32x32xf32>, vector<8x32xf32> -> vector<8x32xf32>
    %75 = arith.addf %71, %74 : vector<8x32xf32>
    %76 = math.tanh %75 : vector<8x32xf32>
    %c3_59 = arith.constant 3 : index
    %77 = arith.index_cast %44 : i32 to index
    %c0_60 = arith.constant 0 : index
    %78 = vector.load %arg9[%c3_59, %77, %c0_60] : memref<4x64x32xf32, #tpu.memory_space<vmem>>, vector<1x8x32xf32>
    %79 = vector.shape_cast %78 : vector<1x8x32xf32> to vector<8x32xf32>
    %c3_61 = arith.constant 3 : index
    %c0_62 = arith.constant 0 : index
    %c0_63 = arith.constant 0 : index
    %80 = vector.load %arg2[%c3_61, %c0_62, %c0_63] : memref<4x32x32xf32, #tpu.memory_space<vmem>>, vector<1x32x32xf32>
    %81 = vector.shape_cast %80 : vector<1x32x32xf32> to vector<32x32xf32>
    %cst_64 = arith.constant dense<0.000000e+00> : vector<8x32xf32>
    %82 = tpu.matmul %41, %81, %cst_64 {dimension_numbers = #tpu.dot_dimension_numbers<[1], [0], [0], [1], [0, 0, 1, 1], [], []>} : vector<8x32xf32>, vector<32x32xf32>, vector<8x32xf32> -> vector<8x32xf32>
    %83 = arith.addf %79, %82 : vector<8x32xf32>
    %84 = arith.negf %83 : vector<8x32xf32>
    %85 = math.exp %84 : vector<8x32xf32>
    %cst_65 = arith.constant 1.000000e+00 : f32
    %86 = vector.broadcast %cst_65 : f32 to vector<8x32xf32>
    %87 = arith.addf %86, %85 : vector<8x32xf32>
    %88 = arith.divf %86, %87 : vector<8x32xf32>
    %89 = arith.mulf %68, %42 : vector<8x32xf32>
    %90 = arith.mulf %56, %76 : vector<8x32xf32>
    %91 = arith.addf %89, %90 : vector<8x32xf32>
    %92 = math.tanh %91 : vector<8x32xf32>
    %93 = arith.mulf %88, %92 : vector<8x32xf32>
    %94 = arith.index_cast %44 : i32 to index
    %c0_66 = arith.constant 0 : index
    %95 = vector.load %arg10[%94, %c0_66] : memref<64x32xf32, #tpu.memory_space<vmem>>, vector<8x32xf32>
    tpu.vector_store %arg10[%94, %c0_66], %93 {strides = array<i32>} : memref<64x32xf32, #tpu.memory_space<vmem>>, vector<8x32xf32>,
    %c1_i32 = arith.constant 1 : i32
    %c8_i32_67 = arith.constant 8 : i32
    %96 = arith.muli %c1_i32, %c8_i32_67 : i32
    %97 = tpu.assume_multiple %96, 8 : i32
    %c0_68 = arith.constant 0 : index
    %98 = arith.index_cast %97 : i32 to index
    %c0_69 = arith.constant 0 : index
    %99 = vector.load %arg9[%c0_68, %98, %c0_69] : memref<4x64x32xf32, #tpu.memory_space<vmem>>, vector<1x8x32xf32>
    %100 = vector.shape_cast %99 : vector<1x8x32xf32> to vector<8x32xf32>
    %c0_70 = arith.constant 0 : index
    %c0_71 = arith.constant 0 : index
    %c0_72 = arith.constant 0 : index
    %101 = vector.load %arg2[%c0_70, %c0_71, %c0_72] : memref<4x32x32xf32, #tpu.memory_space<vmem>>, vector<1x32x32xf32>
    %102 = vector.shape_cast %101 : vector<1x32x32xf32> to vector<32x32xf32>
    %cst_73 = arith.constant dense<0.000000e+00> : vector<8x32xf32>
    %103 = tpu.matmul %93, %102, %cst_73 {dimension_numbers = #tpu.dot_dimension_numbers<[1], [0], [0], [1], [0, 0, 1, 1], [], []>} : vector<8x32xf32>, vector<32x32xf32>, vector<8x32xf32> -> vector<8x32xf32>
    %104 = arith.addf %100, %103 : vector<8x32xf32>
    %105 = arith.negf %104 : vector<8x32xf32>
    %106 = math.exp %105 : vector<8x32xf32>
    %cst_74 = arith.constant 1.000000e+00 : f32
    %107 = vector.broadcast %cst_74 : f32 to vector<8x32xf32>
    %108 = arith.addf %107, %106 : vector<8x32xf32>
    %109 = arith.divf %107, %108 : vector<8x32xf32>
    %c1_75 = arith.constant 1 : index
    %110 = arith.index_cast %97 : i32 to index
    %c0_76 = arith.constant 0 : index
    %111 = vector.load %arg9[%c1_75, %110, %c0_76] : memref<4x64x32xf32, #tpu.memory_space<vmem>>, vector<1x8x32xf32>
    %112 = vector.shape_cast %111 : vector<1x8x32xf32> to vector<8x32xf32>
    %c1_77 = arith.constant 1 : index
    %c0_78 = arith.constant 0 : index
    %c0_79 = arith.constant 0 : index
    %113 = vector.load %arg2[%c1_77, %c0_78, %c0_79] : memref<4x32x32xf32, #tpu.memory_space<vmem>>, vector<1x32x32xf32>
    %114 = vector.shape_cast %113 : vector<1x32x32xf32> to vector<32x32xf32>
    %cst_80 = arith.constant dense<0.000000e+00> : vector<8x32xf32>
    %115 = tpu.matmul %93, %114, %cst_80 {dimension_numbers = #tpu.dot_dimension_numbers<[1], [0], [0], [1], [0, 0, 1, 1], [], []>} : vector<8x32xf32>, vector<32x32xf32>, vector<8x32xf32> -> vector<8x32xf32>
    %116 = arith.addf %112, %115 : vector<8x32xf32>
    %117 = arith.negf %116 : vector<8x32xf32>
    %118 = math.exp %117 : vector<8x32xf32>
    %cst_81 = arith.constant 1.000000e+00 : f32
    %119 = vector.broadcast %cst_81 : f32 to vector<8x32xf32>
    %120 = arith.addf %119, %118 : vector<8x32xf32>
    %121 = arith.divf %119, %120 : vector<8x32xf32>
    %c2_82 = arith.constant 2 : index
    %122 = arith.index_cast %97 : i32 to index
    %c0_83 = arith.constant 0 : index
    %123 = vector.load %arg9[%c2_82, %122, %c0_83] : memref<4x64x32xf32, #tpu.memory_space<vmem>>, vector<1x8x32xf32>
    %124 = vector.shape_cast %123 : vector<1x8x32xf32> to vector<8x32xf32>
    %c2_84 = arith.constant 2 : index
    %c0_85 = arith.constant 0 : index
    %c0_86 = arith.constant 0 : index
    %125 = vector.load %arg2[%c2_84, %c0_85, %c0_86] : memref<4x32x32xf32, #tpu.memory_space<vmem>>, vector<1x32x32xf32>
    %126 = vector.shape_cast %125 : vector<1x32x32xf32> to vector<32x32xf32>
    %cst_87 = arith.constant dense<0.000000e+00> : vector<8x32xf32>
    %127 = tpu.matmul %93, %126, %cst_87 {dimension_numbers = #tpu.dot_dimension_numbers<[1], [0], [0], [1], [0, 0, 1, 1], [], []>} : vector<8x32xf32>, vector<32x32xf32>, vector<8x32xf32> -> vector<8x32xf32>
    %128 = arith.addf %124, %127 : vector<8x32xf32>
    %129 = math.tanh %128 : vector<8x32xf32>
    %c3_88 = arith.constant 3 : index
    %130 = arith.index_cast %97 : i32 to index
    %c0_89 = arith.constant 0 : index
    %131 = vector.load %arg9[%c3_88, %130, %c0_89] : memref<4x64x32xf32, #tpu.memory_space<vmem>>, vector<1x8x32xf32>
    %132 = vector.shape_cast %131 : vector<1x8x32xf32> to vector<8x32xf32>
    %c3_90 = arith.constant 3 : index
    %c0_91 = arith.constant 0 : index
    %c0_92 = arith.constant 0 : index
    %133 = vector.load %arg2[%c3_90, %c0_91, %c0_92] : memref<4x32x32xf32, #tpu.memory_space<vmem>>, vector<1x32x32xf32>
    %134 = vector.shape_cast %133 : vector<1x32x32xf32> to vector<32x32xf32>
    %cst_93 = arith.constant dense<0.000000e+00> : vector<8x32xf32>
    %135 = tpu.matmul %93, %134, %cst_93 {dimension_numbers = #tpu.dot_dimension_numbers<[1], [0], [0], [1], [0, 0, 1, 1], [], []>} : vector<8x32xf32>, vector<32x32xf32>, vector<8x32xf32> -> vector<8x32xf32>
    %136 = arith.addf %132, %135 : vector<8x32xf32>
    %137 = arith.negf %136 : vector<8x32xf32>
    %138 = math.exp %137 : vector<8x32xf32>
    %cst_94 = arith.constant 1.000000e+00 : f32
    %139 = vector.broadcast %cst_94 : f32 to vector<8x32xf32>
    %140 = arith.addf %139, %138 : vector<8x32xf32>
    %141 = arith.divf %139, %140 : vector<8x32xf32>
    %142 = arith.mulf %121, %91 : vector<8x32xf32>
    %143 = arith.mulf %109, %129 : vector<8x32xf32>
    %144 = arith.addf %142, %143 : vector<8x32xf32>
    %145 = math.tanh %144 : vector<8x32xf32>
    %146 = arith.mulf %141, %145 : vector<8x32xf32>
    %147 = arith.index_cast %97 : i32 to index
    %c0_95 = arith.constant 0 : index
    %148 = vector.load %arg10[%147, %c0_95] : memref<64x32xf32, #tpu.memory_space<vmem>>, vector<8x32xf32>
    tpu.vector_store %arg10[%147, %c0_95], %146 {strides = array<i32>} : memref<64x32xf32, #tpu.memory_space<vmem>>, vector<8x32xf32>,
    %c2_i32 = arith.constant 2 : i32
    %c8_i32_96 = arith.constant 8 : i32
    %149 = arith.muli %c2_i32, %c8_i32_96 : i32
    %150 = tpu.assume_multiple %149, 8 : i32
    %c0_97 = arith.constant 0 : index
    %151 = arith.index_cast %150 : i32 to index
    %c0_98 = arith.constant 0 : index
    %152 = vector.load %arg9[%c0_97, %151, %c0_98] : memref<4x64x32xf32, #tpu.memory_space<vmem>>, vector<1x8x32xf32>
    %153 = vector.shape_cast %152 : vector<1x8x32xf32> to vector<8x32xf32>
    %c0_99 = arith.constant 0 : index
    %c0_100 = arith.constant 0 : index
    %c0_101 = arith.constant 0 : index
    %154 = vector.load %arg2[%c0_99, %c0_100, %c0_101] : memref<4x32x32xf32, #tpu.memory_space<vmem>>, vector<1x32x32xf32>
    %155 = vector.shape_cast %154 : vector<1x32x32xf32> to vector<32x32xf32>
    %cst_102 = arith.constant dense<0.000000e+00> : vector<8x32xf32>
    %156 = tpu.matmul %146, %155, %cst_102 {dimension_numbers = #tpu.dot_dimension_numbers<[1], [0], [0], [1], [0, 0, 1, 1], [], []>} : vector<8x32xf32>, vector<32x32xf32>, vector<8x32xf32> -> vector<8x32xf32>
    %157 = arith.addf %153, %156 : vector<8x32xf32>
    %158 = arith.negf %157 : vector<8x32xf32>
    %159 = math.exp %158 : vector<8x32xf32>
    %cst_103 = arith.constant 1.000000e+00 : f32
    %160 = vector.broadcast %cst_103 : f32 to vector<8x32xf32>
    %161 = arith.addf %160, %159 : vector<8x32xf32>
    %162 = arith.divf %160, %161 : vector<8x32xf32>
    %c1_104 = arith.constant 1 : index
    %163 = arith.index_cast %150 : i32 to index
    %c0_105 = arith.constant 0 : index
    %164 = vector.load %arg9[%c1_104, %163, %c0_105] : memref<4x64x32xf32, #tpu.memory_space<vmem>>, vector<1x8x32xf32>
    %165 = vector.shape_cast %164 : vector<1x8x32xf32> to vector<8x32xf32>
    %c1_106 = arith.constant 1 : index
    %c0_107 = arith.constant 0 : index
    %c0_108 = arith.constant 0 : index
    %166 = vector.load %arg2[%c1_106, %c0_107, %c0_108] : memref<4x32x32xf32, #tpu.memory_space<vmem>>, vector<1x32x32xf32>
    %167 = vector.shape_cast %166 : vector<1x32x32xf32> to vector<32x32xf32>
    %cst_109 = arith.constant dense<0.000000e+00> : vector<8x32xf32>
    %168 = tpu.matmul %146, %167, %cst_109 {dimension_numbers = #tpu.dot_dimension_numbers<[1], [0], [0], [1], [0, 0, 1, 1], [], []>} : vector<8x32xf32>, vector<32x32xf32>, vector<8x32xf32> -> vector<8x32xf32>
    %169 = arith.addf %165, %168 : vector<8x32xf32>
    %170 = arith.negf %169 : vector<8x32xf32>
    %171 = math.exp %170 : vector<8x32xf32>
    %cst_110 = arith.constant 1.000000e+00 : f32
    %172 = vector.broadcast %cst_110 : f32 to vector<8x32xf32>
    %173 = arith.addf %172, %171 : vector<8x32xf32>
    %174 = arith.divf %172, %173 : vector<8x32xf32>
    %c2_111 = arith.constant 2 : index
    %175 = arith.index_cast %150 : i32 to index
    %c0_112 = arith.constant 0 : index
    %176 = vector.load %arg9[%c2_111, %175, %c0_112] : memref<4x64x32xf32, #tpu.memory_space<vmem>>, vector<1x8x32xf32>
    %177 = vector.shape_cast %176 : vector<1x8x32xf32> to vector<8x32xf32>
    %c2_113 = arith.constant 2 : index
    %c0_114 = arith.constant 0 : index
    %c0_115 = arith.constant 0 : index
    %178 = vector.load %arg2[%c2_113, %c0_114, %c0_115] : memref<4x32x32xf32, #tpu.memory_space<vmem>>, vector<1x32x32xf32>
    %179 = vector.shape_cast %178 : vector<1x32x32xf32> to vector<32x32xf32>
    %cst_116 = arith.constant dense<0.000000e+00> : vector<8x32xf32>
    %180 = tpu.matmul %146, %179, %cst_116 {dimension_numbers = #tpu.dot_dimension_numbers<[1], [0], [0], [1], [0, 0, 1, 1], [], []>} : vector<8x32xf32>, vector<32x32xf32>, vector<8x32xf32> -> vector<8x32xf32>
    %181 = arith.addf %177, %180 : vector<8x32xf32>
    %182 = math.tanh %181 : vector<8x32xf32>
    %c3_117 = arith.constant 3 : index
    %183 = arith.index_cast %150 : i32 to index
    %c0_118 = arith.constant 0 : index
    %184 = vector.load %arg9[%c3_117, %183, %c0_118] : memref<4x64x32xf32, #tpu.memory_space<vmem>>, vector<1x8x32xf32>
    %185 = vector.shape_cast %184 : vector<1x8x32xf32> to vector<8x32xf32>
    %c3_119 = arith.constant 3 : index
    %c0_120 = arith.constant 0 : index
    %c0_121 = arith.constant 0 : index
    %186 = vector.load %arg2[%c3_119, %c0_120, %c0_121] : memref<4x32x32xf32, #tpu.memory_space<vmem>>, vector<1x32x32xf32>
    %187 = vector.shape_cast %186 : vector<1x32x32xf32> to vector<32x32xf32>
    %cst_122 = arith.constant dense<0.000000e+00> : vector<8x32xf32>
    %188 = tpu.matmul %146, %187, %cst_122 {dimension_numbers = #tpu.dot_dimension_numbers<[1], [0], [0], [1], [0, 0, 1, 1], [], []>} : vector<8x32xf32>, vector<32x32xf32>, vector<8x32xf32> -> vector<8x32xf32>
    %189 = arith.addf %185, %188 : vector<8x32xf32>
    %190 = arith.negf %189 : vector<8x32xf32>
    %191 = math.exp %190 : vector<8x32xf32>
    %cst_123 = arith.constant 1.000000e+00 : f32
    %192 = vector.broadcast %cst_123 : f32 to vector<8x32xf32>
    %193 = arith.addf %192, %191 : vector<8x32xf32>
    %194 = arith.divf %192, %193 : vector<8x32xf32>
    %195 = arith.mulf %174, %144 : vector<8x32xf32>
    %196 = arith.mulf %162, %182 : vector<8x32xf32>
    %197 = arith.addf %195, %196 : vector<8x32xf32>
    %198 = math.tanh %197 : vector<8x32xf32>
    %199 = arith.mulf %194, %198 : vector<8x32xf32>
    %200 = arith.index_cast %150 : i32 to index
    %c0_124 = arith.constant 0 : index
    %201 = vector.load %arg10[%200, %c0_124] : memref<64x32xf32, #tpu.memory_space<vmem>>, vector<8x32xf32>
    tpu.vector_store %arg10[%200, %c0_124], %199 {strides = array<i32>} : memref<64x32xf32, #tpu.memory_space<vmem>>, vector<8x32xf32>,
    %c3_i32 = arith.constant 3 : i32
    %c8_i32_125 = arith.constant 8 : i32
    %202 = arith.muli %c3_i32, %c8_i32_125 : i32
    %203 = tpu.assume_multiple %202, 8 : i32
    %c0_126 = arith.constant 0 : index
    %204 = arith.index_cast %203 : i32 to index
    %c0_127 = arith.constant 0 : index
    %205 = vector.load %arg9[%c0_126, %204, %c0_127] : memref<4x64x32xf32, #tpu.memory_space<vmem>>, vector<1x8x32xf32>
    %206 = vector.shape_cast %205 : vector<1x8x32xf32> to vector<8x32xf32>
    %c0_128 = arith.constant 0 : index
    %c0_129 = arith.constant 0 : index
    %c0_130 = arith.constant 0 : index
    %207 = vector.load %arg2[%c0_128, %c0_129, %c0_130] : memref<4x32x32xf32, #tpu.memory_space<vmem>>, vector<1x32x32xf32>
    %208 = vector.shape_cast %207 : vector<1x32x32xf32> to vector<32x32xf32>
    %cst_131 = arith.constant dense<0.000000e+00> : vector<8x32xf32>
    %209 = tpu.matmul %199, %208, %cst_131 {dimension_numbers = #tpu.dot_dimension_numbers<[1], [0], [0], [1], [0, 0, 1, 1], [], []>} : vector<8x32xf32>, vector<32x32xf32>, vector<8x32xf32> -> vector<8x32xf32>
    %210 = arith.addf %206, %209 : vector<8x32xf32>
    %211 = arith.negf %210 : vector<8x32xf32>
    %212 = math.exp %211 : vector<8x32xf32>
    %cst_132 = arith.constant 1.000000e+00 : f32
    %213 = vector.broadcast %cst_132 : f32 to vector<8x32xf32>
    %214 = arith.addf %213, %212 : vector<8x32xf32>
    %215 = arith.divf %213, %214 : vector<8x32xf32>
    %c1_133 = arith.constant 1 : index
    %216 = arith.index_cast %203 : i32 to index
    %c0_134 = arith.constant 0 : index
    %217 = vector.load %arg9[%c1_133, %216, %c0_134] : memref<4x64x32xf32, #tpu.memory_space<vmem>>, vector<1x8x32xf32>
    %218 = vector.shape_cast %217 : vector<1x8x32xf32> to vector<8x32xf32>
    %c1_135 = arith.constant 1 : index
    %c0_136 = arith.constant 0 : index
    %c0_137 = arith.constant 0 : index
    %219 = vector.load %arg2[%c1_135, %c0_136, %c0_137] : memref<4x32x32xf32, #tpu.memory_space<vmem>>, vector<1x32x32xf32>
    %220 = vector.shape_cast %219 : vector<1x32x32xf32> to vector<32x32xf32>
    %cst_138 = arith.constant dense<0.000000e+00> : vector<8x32xf32>
    %221 = tpu.matmul %199, %220, %cst_138 {dimension_numbers = #tpu.dot_dimension_numbers<[1], [0], [0], [1], [0, 0, 1, 1], [], []>} : vector<8x32xf32>, vector<32x32xf32>, vector<8x32xf32> -> vector<8x32xf32>
    %222 = arith.addf %218, %221 : vector<8x32xf32>
    %223 = arith.negf %222 : vector<8x32xf32>
    %224 = math.exp %223 : vector<8x32xf32>
    %cst_139 = arith.constant 1.000000e+00 : f32
    %225 = vector.broadcast %cst_139 : f32 to vector<8x32xf32>
    %226 = arith.addf %225, %224 : vector<8x32xf32>
    %227 = arith.divf %225, %226 : vector<8x32xf32>
    %c2_140 = arith.constant 2 : index
    %228 = arith.index_cast %203 : i32 to index
    %c0_141 = arith.constant 0 : index
    %229 = vector.load %arg9[%c2_140, %228, %c0_141] : memref<4x64x32xf32, #tpu.memory_space<vmem>>, vector<1x8x32xf32>
    %230 = vector.shape_cast %229 : vector<1x8x32xf32> to vector<8x32xf32>
    %c2_142 = arith.constant 2 : index
    %c0_143 = arith.constant 0 : index
    %c0_144 = arith.constant 0 : index
    %231 = vector.load %arg2[%c2_142, %c0_143, %c0_144] : memref<4x32x32xf32, #tpu.memory_space<vmem>>, vector<1x32x32xf32>
    %232 = vector.shape_cast %231 : vector<1x32x32xf32> to vector<32x32xf32>
    %cst_145 = arith.constant dense<0.000000e+00> : vector<8x32xf32>
    %233 = tpu.matmul %199, %232, %cst_145 {dimension_numbers = #tpu.dot_dimension_numbers<[1], [0], [0], [1], [0, 0, 1, 1], [], []>} : vector<8x32xf32>, vector<32x32xf32>, vector<8x32xf32> -> vector<8x32xf32>
    %234 = arith.addf %230, %233 : vector<8x32xf32>
    %235 = math.tanh %234 : vector<8x32xf32>
    %c3_146 = arith.constant 3 : index
    %236 = arith.index_cast %203 : i32 to index
    %c0_147 = arith.constant 0 : index
    %237 = vector.load %arg9[%c3_146, %236, %c0_147] : memref<4x64x32xf32, #tpu.memory_space<vmem>>, vector<1x8x32xf32>
    %238 = vector.shape_cast %237 : vector<1x8x32xf32> to vector<8x32xf32>
    %c3_148 = arith.constant 3 : index
    %c0_149 = arith.constant 0 : index
    %c0_150 = arith.constant 0 : index
    %239 = vector.load %arg2[%c3_148, %c0_149, %c0_150] : memref<4x32x32xf32, #tpu.memory_space<vmem>>, vector<1x32x32xf32>
    %240 = vector.shape_cast %239 : vector<1x32x32xf32> to vector<32x32xf32>
    %cst_151 = arith.constant dense<0.000000e+00> : vector<8x32xf32>
    %241 = tpu.matmul %199, %240, %cst_151 {dimension_numbers = #tpu.dot_dimension_numbers<[1], [0], [0], [1], [0, 0, 1, 1], [], []>} : vector<8x32xf32>, vector<32x32xf32>, vector<8x32xf32> -> vector<8x32xf32>
    %242 = arith.addf %238, %241 : vector<8x32xf32>
    %243 = arith.negf %242 : vector<8x32xf32>
    %244 = math.exp %243 : vector<8x32xf32>
    %cst_152 = arith.constant 1.000000e+00 : f32
    %245 = vector.broadcast %cst_152 : f32 to vector<8x32xf32>
    %246 = arith.addf %245, %244 : vector<8x32xf32>
    %247 = arith.divf %245, %246 : vector<8x32xf32>
    %248 = arith.mulf %227, %197 : vector<8x32xf32>
    %249 = arith.mulf %215, %235 : vector<8x32xf32>
    %250 = arith.addf %248, %249 : vector<8x32xf32>
    %251 = math.tanh %250 : vector<8x32xf32>
    %252 = arith.mulf %247, %251 : vector<8x32xf32>
    %253 = arith.index_cast %203 : i32 to index
    %c0_153 = arith.constant 0 : index
    %254 = vector.load %arg10[%253, %c0_153] : memref<64x32xf32, #tpu.memory_space<vmem>>, vector<8x32xf32>
    tpu.vector_store %arg10[%253, %c0_153], %252 {strides = array<i32>} : memref<64x32xf32, #tpu.memory_space<vmem>>, vector<8x32xf32>,
    %c4_i32 = arith.constant 4 : i32
    %c8_i32_154 = arith.constant 8 : i32
    %255 = arith.muli %c4_i32, %c8_i32_154 : i32
    %256 = tpu.assume_multiple %255, 8 : i32
    %c0_155 = arith.constant 0 : index
    %257 = arith.index_cast %256 : i32 to index
    %c0_156 = arith.constant 0 : index
    %258 = vector.load %arg9[%c0_155, %257, %c0_156] : memref<4x64x32xf32, #tpu.memory_space<vmem>>, vector<1x8x32xf32>
    %259 = vector.shape_cast %258 : vector<1x8x32xf32> to vector<8x32xf32>
    %c0_157 = arith.constant 0 : index
    %c0_158 = arith.constant 0 : index
    %c0_159 = arith.constant 0 : index
    %260 = vector.load %arg2[%c0_157, %c0_158, %c0_159] : memref<4x32x32xf32, #tpu.memory_space<vmem>>, vector<1x32x32xf32>
    %261 = vector.shape_cast %260 : vector<1x32x32xf32> to vector<32x32xf32>
    %cst_160 = arith.constant dense<0.000000e+00> : vector<8x32xf32>
    %262 = tpu.matmul %252, %261, %cst_160 {dimension_numbers = #tpu.dot_dimension_numbers<[1], [0], [0], [1], [0, 0, 1, 1], [], []>} : vector<8x32xf32>, vector<32x32xf32>, vector<8x32xf32> -> vector<8x32xf32>
    %263 = arith.addf %259, %262 : vector<8x32xf32>
    %264 = arith.negf %263 : vector<8x32xf32>
    %265 = math.exp %264 : vector<8x32xf32>
    %cst_161 = arith.constant 1.000000e+00 : f32
    %266 = vector.broadcast %cst_161 : f32 to vector<8x32xf32>
    %267 = arith.addf %266, %265 : vector<8x32xf32>
    %268 = arith.divf %266, %267 : vector<8x32xf32>
    %c1_162 = arith.constant 1 : index
    %269 = arith.index_cast %256 : i32 to index
    %c0_163 = arith.constant 0 : index
    %270 = vector.load %arg9[%c1_162, %269, %c0_163] : memref<4x64x32xf32, #tpu.memory_space<vmem>>, vector<1x8x32xf32>
    %271 = vector.shape_cast %270 : vector<1x8x32xf32> to vector<8x32xf32>
    %c1_164 = arith.constant 1 : index
    %c0_165 = arith.constant 0 : index
    %c0_166 = arith.constant 0 : index
    %272 = vector.load %arg2[%c1_164, %c0_165, %c0_166] : memref<4x32x32xf32, #tpu.memory_space<vmem>>, vector<1x32x32xf32>
    %273 = vector.shape_cast %272 : vector<1x32x32xf32> to vector<32x32xf32>
    %cst_167 = arith.constant dense<0.000000e+00> : vector<8x32xf32>
    %274 = tpu.matmul %252, %273, %cst_167 {dimension_numbers = #tpu.dot_dimension_numbers<[1], [0], [0], [1], [0, 0, 1, 1], [], []>} : vector<8x32xf32>, vector<32x32xf32>, vector<8x32xf32> -> vector<8x32xf32>
    %275 = arith.addf %271, %274 : vector<8x32xf32>
    %276 = arith.negf %275 : vector<8x32xf32>
    %277 = math.exp %276 : vector<8x32xf32>
    %cst_168 = arith.constant 1.000000e+00 : f32
    %278 = vector.broadcast %cst_168 : f32 to vector<8x32xf32>
    %279 = arith.addf %278, %277 : vector<8x32xf32>
    %280 = arith.divf %278, %279 : vector<8x32xf32>
    %c2_169 = arith.constant 2 : index
    %281 = arith.index_cast %256 : i32 to index
    %c0_170 = arith.constant 0 : index
    %282 = vector.load %arg9[%c2_169, %281, %c0_170] : memref<4x64x32xf32, #tpu.memory_space<vmem>>, vector<1x8x32xf32>
    %283 = vector.shape_cast %282 : vector<1x8x32xf32> to vector<8x32xf32>
    %c2_171 = arith.constant 2 : index
    %c0_172 = arith.constant 0 : index
    %c0_173 = arith.constant 0 : index
    %284 = vector.load %arg2[%c2_171, %c0_172, %c0_173] : memref<4x32x32xf32, #tpu.memory_space<vmem>>, vector<1x32x32xf32>
    %285 = vector.shape_cast %284 : vector<1x32x32xf32> to vector<32x32xf32>
    %cst_174 = arith.constant dense<0.000000e+00> : vector<8x32xf32>
    %286 = tpu.matmul %252, %285, %cst_174 {dimension_numbers = #tpu.dot_dimension_numbers<[1], [0], [0], [1], [0, 0, 1, 1], [], []>} : vector<8x32xf32>, vector<32x32xf32>, vector<8x32xf32> -> vector<8x32xf32>
    %287 = arith.addf %283, %286 : vector<8x32xf32>
    %288 = math.tanh %287 : vector<8x32xf32>
    %c3_175 = arith.constant 3 : index
    %289 = arith.index_cast %256 : i32 to index
    %c0_176 = arith.constant 0 : index
    %290 = vector.load %arg9[%c3_175, %289, %c0_176] : memref<4x64x32xf32, #tpu.memory_space<vmem>>, vector<1x8x32xf32>
    %291 = vector.shape_cast %290 : vector<1x8x32xf32> to vector<8x32xf32>
    %c3_177 = arith.constant 3 : index
    %c0_178 = arith.constant 0 : index
    %c0_179 = arith.constant 0 : index
    %292 = vector.load %arg2[%c3_177, %c0_178, %c0_179] : memref<4x32x32xf32, #tpu.memory_space<vmem>>, vector<1x32x32xf32>
    %293 = vector.shape_cast %292 : vector<1x32x32xf32> to vector<32x32xf32>
    %cst_180 = arith.constant dense<0.000000e+00> : vector<8x32xf32>
    %294 = tpu.matmul %252, %293, %cst_180 {dimension_numbers = #tpu.dot_dimension_numbers<[1], [0], [0], [1], [0, 0, 1, 1], [], []>} : vector<8x32xf32>, vector<32x32xf32>, vector<8x32xf32> -> vector<8x32xf32>
    %295 = arith.addf %291, %294 : vector<8x32xf32>
    %296 = arith.negf %295 : vector<8x32xf32>
    %297 = math.exp %296 : vector<8x32xf32>
    %cst_181 = arith.constant 1.000000e+00 : f32
    %298 = vector.broadcast %cst_181 : f32 to vector<8x32xf32>
    %299 = arith.addf %298, %297 : vector<8x32xf32>
    %300 = arith.divf %298, %299 : vector<8x32xf32>
    %301 = arith.mulf %280, %250 : vector<8x32xf32>
    %302 = arith.mulf %268, %288 : vector<8x32xf32>
    %303 = arith.addf %301, %302 : vector<8x32xf32>
    %304 = math.tanh %303 : vector<8x32xf32>
    %305 = arith.mulf %300, %304 : vector<8x32xf32>
    %306 = arith.index_cast %256 : i32 to index
    %c0_182 = arith.constant 0 : index
    %307 = vector.load %arg10[%306, %c0_182] : memref<64x32xf32, #tpu.memory_space<vmem>>, vector<8x32xf32>
    tpu.vector_store %arg10[%306, %c0_182], %305 {strides = array<i32>} : memref<64x32xf32, #tpu.memory_space<vmem>>, vector<8x32xf32>,
    %c5_i32 = arith.constant 5 : i32
    %c8_i32_183 = arith.constant 8 : i32
    %308 = arith.muli %c5_i32, %c8_i32_183 : i32
    %309 = tpu.assume_multiple %308, 8 : i32
    %c0_184 = arith.constant 0 : index
    %310 = arith.index_cast %309 : i32 to index
    %c0_185 = arith.constant 0 : index
    %311 = vector.load %arg9[%c0_184, %310, %c0_185] : memref<4x64x32xf32, #tpu.memory_space<vmem>>, vector<1x8x32xf32>
    %312 = vector.shape_cast %311 : vector<1x8x32xf32> to vector<8x32xf32>
    %c0_186 = arith.constant 0 : index
    %c0_187 = arith.constant 0 : index
    %c0_188 = arith.constant 0 : index
    %313 = vector.load %arg2[%c0_186, %c0_187, %c0_188] : memref<4x32x32xf32, #tpu.memory_space<vmem>>, vector<1x32x32xf32>
    %314 = vector.shape_cast %313 : vector<1x32x32xf32> to vector<32x32xf32>
    %cst_189 = arith.constant dense<0.000000e+00> : vector<8x32xf32>
    %315 = tpu.matmul %305, %314, %cst_189 {dimension_numbers = #tpu.dot_dimension_numbers<[1], [0], [0], [1], [0, 0, 1, 1], [], []>} : vector<8x32xf32>, vector<32x32xf32>, vector<8x32xf32> -> vector<8x32xf32>
    %316 = arith.addf %312, %315 : vector<8x32xf32>
    %317 = arith.negf %316 : vector<8x32xf32>
    %318 = math.exp %317 : vector<8x32xf32>
    %cst_190 = arith.constant 1.000000e+00 : f32
    %319 = vector.broadcast %cst_190 : f32 to vector<8x32xf32>
    %320 = arith.addf %319, %318 : vector<8x32xf32>
    %321 = arith.divf %319, %320 : vector<8x32xf32>
    %c1_191 = arith.constant 1 : index
    %322 = arith.index_cast %309 : i32 to index
    %c0_192 = arith.constant 0 : index
    %323 = vector.load %arg9[%c1_191, %322, %c0_192] : memref<4x64x32xf32, #tpu.memory_space<vmem>>, vector<1x8x32xf32>
    %324 = vector.shape_cast %323 : vector<1x8x32xf32> to vector<8x32xf32>
    %c1_193 = arith.constant 1 : index
    %c0_194 = arith.constant 0 : index
    %c0_195 = arith.constant 0 : index
    %325 = vector.load %arg2[%c1_193, %c0_194, %c0_195] : memref<4x32x32xf32, #tpu.memory_space<vmem>>, vector<1x32x32xf32>
    %326 = vector.shape_cast %325 : vector<1x32x32xf32> to vector<32x32xf32>
    %cst_196 = arith.constant dense<0.000000e+00> : vector<8x32xf32>
    %327 = tpu.matmul %305, %326, %cst_196 {dimension_numbers = #tpu.dot_dimension_numbers<[1], [0], [0], [1], [0, 0, 1, 1], [], []>} : vector<8x32xf32>, vector<32x32xf32>, vector<8x32xf32> -> vector<8x32xf32>
    %328 = arith.addf %324, %327 : vector<8x32xf32>
    %329 = arith.negf %328 : vector<8x32xf32>
    %330 = math.exp %329 : vector<8x32xf32>
    %cst_197 = arith.constant 1.000000e+00 : f32
    %331 = vector.broadcast %cst_197 : f32 to vector<8x32xf32>
    %332 = arith.addf %331, %330 : vector<8x32xf32>
    %333 = arith.divf %331, %332 : vector<8x32xf32>
    %c2_198 = arith.constant 2 : index
    %334 = arith.index_cast %309 : i32 to index
    %c0_199 = arith.constant 0 : index
    %335 = vector.load %arg9[%c2_198, %334, %c0_199] : memref<4x64x32xf32, #tpu.memory_space<vmem>>, vector<1x8x32xf32>
    %336 = vector.shape_cast %335 : vector<1x8x32xf32> to vector<8x32xf32>
    %c2_200 = arith.constant 2 : index
    %c0_201 = arith.constant 0 : index
    %c0_202 = arith.constant 0 : index
    %337 = vector.load %arg2[%c2_200, %c0_201, %c0_202] : memref<4x32x32xf32, #tpu.memory_space<vmem>>, vector<1x32x32xf32>
    %338 = vector.shape_cast %337 : vector<1x32x32xf32> to vector<32x32xf32>
    %cst_203 = arith.constant dense<0.000000e+00> : vector<8x32xf32>
    %339 = tpu.matmul %305, %338, %cst_203 {dimension_numbers = #tpu.dot_dimension_numbers<[1], [0], [0], [1], [0, 0, 1, 1], [], []>} : vector<8x32xf32>, vector<32x32xf32>, vector<8x32xf32> -> vector<8x32xf32>
    %340 = arith.addf %336, %339 : vector<8x32xf32>
    %341 = math.tanh %340 : vector<8x32xf32>
    %c3_204 = arith.constant 3 : index
    %342 = arith.index_cast %309 : i32 to index
    %c0_205 = arith.constant 0 : index
    %343 = vector.load %arg9[%c3_204, %342, %c0_205] : memref<4x64x32xf32, #tpu.memory_space<vmem>>, vector<1x8x32xf32>
    %344 = vector.shape_cast %343 : vector<1x8x32xf32> to vector<8x32xf32>
    %c3_206 = arith.constant 3 : index
    %c0_207 = arith.constant 0 : index
    %c0_208 = arith.constant 0 : index
    %345 = vector.load %arg2[%c3_206, %c0_207, %c0_208] : memref<4x32x32xf32, #tpu.memory_space<vmem>>, vector<1x32x32xf32>
    %346 = vector.shape_cast %345 : vector<1x32x32xf32> to vector<32x32xf32>
    %cst_209 = arith.constant dense<0.000000e+00> : vector<8x32xf32>
    %347 = tpu.matmul %305, %346, %cst_209 {dimension_numbers = #tpu.dot_dimension_numbers<[1], [0], [0], [1], [0, 0, 1, 1], [], []>} : vector<8x32xf32>, vector<32x32xf32>, vector<8x32xf32> -> vector<8x32xf32>
    %348 = arith.addf %344, %347 : vector<8x32xf32>
    %349 = arith.negf %348 : vector<8x32xf32>
    %350 = math.exp %349 : vector<8x32xf32>
    %cst_210 = arith.constant 1.000000e+00 : f32
    %351 = vector.broadcast %cst_210 : f32 to vector<8x32xf32>
    %352 = arith.addf %351, %350 : vector<8x32xf32>
    %353 = arith.divf %351, %352 : vector<8x32xf32>
    %354 = arith.mulf %333, %303 : vector<8x32xf32>
    %355 = arith.mulf %321, %341 : vector<8x32xf32>
    %356 = arith.addf %354, %355 : vector<8x32xf32>
    %357 = math.tanh %356 : vector<8x32xf32>
    %358 = arith.mulf %353, %357 : vector<8x32xf32>
    %359 = arith.index_cast %309 : i32 to index
    %c0_211 = arith.constant 0 : index
    %360 = vector.load %arg10[%359, %c0_211] : memref<64x32xf32, #tpu.memory_space<vmem>>, vector<8x32xf32>
    tpu.vector_store %arg10[%359, %c0_211], %358 {strides = array<i32>} : memref<64x32xf32, #tpu.memory_space<vmem>>, vector<8x32xf32>,
    %c6_i32 = arith.constant 6 : i32
    %c8_i32_212 = arith.constant 8 : i32
    %361 = arith.muli %c6_i32, %c8_i32_212 : i32
    %362 = tpu.assume_multiple %361, 8 : i32
    %c0_213 = arith.constant 0 : index
    %363 = arith.index_cast %362 : i32 to index
    %c0_214 = arith.constant 0 : index
    %364 = vector.load %arg9[%c0_213, %363, %c0_214] : memref<4x64x32xf32, #tpu.memory_space<vmem>>, vector<1x8x32xf32>
    %365 = vector.shape_cast %364 : vector<1x8x32xf32> to vector<8x32xf32>
    %c0_215 = arith.constant 0 : index
    %c0_216 = arith.constant 0 : index
    %c0_217 = arith.constant 0 : index
    %366 = vector.load %arg2[%c0_215, %c0_216, %c0_217] : memref<4x32x32xf32, #tpu.memory_space<vmem>>, vector<1x32x32xf32>
    %367 = vector.shape_cast %366 : vector<1x32x32xf32> to vector<32x32xf32>
    %cst_218 = arith.constant dense<0.000000e+00> : vector<8x32xf32>
    %368 = tpu.matmul %358, %367, %cst_218 {dimension_numbers = #tpu.dot_dimension_numbers<[1], [0], [0], [1], [0, 0, 1, 1], [], []>} : vector<8x32xf32>, vector<32x32xf32>, vector<8x32xf32> -> vector<8x32xf32>
    %369 = arith.addf %365, %368 : vector<8x32xf32>
    %370 = arith.negf %369 : vector<8x32xf32>
    %371 = math.exp %370 : vector<8x32xf32>
    %cst_219 = arith.constant 1.000000e+00 : f32
    %372 = vector.broadcast %cst_219 : f32 to vector<8x32xf32>
    %373 = arith.addf %372, %371 : vector<8x32xf32>
    %374 = arith.divf %372, %373 : vector<8x32xf32>
    %c1_220 = arith.constant 1 : index
    %375 = arith.index_cast %362 : i32 to index
    %c0_221 = arith.constant 0 : index
    %376 = vector.load %arg9[%c1_220, %375, %c0_221] : memref<4x64x32xf32, #tpu.memory_space<vmem>>, vector<1x8x32xf32>
    %377 = vector.shape_cast %376 : vector<1x8x32xf32> to vector<8x32xf32>
    %c1_222 = arith.constant 1 : index
    %c0_223 = arith.constant 0 : index
    %c0_224 = arith.constant 0 : index
    %378 = vector.load %arg2[%c1_222, %c0_223, %c0_224] : memref<4x32x32xf32, #tpu.memory_space<vmem>>, vector<1x32x32xf32>
    %379 = vector.shape_cast %378 : vector<1x32x32xf32> to vector<32x32xf32>
    %cst_225 = arith.constant dense<0.000000e+00> : vector<8x32xf32>
    %380 = tpu.matmul %358, %379, %cst_225 {dimension_numbers = #tpu.dot_dimension_numbers<[1], [0], [0], [1], [0, 0, 1, 1], [], []>} : vector<8x32xf32>, vector<32x32xf32>, vector<8x32xf32> -> vector<8x32xf32>
    %381 = arith.addf %377, %380 : vector<8x32xf32>
    %382 = arith.negf %381 : vector<8x32xf32>
    %383 = math.exp %382 : vector<8x32xf32>
    %cst_226 = arith.constant 1.000000e+00 : f32
    %384 = vector.broadcast %cst_226 : f32 to vector<8x32xf32>
    %385 = arith.addf %384, %383 : vector<8x32xf32>
    %386 = arith.divf %384, %385 : vector<8x32xf32>
    %c2_227 = arith.constant 2 : index
    %387 = arith.index_cast %362 : i32 to index
    %c0_228 = arith.constant 0 : index
    %388 = vector.load %arg9[%c2_227, %387, %c0_228] : memref<4x64x32xf32, #tpu.memory_space<vmem>>, vector<1x8x32xf32>
    %389 = vector.shape_cast %388 : vector<1x8x32xf32> to vector<8x32xf32>
    %c2_229 = arith.constant 2 : index
    %c0_230 = arith.constant 0 : index
    %c0_231 = arith.constant 0 : index
    %390 = vector.load %arg2[%c2_229, %c0_230, %c0_231] : memref<4x32x32xf32, #tpu.memory_space<vmem>>, vector<1x32x32xf32>
    %391 = vector.shape_cast %390 : vector<1x32x32xf32> to vector<32x32xf32>
    %cst_232 = arith.constant dense<0.000000e+00> : vector<8x32xf32>
    %392 = tpu.matmul %358, %391, %cst_232 {dimension_numbers = #tpu.dot_dimension_numbers<[1], [0], [0], [1], [0, 0, 1, 1], [], []>} : vector<8x32xf32>, vector<32x32xf32>, vector<8x32xf32> -> vector<8x32xf32>
    %393 = arith.addf %389, %392 : vector<8x32xf32>
    %394 = math.tanh %393 : vector<8x32xf32>
    %c3_233 = arith.constant 3 : index
    %395 = arith.index_cast %362 : i32 to index
    %c0_234 = arith.constant 0 : index
    %396 = vector.load %arg9[%c3_233, %395, %c0_234] : memref<4x64x32xf32, #tpu.memory_space<vmem>>, vector<1x8x32xf32>
    %397 = vector.shape_cast %396 : vector<1x8x32xf32> to vector<8x32xf32>
    %c3_235 = arith.constant 3 : index
    %c0_236 = arith.constant 0 : index
    %c0_237 = arith.constant 0 : index
    %398 = vector.load %arg2[%c3_235, %c0_236, %c0_237] : memref<4x32x32xf32, #tpu.memory_space<vmem>>, vector<1x32x32xf32>
    %399 = vector.shape_cast %398 : vector<1x32x32xf32> to vector<32x32xf32>
    %cst_238 = arith.constant dense<0.000000e+00> : vector<8x32xf32>
    %400 = tpu.matmul %358, %399, %cst_238 {dimension_numbers = #tpu.dot_dimension_numbers<[1], [0], [0], [1], [0, 0, 1, 1], [], []>} : vector<8x32xf32>, vector<32x32xf32>, vector<8x32xf32> -> vector<8x32xf32>
    %401 = arith.addf %397, %400 : vector<8x32xf32>
    %402 = arith.negf %401 : vector<8x32xf32>
    %403 = math.exp %402 : vector<8x32xf32>
    %cst_239 = arith.constant 1.000000e+00 : f32
    %404 = vector.broadcast %cst_239 : f32 to vector<8x32xf32>
    %405 = arith.addf %404, %403 : vector<8x32xf32>
    %406 = arith.divf %404, %405 : vector<8x32xf32>
    %407 = arith.mulf %386, %356 : vector<8x32xf32>
    %408 = arith.mulf %374, %394 : vector<8x32xf32>
    %409 = arith.addf %407, %408 : vector<8x32xf32>
    %410 = math.tanh %409 : vector<8x32xf32>
    %411 = arith.mulf %406, %410 : vector<8x32xf32>
    %412 = arith.index_cast %362 : i32 to index
    %c0_240 = arith.constant 0 : index
    %413 = vector.load %arg10[%412, %c0_240] : memref<64x32xf32, #tpu.memory_space<vmem>>, vector<8x32xf32>
    tpu.vector_store %arg10[%412, %c0_240], %411 {strides = array<i32>} : memref<64x32xf32, #tpu.memory_space<vmem>>, vector<8x32xf32>,
    %c7_i32 = arith.constant 7 : i32
    %c8_i32_241 = arith.constant 8 : i32
    %414 = arith.muli %c7_i32, %c8_i32_241 : i32
    %415 = tpu.assume_multiple %414, 8 : i32
    %c0_242 = arith.constant 0 : index
    %416 = arith.index_cast %415 : i32 to index
    %c0_243 = arith.constant 0 : index
    %417 = vector.load %arg9[%c0_242, %416, %c0_243] : memref<4x64x32xf32, #tpu.memory_space<vmem>>, vector<1x8x32xf32>
    %418 = vector.shape_cast %417 : vector<1x8x32xf32> to vector<8x32xf32>
    %c0_244 = arith.constant 0 : index
    %c0_245 = arith.constant 0 : index
    %c0_246 = arith.constant 0 : index
    %419 = vector.load %arg2[%c0_244, %c0_245, %c0_246] : memref<4x32x32xf32, #tpu.memory_space<vmem>>, vector<1x32x32xf32>
    %420 = vector.shape_cast %419 : vector<1x32x32xf32> to vector<32x32xf32>
    %cst_247 = arith.constant dense<0.000000e+00> : vector<8x32xf32>
    %421 = tpu.matmul %411, %420, %cst_247 {dimension_numbers = #tpu.dot_dimension_numbers<[1], [0], [0], [1], [0, 0, 1, 1], [], []>} : vector<8x32xf32>, vector<32x32xf32>, vector<8x32xf32> -> vector<8x32xf32>
    %422 = arith.addf %418, %421 : vector<8x32xf32>
    %423 = arith.negf %422 : vector<8x32xf32>
    %424 = math.exp %423 : vector<8x32xf32>
    %cst_248 = arith.constant 1.000000e+00 : f32
    %425 = vector.broadcast %cst_248 : f32 to vector<8x32xf32>
    %426 = arith.addf %425, %424 : vector<8x32xf32>
    %427 = arith.divf %425, %426 : vector<8x32xf32>
    %c1_249 = arith.constant 1 : index
    %428 = arith.index_cast %415 : i32 to index
    %c0_250 = arith.constant 0 : index
    %429 = vector.load %arg9[%c1_249, %428, %c0_250] : memref<4x64x32xf32, #tpu.memory_space<vmem>>, vector<1x8x32xf32>
    %430 = vector.shape_cast %429 : vector<1x8x32xf32> to vector<8x32xf32>
    %c1_251 = arith.constant 1 : index
    %c0_252 = arith.constant 0 : index
    %c0_253 = arith.constant 0 : index
    %431 = vector.load %arg2[%c1_251, %c0_252, %c0_253] : memref<4x32x32xf32, #tpu.memory_space<vmem>>, vector<1x32x32xf32>
    %432 = vector.shape_cast %431 : vector<1x32x32xf32> to vector<32x32xf32>
    %cst_254 = arith.constant dense<0.000000e+00> : vector<8x32xf32>
    %433 = tpu.matmul %411, %432, %cst_254 {dimension_numbers = #tpu.dot_dimension_numbers<[1], [0], [0], [1], [0, 0, 1, 1], [], []>} : vector<8x32xf32>, vector<32x32xf32>, vector<8x32xf32> -> vector<8x32xf32>
    %434 = arith.addf %430, %433 : vector<8x32xf32>
    %435 = arith.negf %434 : vector<8x32xf32>
    %436 = math.exp %435 : vector<8x32xf32>
    %cst_255 = arith.constant 1.000000e+00 : f32
    %437 = vector.broadcast %cst_255 : f32 to vector<8x32xf32>
    %438 = arith.addf %437, %436 : vector<8x32xf32>
    %439 = arith.divf %437, %438 : vector<8x32xf32>
    %c2_256 = arith.constant 2 : index
    %440 = arith.index_cast %415 : i32 to index
    %c0_257 = arith.constant 0 : index
    %441 = vector.load %arg9[%c2_256, %440, %c0_257] : memref<4x64x32xf32, #tpu.memory_space<vmem>>, vector<1x8x32xf32>
    %442 = vector.shape_cast %441 : vector<1x8x32xf32> to vector<8x32xf32>
    %c2_258 = arith.constant 2 : index
    %c0_259 = arith.constant 0 : index
    %c0_260 = arith.constant 0 : index
    %443 = vector.load %arg2[%c2_258, %c0_259, %c0_260] : memref<4x32x32xf32, #tpu.memory_space<vmem>>, vector<1x32x32xf32>
    %444 = vector.shape_cast %443 : vector<1x32x32xf32> to vector<32x32xf32>
    %cst_261 = arith.constant dense<0.000000e+00> : vector<8x32xf32>
    %445 = tpu.matmul %411, %444, %cst_261 {dimension_numbers = #tpu.dot_dimension_numbers<[1], [0], [0], [1], [0, 0, 1, 1], [], []>} : vector<8x32xf32>, vector<32x32xf32>, vector<8x32xf32> -> vector<8x32xf32>
    %446 = arith.addf %442, %445 : vector<8x32xf32>
    %447 = math.tanh %446 : vector<8x32xf32>
    %c3_262 = arith.constant 3 : index
    %448 = arith.index_cast %415 : i32 to index
    %c0_263 = arith.constant 0 : index
    %449 = vector.load %arg9[%c3_262, %448, %c0_263] : memref<4x64x32xf32, #tpu.memory_space<vmem>>, vector<1x8x32xf32>
    %450 = vector.shape_cast %449 : vector<1x8x32xf32> to vector<8x32xf32>
    %c3_264 = arith.constant 3 : index
    %c0_265 = arith.constant 0 : index
    %c0_266 = arith.constant 0 : index
    %451 = vector.load %arg2[%c3_264, %c0_265, %c0_266] : memref<4x32x32xf32, #tpu.memory_space<vmem>>, vector<1x32x32xf32>
    %452 = vector.shape_cast %451 : vector<1x32x32xf32> to vector<32x32xf32>
    %cst_267 = arith.constant dense<0.000000e+00> : vector<8x32xf32>
    %453 = tpu.matmul %411, %452, %cst_267 {dimension_numbers = #tpu.dot_dimension_numbers<[1], [0], [0], [1], [0, 0, 1, 1], [], []>} : vector<8x32xf32>, vector<32x32xf32>, vector<8x32xf32> -> vector<8x32xf32>
    %454 = arith.addf %450, %453 : vector<8x32xf32>
    %455 = arith.negf %454 : vector<8x32xf32>
    %456 = math.exp %455 : vector<8x32xf32>
    %cst_268 = arith.constant 1.000000e+00 : f32
    %457 = vector.broadcast %cst_268 : f32 to vector<8x32xf32>
    %458 = arith.addf %457, %456 : vector<8x32xf32>
    %459 = arith.divf %457, %458 : vector<8x32xf32>
    %460 = arith.mulf %439, %409 : vector<8x32xf32>
    %461 = arith.mulf %427, %447 : vector<8x32xf32>
    %462 = arith.addf %460, %461 : vector<8x32xf32>
    %463 = math.tanh %462 : vector<8x32xf32>
    %464 = arith.mulf %459, %463 : vector<8x32xf32>
    %465 = arith.index_cast %415 : i32 to index
    %c0_269 = arith.constant 0 : index
    %466 = vector.load %arg10[%465, %c0_269] : memref<64x32xf32, #tpu.memory_space<vmem>>, vector<8x32xf32>
    tpu.vector_store %arg10[%465, %c0_269], %464 {strides = array<i32>} : memref<64x32xf32, #tpu.memory_space<vmem>>, vector<8x32xf32>,
    %c8_i32_270 = arith.constant 8 : i32
    %c0_271 = arith.constant 0 : index
    %c0_272 = arith.constant 0 : index
    %467 = vector.load %arg10[%c0_271, %c0_272] : memref<64x32xf32, #tpu.memory_space<vmem>>, vector<64x32xf32>
    %c0_273 = arith.constant 0 : index
    %c0_274 = arith.constant 0 : index
    %468 = vector.load %arg4[%c0_273, %c0_274] : memref<32x16xf32, #tpu.memory_space<vmem>>, vector<32x16xf32>
    %cst_275 = arith.constant dense<0.000000e+00> : vector<64x16xf32>
    %469 = tpu.matmul %467, %468, %cst_275 {dimension_numbers = #tpu.dot_dimension_numbers<[1], [0], [0], [1], [0, 0, 1, 1], [], []>} : vector<64x32xf32>, vector<32x16xf32>, vector<64x16xf32> -> vector<64x16xf32>
    %c0_276 = arith.constant 0 : index
    %c0_277 = arith.constant 0 : index
    %470 = vector.load %arg5[%c0_276, %c0_277] : memref<1x16xf32, #tpu.memory_space<vmem>>, vector<1x16xf32>
    %471 = vector.broadcast %470 : vector<1x16xf32> to vector<64x16xf32>
    %472 = arith.addf %469, %471 : vector<64x16xf32>
    %cst_278 = arith.constant 0.000000e+00 : f32
    %473 = vector.broadcast %cst_278 : f32 to vector<64x16xf32>
    %474 = arith.maximumf %472, %473 : vector<64x16xf32>
    %c0_279 = arith.constant 0 : index
    %c0_280 = arith.constant 0 : index
    %475 = vector.load %arg6[%c0_279, %c0_280] : memref<16x1xf32, #tpu.memory_space<vmem>>, vector<16x1xf32>
    %cst_281 = arith.constant dense<0.000000e+00> : vector<64x1xf32>
    %476 = tpu.matmul %474, %475, %cst_281 {dimension_numbers = #tpu.dot_dimension_numbers<[1], [0], [0], [1], [0, 0, 1, 1], [], []>} : vector<64x16xf32>, vector<16x1xf32>, vector<64x1xf32> -> vector<64x1xf32>
    %c0_282 = arith.constant 0 : index
    %c0_283 = arith.constant 0 : index
    %477 = vector.load %arg7[%c0_282, %c0_283] : memref<1x1xf32, #tpu.memory_space<vmem>>, vector<1x1xf32>
    %478 = vector.broadcast %477 : vector<1x1xf32> to vector<64x1xf32>
    %479 = arith.addf %476, %478 : vector<64x1xf32>
    %480 = arith.negf %479 : vector<64x1xf32>
    %481 = math.exp %480 : vector<64x1xf32>
    %cst_284 = arith.constant 1.000000e+00 : f32
    %482 = vector.broadcast %cst_284 : f32 to vector<64x1xf32>
    %483 = arith.addf %482, %481 : vector<64x1xf32>
    %484 = arith.divf %482, %483 : vector<64x1xf32>
    %c0_285 = arith.constant 0 : index
    %c0_286 = arith.constant 0 : index
    %485 = vector.load %arg8[%c0_285, %c0_286] : memref<64x1xf32, #tpu.memory_space<vmem>>, vector<64x1xf32>
    tpu.vector_store %arg8[%c0_285, %c0_286], %484 {strides = array<i32>} : memref<64x1xf32, #tpu.memory_space<vmem>>, vector<64x1xf32>,
    return
  }
}

</mosaic_0001>

<llo_original>
// kernel: tpu_custom_call.1
$region0: #{tpu_custom_call.1}
  #allocation0 [shape = 'u32[]', space=smem, size = 0x4, offset = 0x4, fixed_abs, tag = 'smem constant byte address 0x4 - core index']
  #allocation1 [shape = 'u32[144,128]{1,0:T(1,128)}', space=vmem, size = 0x12000, scoped, tag = 'internal scratch']
  #allocation2 [shape = 'f32[4,64,32]{2,1,0:T(8,128)}', space=vmem, size = 0x20000, scoped, tag = 'scratch operand']
  #allocation3 [shape = 'f32[64,32]{1,0:T(8,128)}', space=vmem, size = 0x8000, scoped, tag = 'scratch operand']
  #allocation4 [shape = 'f32[1,1]{1,0:T(1,128)S(1)}', space=vmem, size = 0x200, scoped, tag = 'scoped memory for tpu_custom_call.1']
  %s0 = inlined_call_operand.vmem [shape: f32[64,8], index: 0, kind: input, shape index: {}]
  %s1 = inlined_call_operand.hbm [shape: f32[4,8,32], index: 1, kind: input, shape index: {}]
  %s2 = inlined_call_operand.vmem [shape: f32[4,32,32], index: 2, kind: input, shape index: {}]
  %s3 = inlined_call_operand.hbm [shape: f32[4,1,32], index: 3, kind: input, shape index: {}]
  %s4 = inlined_call_operand.vmem [shape: f32[32,16], index: 4, kind: input, shape index: {}]
  %s5 = inlined_call_operand.vmem [shape: f32[1,16], index: 5, kind: input, shape index: {}]
  %s6 = inlined_call_operand.vmem [shape: f32[16,1], index: 6, kind: input, shape index: {}]
  %s7 = inlined_call_operand.<no memory space> [shape: f32[1,1], index: 7, kind: input, shape index: {}]
  %s8 = inlined_call_operand.vmem [shape: f32[64,1], index: 8, kind: output, shape index: {}]
  %s9 = sld [smem:[#allocation0]]
  $region50: #{tpu_custom_call.1} parent=0
    _
  %s11 = ssub.s32 1, %s9
  %s12 = scalar_select 0, %s11, %s9
  %v13 = vstv %s7
  %14 = vst [vmem:[#allocation4] sm:$0x1] %v13
  $region1: #{tpu_custom_call.1} parent=0
    #allocation5 [shape = 'u8[16384]{0}', space=vmem, size = 0x4000, scoped, tag = 'input window, operand 1, single buffered']
    #allocation6 [shape = 's32[1]{0}', space=sflag, size = 0x4, scoped, tag = 'scoped memory for tpu_custom_call.1']
    #allocation7 [shape = 'u8[2048]{0}', space=vmem, size = 0x800, scoped, tag = 'input window, operand 3, single buffered']
    #allocation8 [shape = 's32[1]{0}', space=sflag, size = 0x4, scoped, tag = 'scoped memory for tpu_custom_call.1']
    %15 = vsyncpa [#allocation6], 0
    %16 = vsyncpa [#allocation8], 0
    // Predicated region
    $region2: #{tpu_custom_call.1} parent=1 // pred_check
      _
    $region3: #{tpu_custom_call.1} parent=1 // pred_check_branch
      %18 = sbr.rel (0) target = $region5
    $region4: #{tpu_custom_call.1} parent=1 // pred_region
      _
    $region5: #{tpu_custom_call.1} parent=1 // pred_fallthru
      _
    // Predicated region
    $region6: #{tpu_custom_call.1} parent=1 // pred_check
      _
    $region7: #{tpu_custom_call.1} parent=1 // pred_check_branch
      %20 = sbr.rel (0) target = $region9
    $region8: #{tpu_custom_call.1} parent=1 // pred_region
      %s22 = ssub.s32 512, 512
      %23 = vsyncadd [#allocation6], %s22
      %s24 = sshll.u32 [#allocation5], 4
      %s25 = int_to_ptr.vmem [resolvable:$true] %s24
      %30 = dma.hbm_to_vmem [thread:$0]  %s1, 512, %s25, [#allocation6], 128, 128, 8
    $region9: #{tpu_custom_call.1} parent=1 // pred_fallthru
      _
    // Predicated region
    $region10: #{tpu_custom_call.1} parent=1 // pred_check
      _
    $region11: #{tpu_custom_call.1} parent=1 // pred_check_branch
      %32 = sbr.rel (0) target = $region13
    $region12: #{tpu_custom_call.1} parent=1 // pred_region
      _
    $region13: #{tpu_custom_call.1} parent=1 // pred_fallthru
      _
    // Predicated region
    $region14: #{tpu_custom_call.1} parent=1 // pred_check
      _
    $region15: #{tpu_custom_call.1} parent=1 // pred_check_branch
      %34 = sbr.rel (0) target = $region17
    $region16: #{tpu_custom_call.1} parent=1 // pred_region
      %s36 = ssub.s32 64, 64
      %37 = vsyncadd [#allocation8], %s36
      %s38 = sshll.u32 [#allocation7], 4
      %s39 = int_to_ptr.vmem [resolvable:$true] %s38
      %44 = dma.hbm_to_vmem [thread:$0]  %s3, 64, %s39, [#allocation8], 16, 16, 1
    $region17: #{tpu_custom_call.1} parent=1 // pred_fallthru
      _
    // Predicated region
    $region18: #{tpu_custom_call.1} parent=1 // pred_check
      _
    $region19: #{tpu_custom_call.1} parent=1 // pred_check_branch
      %46 = sbr.rel (0) target = $region21
    $region20: #{tpu_custom_call.1} parent=1 // pred_region
      _
    $region21: #{tpu_custom_call.1} parent=1 // pred_fallthru
      _
    // Predicated region
    $region22: #{tpu_custom_call.1} parent=1 // pred_check
      _
    $region23: #{tpu_custom_call.1} parent=1 // pred_check_branch
      %48 = sbr.rel (0) target = $region25
    $region24: #{tpu_custom_call.1} parent=1 // pred_region
      _
    $region25: #{tpu_custom_call.1} parent=1 // pred_fallthru
      _
    // Predicated region
    $region26: #{tpu_custom_call.1} parent=1 // pred_check
      _
    $region27: #{tpu_custom_call.1} parent=1 // pred_check_branch
      %50 = sbr.rel (0) target = $region29
    $region28: #{tpu_custom_call.1} parent=1 // pred_region
      _
    $region29: #{tpu_custom_call.1} parent=1 // pred_fallthru
      _
    // Predicated region
    $region30: #{tpu_custom_call.1} parent=1 // pred_check
      _
    $region31: #{tpu_custom_call.1} parent=1 // pred_check_branch
      %52 = sbr.rel (0) target = $region33
    $region32: #{tpu_custom_call.1} parent=1 // pred_region
      _
    $region33: #{tpu_custom_call.1} parent=1 // pred_fallthru
      _
    // Predicated region
    $region34: #{tpu_custom_call.1} parent=1 // pred_check
      _
    $region35: #{tpu_custom_call.1} parent=1 // pred_check_branch
      %54 = sbr.rel (0) target = $region37
    $region36: #{tpu_custom_call.1} parent=1 // pred_region
      %55 = dma.done [#allocation6], 512
    $region37: #{tpu_custom_call.1} parent=1 // pred_fallthru
      _
    // Predicated region
    $region38: #{tpu_custom_call.1} parent=1 // pred_check
      _
    $region39: #{tpu_custom_call.1} parent=1 // pred_check_branch
      %57 = sbr.rel (0) target = $region41
    $region40: #{tpu_custom_call.1} parent=1 // pred_region
      %58 = dma.done [#allocation8], 64
    $region41: #{tpu_custom_call.1} parent=1 // pred_fallthru
      _
    %v59 = vld [vmem:[%s0] sm:$0xff]
    %v60 = vld [vmem:[%s0 + $0x8] sm:$0xff]
    %v61 = vld [vmem:[%s0 + $0x10] sm:$0xff]
    %v62 = vld [vmem:[%s0 + $0x18] sm:$0xff]
    %v63 = vld [vmem:[%s0 + $0x20] sm:$0xff]
    %v64 = vld [vmem:[%s0 + $0x28] sm:$0xff]
    %v65 = vld [vmem:[%s0 + $0x30] sm:$0xff]
    %v66 = vld [vmem:[%s0 + $0x38] sm:$0xff]
    %v67 = vld [vmem:[#allocation5] sm:$0xff]
    %v68 = vld [vmem:[#allocation7] sm:$0x1]
    %v70 = vlaneseq
    %v71 = vshrl.u32 %v70, 7
    %v72 = vsub.s32 0, %v71
    %v73 = vrot.slane %v68, %v72
    %vm75 = vcmask 64512
    %v77 = vsel %vm75, %v59, 0
    %v80 = vsel %vm75, %v60, 0
    %v83 = vsel %vm75, %v61, 0
    %v86 = vsel %vm75, %v62, 0
    %v89 = vsel %vm75, %v63, 0
    %v92 = vsel %vm75, %v64, 0
    %v95 = vsel %vm75, %v65, 0
    %v98 = vsel %vm75, %v66, 0
    %100 = vmatprep.subr.mxu0 0.0
    %101 = vmatpush1.msra.mxu0 0.0
    %102 = vmatprep.subr.mxu0 0.0
    %103 = vmatpush1.msra.mxu0 0.0
    %104 = vmatprep.subr.mxu0 0.0
    %105 = vmatpush1.msra.mxu0 0.0
    %106 = vmatprep.subr.mxu0 0.0
    %107 = vmatpush1.msra.mxu0 0.0
    %108 = vmatprep.subr.mxu0 0.0
    %109 = vmatpush1.msra.mxu0 0.0
    %110 = vmatprep.subr.mxu0 0.0
    %111 = vmatpush1.msra.mxu0 0.0
    %112 = vmatprep.subr.mxu0 0.0
    %113 = vmatpush1.msra.mxu0 0.0
    %114 = vmatprep.subr.mxu0 0.0
    %115 = vmatpush1.msra.mxu0 0.0
    %116 = vmatprep.subr.mxu0 0.0
    %117 = vmatpush1.msra.mxu0 0.0
    %118 = vmatprep.subr.mxu0 0.0
    %119 = vmatpush1.msra.mxu0 0.0
    %120 = vmatprep.subr.mxu0 0.0
    %121 = vmatpush1.msra.mxu0 0.0
    %122 = vmatprep.subr.mxu0 0.0
    %123 = vmatpush1.msra.mxu0 0.0
    %124 = vmatprep.subr.mxu0 0.0
    %125 = vmatpush1.msra.mxu0 0.0
    %126 = vmatprep.subr.mxu0 0.0
    %127 = vmatpush1.msra.mxu0 0.0
    %128 = vmatprep.subr.mxu0 0.0
    %129 = vmatpush1.msra.mxu0 0.0
    %130 = vmatprep.subr.mxu0 0.0
    %131 = vmatpush1.msra.mxu0 %v67
    %132 = vmatprep.subr.mxu0 0.0
    %133 = vmatpush2.msra.mxu0 0.0
    %134 = vmatprep.subr.mxu0 0.0
    %135 = vmatpush2.msra.mxu0 0.0
    %136 = vmatprep.subr.mxu0 0.0
    %137 = vmatpush2.msra.mxu0 0.0
    %138 = vmatprep.subr.mxu0 0.0
    %139 = vmatpush2.msra.mxu0 0.0
    %140 = vmatprep.subr.mxu0 0.0
    %141 = vmatpush2.msra.mxu0 0.0
    %142 = vmatprep.subr.mxu0 0.0
    %143 = vmatpush2.msra.mxu0 0.0
    %144 = vmatprep.subr.mxu0 0.0
    %145 = vmatpush2.msra.mxu0 0.0
    %146 = vmatprep.subr.mxu0 0.0
    %147 = vmatpush2.msra.mxu0 0.0
    %148 = vmatprep.subr.mxu0 0.0
    %149 = vmatpush2.msra.mxu0 0.0
    %150 = vmatprep.subr.mxu0 0.0
    %151 = vmatpush2.msra.mxu0 0.0
    %152 = vmatprep.subr.mxu0 0.0
    %153 = vmatpush2.msra.mxu0 0.0
    %154 = vmatprep.subr.mxu0 0.0
    %155 = vmatpush2.msra.mxu0 0.0
    %156 = vmatprep.subr.mxu0 0.0
    %157 = vmatpush2.msra.mxu0 0.0
    %158 = vmatprep.subr.mxu0 0.0
    %159 = vmatpush2.msra.mxu0 0.0
    %160 = vmatprep.subr.mxu0 0.0
    %161 = vmatpush2.msra.mxu0 0.0
    %162 = vmatprep.subr.mxu0 0.0
    %163 = vmatpush2.msra.mxu0 0.0
    %164 = vmatprep.mubr.f32.mxu0 0.0
    %165 = vmatmul.mubr.f32.gmra.mxu0 %v77
    %v166 = vpop.f32.mrf.mxu0
    %v167 = vadd.f32 %v73, %v166
    %v168 = vpop.f32.mrf.mxu0
    %169 = vmatprep.mubr.f32.mxu0 0.0
    %170 = vmatmul.mubr.f32.gmra.mxu0 %v80
    %v171 = vpop.f32.mrf.mxu0
    %v172 = vadd.f32 %v73, %v171
    %v173 = vpop.f32.mrf.mxu0
    %174 = vmatprep.mubr.f32.mxu0 0.0
    %175 = vmatmul.mubr.f32.gmra.mxu0 %v83
    %v176 = vpop.f32.mrf.mxu0
    %v177 = vadd.f32 %v73, %v176
    %v178 = vpop.f32.mrf.mxu0
    %179 = vmatprep.mubr.f32.mxu0 0.0
    %180 = vmatmul.mubr.f32.gmra.mxu0 %v86
    %v181 = vpop.f32.mrf.mxu0
    %v182 = vadd.f32 %v73, %v181
    %v183 = vpop.f32.mrf.mxu0
    %184 = vmatprep.mubr.f32.mxu0 0.0
    %185 = vmatmul.mubr.f32.gmra.mxu0 %v89
    %v186 = vpop.f32.mrf.mxu0
    %v187 = vadd.f32 %v73, %v186
    %v188 = vpop.f32.mrf.mxu0
    %189 = vmatprep.mubr.f32.mxu0 0.0
    %190 = vmatmul.mubr.f32.gmra.mxu0 %v92
    %v191 = vpop.f32.mrf.mxu0
    %v192 = vadd.f32 %v73, %v191
    %v193 = vpop.f32.mrf.mxu0
    %194 = vmatprep.mubr.f32.mxu0 0.0
    %195 = vmatmul.mubr.f32.gmra.mxu0 %v95
    %v196 = vpop.f32.mrf.mxu0
    %v197 = vadd.f32 %v73, %v196
    %v198 = vpop.f32.mrf.mxu0
    %199 = vmatprep.mubr.f32.mxu0 0.0
    %200 = vmatmul.mubr.f32.gmra.mxu0 %v98
    %v201 = vpop.f32.mrf.mxu0
    %v202 = vadd.f32 %v73, %v201
    %v203 = vpop.f32.mrf.mxu0
    %204 = vdwg.mxu0
    %vm205 = vcmask 261120
    %206 = vst.msk [vmem:[#allocation2] sm:$0xff] %vm205, %v167
    %207 = vst.msk [vmem:[#allocation2 + $0x8] sm:$0xff] %vm205, %v172
    %208 = vst.msk [vmem:[#allocation2 + $0x10] sm:$0xff] %vm205, %v177
    %209 = vst.msk [vmem:[#allocation2 + $0x18] sm:$0xff] %vm205, %v182
    %210 = vst.msk [vmem:[#allocation2 + $0x20] sm:$0xff] %vm205, %v187
    %211 = vst.msk [vmem:[#allocation2 + $0x28] sm:$0xff] %vm205, %v192
    %212 = vst.msk [vmem:[#allocation2 + $0x30] sm:$0xff] %vm205, %v197
    %213 = vst.msk [vmem:[#allocation2 + $0x38] sm:$0xff] %vm205, %v202
    %s214 = scalar_lea.vmem [#allocation5], 8
    %v215 = vld [vmem:[%s214] sm:$0xff]
    %s216 = scalar_lea.vmem [#allocation7], 1
    %v217 = vld [vmem:[%s216] sm:$0x1]
    %v219 = vlaneseq
    %v220 = vshrl.u32 %v219, 7
    %v221 = vsub.s32 0, %v220
    %v222 = vrot.slane %v217, %v221
    %224 = vmatprep.subr.mxu0 0.0
    %225 = vmatpush1.msra.mxu0 0.0
    %226 = vmatprep.subr.mxu0 0.0
    %227 = vmatpush1.msra.mxu0 0.0
    %228 = vmatprep.subr.mxu0 0.0
    %229 = vmatpush1.msra.mxu0 0.0
    %230 = vmatprep.subr.mxu0 0.0
    %231 = vmatpush1.msra.mxu0 0.0
    %232 = vmatprep.subr.mxu0 0.0
    %233 = vmatpush1.msra.mxu0 0.0
    %234 = vmatprep.subr.mxu0 0.0
    %235 = vmatpush1.msra.mxu0 0.0
    %236 = vmatprep.subr.mxu0 0.0
    %237 = vmatpush1.msra.mxu0 0.0
    %238 = vmatprep.subr.mxu0 0.0
    %239 = vmatpush1.msra.mxu0 0.0
    %240 = vmatprep.subr.mxu0 0.0
    %241 = vmatpush1.msra.mxu0 0.0
    %242 = vmatprep.subr.mxu0 0.0
    %243 = vmatpush1.msra.mxu0 0.0
    %244 = vmatprep.subr.mxu0 0.0
    %245 = vmatpush1.msra.mxu0 0.0
    %246 = vmatprep.subr.mxu0 0.0
    %247 = vmatpush1.msra.mxu0 0.0
    %248 = vmatprep.subr.mxu0 0.0
    %249 = vmatpush1.msra.mxu0 0.0
    %250 = vmatprep.subr.mxu0 0.0
    %251 = vmatpush1.msra.mxu0 0.0
    %252 = vmatprep.subr.mxu0 0.0
    %253 = vmatpush1.msra.mxu0 0.0
    %254 = vmatprep.subr.mxu0 0.0
    %255 = vmatpush1.msra.mxu0 %v215
    %256 = vmatprep.subr.mxu0 0.0
    %257 = vmatpush2.msra.mxu0 0.0
    %258 = vmatprep.subr.mxu0 0.0
    %259 = vmatpush2.msra.mxu0 0.0
    %260 = vmatprep.subr.mxu0 0.0
    %261 = vmatpush2.msra.mxu0 0.0
    %262 = vmatprep.subr.mxu0 0.0
    %263 = vmatpush2.msra.mxu0 0.0
    %264 = vmatprep.subr.mxu0 0.0
    %265 = vmatpush2.msra.mxu0 0.0
    %266 = vmatprep.subr.mxu0 0.0
    %267 = vmatpush2.msra.mxu0 0.0
    %268 = vmatprep.subr.mxu0 0.0
    %269 = vmatpush2.msra.mxu0 0.0
    %270 = vmatprep.subr.mxu0 0.0
    %271 = vmatpush2.msra.mxu0 0.0
    %272 = vmatprep.subr.mxu0 0.0
    %273 = vmatpush2.msra.mxu0 0.0
    %274 = vmatprep.subr.mxu0 0.0
    %275 = vmatpush2.msra.mxu0 0.0
    %276 = vmatprep.subr.mxu0 0.0
    %277 = vmatpush2.msra.mxu0 0.0
    %278 = vmatprep.subr.mxu0 0.0
    %279 = vmatpush2.msra.mxu0 0.0
    %280 = vmatprep.subr.mxu0 0.0
    %281 = vmatpush2.msra.mxu0 0.0
    %282 = vmatprep.subr.mxu0 0.0
    %283 = vmatpush2.msra.mxu0 0.0
    %284 = vmatprep.subr.mxu0 0.0
    %285 = vmatpush2.msra.mxu0 0.0
    %286 = vmatprep.subr.mxu0 0.0
    %287 = vmatpush2.msra.mxu0 0.0
    %288 = vmatprep.mubr.f32.mxu0 0.0
    %289 = vmatmul.mubr.f32.gmra.mxu0 %v77
    %v290 = vpop.f32.mrf.mxu0
    %v291 = vadd.f32 %v222, %v290
    %v292 = vpop.f32.mrf.mxu0
    %293 = vmatprep.mubr.f32.mxu0 0.0
    %294 = vmatmul.mubr.f32.gmra.mxu0 %v80
    %v295 = vpop.f32.mrf.mxu0
    %v296 = vadd.f32 %v222, %v295
    %v297 = vpop.f32.mrf.mxu0
    %298 = vmatprep.mubr.f32.mxu0 0.0
    %299 = vmatmul.mubr.f32.gmra.mxu0 %v83
    %v300 = vpop.f32.mrf.mxu0
    %v301 = vadd.f32 %v222, %v300
    %v302 = vpop.f32.mrf.mxu0
    %303 = vmatprep.mubr.f32.mxu0 0.0
    %304 = vmatmul.mubr.f32.gmra.mxu0 %v86
    %v305 = vpop.f32.mrf.mxu0
    %v306 = vadd.f32 %v222, %v305
    %v307 = vpop.f32.mrf.mxu0
    %308 = vmatprep.mubr.f32.mxu0 0.0
    %309 = vmatmul.mubr.f32.gmra.mxu0 %v89
    %v310 = vpop.f32.mrf.mxu0
    %v311 = vadd.f32 %v222, %v310
    %v312 = vpop.f32.mrf.mxu0
    %313 = vmatprep.mubr.f32.mxu0 0.0
    %314 = vmatmul.mubr.f32.gmra.mxu0 %v92
    %v315 = vpop.f32.mrf.mxu0
    %v316 = vadd.f32 %v222, %v315
    %v317 = vpop.f32.mrf.mxu0
    %318 = vmatprep.mubr.f32.mxu0 0.0
    %319 = vmatmul.mubr.f32.gmra.mxu0 %v95
    %v320 = vpop.f32.mrf.mxu0
    %v321 = vadd.f32 %v222, %v320
    %v322 = vpop.f32.mrf.mxu0
    %323 = vmatprep.mubr.f32.mxu0 0.0
    %324 = vmatmul.mubr.f32.gmra.mxu0 %v98
    %v325 = vpop.f32.mrf.mxu0
    %v326 = vadd.f32 %v222, %v325
    %v327 = vpop.f32.mrf.mxu0
    %328 = vdwg.mxu0
    %s329 = scalar_lea.vmem [#allocation2], 64
    %330 = vst.msk [vmem:[%s329] sm:$0xff] %vm205, %v291
    %331 = vst.msk [vmem:[%s329 + $0x8] sm:$0xff] %vm205, %v296
    %332 = vst.msk [vmem:[%s329 + $0x10] sm:$0xff] %vm205, %v301
    %333 = vst.msk [vmem:[%s329 + $0x18] sm:$0xff] %vm205, %v306
    %334 = vst.msk [vmem:[%s329 + $0x20] sm:$0xff] %vm205, %v311
    %335 = vst.msk [vmem:[%s329 + $0x28] sm:$0xff] %vm205, %v316
    %336 = vst.msk [vmem:[%s329 + $0x30] sm:$0xff] %vm205, %v321
    %337 = vst.msk [vmem:[%s329 + $0x38] sm:$0xff] %vm205, %v326
    %s338 = scalar_lea.vmem [#allocation5], 16
    %v339 = vld [vmem:[%s338] sm:$0xff]
    %s340 = scalar_lea.vmem [#allocation7], 2
    %v341 = vld [vmem:[%s340] sm:$0x1]
    %v343 = vlaneseq
    %v344 = vshrl.u32 %v343, 7
    %v345 = vsub.s32 0, %v344
    %v346 = vrot.slane %v341, %v345
    %348 = vmatprep.subr.mxu0 0.0
    %349 = vmatpush1.msra.mxu0 0.0
    %350 = vmatprep.subr.mxu0 0.0
    %351 = vmatpush1.msra.mxu0 0.0
    %352 = vmatprep.subr.mxu0 0.0
    %353 = vmatpush1.msra.mxu0 0.0
    %354 = vmatprep.subr.mxu0 0.0
    %355 = vmatpush1.msra.mxu0 0.0
    %356 = vmatprep.subr.mxu0 0.0
    %357 = vmatpush1.msra.mxu0 0.0
    %358 = vmatprep.subr.mxu0 0.0
    %359 = vmatpush1.msra.mxu0 0.0
    %360 = vmatprep.subr.mxu0 0.0
    %361 = vmatpush1.msra.mxu0 0.0
    %362 = vmatprep.subr.mxu0 0.0
    %363 = vmatpush1.msra.mxu0 0.0
    %364 = vmatprep.subr.mxu0 0.0
    %365 = vmatpush1.msra.mxu0 0.0
    %366 = vmatprep.subr.mxu0 0.0
    %367 = vmatpush1.msra.mxu0 0.0
    %368 = vmatprep.subr.mxu0 0.0
    %369 = vmatpush1.msra.mxu0 0.0
    %370 = vmatprep.subr.mxu0 0.0
    %371 = vmatpush1.msra.mxu0 0.0
    %372 = vmatprep.subr.mxu0 0.0
    %373 = vmatpush1.msra.mxu0 0.0
    %374 = vmatprep.subr.mxu0 0.0
    %375 = vmatpush1.msra.mxu0 0.0
    %376 = vmatprep.subr.mxu0 0.0
    %377 = vmatpush1.msra.mxu0 0.0
    %378 = vmatprep.subr.mxu0 0.0
    %379 = vmatpush1.msra.mxu0 %v339
    %380 = vmatprep.subr.mxu0 0.0
    %381 = vmatpush2.msra.mxu0 0.0
    %382 = vmatprep.subr.mxu0 0.0
    %383 = vmatpush2.msra.mxu0 0.0
    %384 = vmatprep.subr.mxu0 0.0
    %385 = vmatpush2.msra.mxu0 0.0
    %386 = vmatprep.subr.mxu0 0.0
    %387 = vmatpush2.msra.mxu0 0.0
    %388 = vmatprep.subr.mxu0 0.0
    %389 = vmatpush2.msra.mxu0 0.0
    %390 = vmatprep.subr.mxu0 0.0
    %391 = vmatpush2.msra.mxu0 0.0
    %392 = vmatprep.subr.mxu0 0.0
    %393 = vmatpush2.msra.mxu0 0.0
    %394 = vmatprep.subr.mxu0 0.0
    %395 = vmatpush2.msra.mxu0 0.0
    %396 = vmatprep.subr.mxu0 0.0
    %397 = vmatpush2.msra.mxu0 0.0
    %398 = vmatprep.subr.mxu0 0.0
    %399 = vmatpush2.msra.mxu0 0.0
    %400 = vmatprep.subr.mxu0 0.0
    %401 = vmatpush2.msra.mxu0 0.0
    %402 = vmatprep.subr.mxu0 0.0
    %403 = vmatpush2.msra.mxu0 0.0
    %404 = vmatprep.subr.mxu0 0.0
    %405 = vmatpush2.msra.mxu0 0.0
    %406 = vmatprep.subr.mxu0 0.0
    %407 = vmatpush2.msra.mxu0 0.0
    %408 = vmatprep.subr.mxu0 0.0
    %409 = vmatpush2.msra.mxu0 0.0
    %410 = vmatprep.subr.mxu0 0.0
    %411 = vmatpush2.msra.mxu0 0.0
    %412 = vmatprep.mubr.f32.mxu0 0.0
    %413 = vmatmul.mubr.f32.gmra.mxu0 %v77
    %v414 = vpop.f32.mrf.mxu0
    %v415 = vadd.f32 %v346, %v414
    %v416 = vpop.f32.mrf.mxu0
    %417 = vmatprep.mubr.f32.mxu0 0.0
    %418 = vmatmul.mubr.f32.gmra.mxu0 %v80
    %v419 = vpop.f32.mrf.mxu0
    %v420 = vadd.f32 %v346, %v419
    %v421 = vpop.f32.mrf.mxu0
    %422 = vmatprep.mubr.f32.mxu0 0.0
    %423 = vmatmul.mubr.f32.gmra.mxu0 %v83
    %v424 = vpop.f32.mrf.mxu0
    %v425 = vadd.f32 %v346, %v424
    %v426 = vpop.f32.mrf.mxu0
    %427 = vmatprep.mubr.f32.mxu0 0.0
    %428 = vmatmul.mubr.f32.gmra.mxu0 %v86
    %v429 = vpop.f32.mrf.mxu0
    %v430 = vadd.f32 %v346, %v429
    %v431 = vpop.f32.mrf.mxu0
    %432 = vmatprep.mubr.f32.mxu0 0.0
    %433 = vmatmul.mubr.f32.gmra.mxu0 %v89
    %v434 = vpop.f32.mrf.mxu0
    %v435 = vadd.f32 %v346, %v434
    %v436 = vpop.f32.mrf.mxu0
    %437 = vmatprep.mubr.f32.mxu0 0.0
    %438 = vmatmul.mubr.f32.gmra.mxu0 %v92
    %v439 = vpop.f32.mrf.mxu0
    %v440 = vadd.f32 %v346, %v439
    %v441 = vpop.f32.mrf.mxu0
    %442 = vmatprep.mubr.f32.mxu0 0.0
    %443 = vmatmul.mubr.f32.gmra.mxu0 %v95
    %v444 = vpop.f32.mrf.mxu0
    %v445 = vadd.f32 %v346, %v444
    %v446 = vpop.f32.mrf.mxu0
    %447 = vmatprep.mubr.f32.mxu0 0.0
    %448 = vmatmul.mubr.f32.gmra.mxu0 %v98
    %v449 = vpop.f32.mrf.mxu0
    %v450 = vadd.f32 %v346, %v449
    %v451 = vpop.f32.mrf.mxu0
    %452 = vdwg.mxu0
    %s453 = scalar_lea.vmem [#allocation2], 128
    %454 = vst.msk [vmem:[%s453] sm:$0xff] %vm205, %v415
    %455 = vst.msk [vmem:[%s453 + $0x8] sm:$0xff] %vm205, %v420
    %456 = vst.msk [vmem:[%s453 + $0x10] sm:$0xff] %vm205, %v425
    %457 = vst.msk [vmem:[%s453 + $0x18] sm:$0xff] %vm205, %v430
    %458 = vst.msk [vmem:[%s453 + $0x20] sm:$0xff] %vm205, %v435
    %459 = vst.msk [vmem:[%s453 + $0x28] sm:$0xff] %vm205, %v440
    %460 = vst.msk [vmem:[%s453 + $0x30] sm:$0xff] %vm205, %v445
    %461 = vst.msk [vmem:[%s453 + $0x38] sm:$0xff] %vm205, %v450
    %s462 = scalar_lea.vmem [#allocation5], 24
    %v463 = vld [vmem:[%s462] sm:$0xff]
    %s464 = scalar_lea.vmem [#allocation7], 3
    %v465 = vld [vmem:[%s464] sm:$0x1]
    %v467 = vlaneseq
    %v468 = vshrl.u32 %v467, 7
    %v469 = vsub.s32 0, %v468
    %v470 = vrot.slane %v465, %v469
    %472 = vmatprep.subr.mxu0 0.0
    %473 = vmatpush1.msra.mxu0 0.0
    %474 = vmatprep.subr.mxu0 0.0
    %475 = vmatpush1.msra.mxu0 0.0
    %476 = vmatprep.subr.mxu0 0.0
    %477 = vmatpush1.msra.mxu0 0.0
    %478 = vmatprep.subr.mxu0 0.0
    %479 = vmatpush1.msra.mxu0 0.0
    %480 = vmatprep.subr.mxu0 0.0
    %481 = vmatpush1.msra.mxu0 0.0
    %482 = vmatprep.subr.mxu0 0.0
    %483 = vmatpush1.msra.mxu0 0.0
    %484 = vmatprep.subr.mxu0 0.0
    %485 = vmatpush1.msra.mxu0 0.0
    %486 = vmatprep.subr.mxu0 0.0
    %487 = vmatpush1.msra.mxu0 0.0
    %488 = vmatprep.subr.mxu0 0.0
    %489 = vmatpush1.msra.mxu0 0.0
    %490 = vmatprep.subr.mxu0 0.0
    %491 = vmatpush1.msra.mxu0 0.0
    %492 = vmatprep.subr.mxu0 0.0
    %493 = vmatpush1.msra.mxu0 0.0
    %494 = vmatprep.subr.mxu0 0.0
    %495 = vmatpush1.msra.mxu0 0.0
    %496 = vmatprep.subr.mxu0 0.0
    %497 = vmatpush1.msra.mxu0 0.0
    %498 = vmatprep.subr.mxu0 0.0
    %499 = vmatpush1.msra.mxu0 0.0
    %500 = vmatprep.subr.mxu0 0.0
    %501 = vmatpush1.msra.mxu0 0.0
    %502 = vmatprep.subr.mxu0 0.0
    %503 = vmatpush1.msra.mxu0 %v463
    %504 = vmatprep.subr.mxu0 0.0
    %505 = vmatpush2.msra.mxu0 0.0
    %506 = vmatprep.subr.mxu0 0.0
    %507 = vmatpush2.msra.mxu0 0.0
    %508 = vmatprep.subr.mxu0 0.0
    %509 = vmatpush2.msra.mxu0 0.0
    %510 = vmatprep.subr.mxu0 0.0
    %511 = vmatpush2.msra.mxu0 0.0
    %512 = vmatprep.subr.mxu0 0.0
    %513 = vmatpush2.msra.mxu0 0.0
    %514 = vmatprep.subr.mxu0 0.0
    %515 = vmatpush2.msra.mxu0 0.0
    %516 = vmatprep.subr.mxu0 0.0
    %517 = vmatpush2.msra.mxu0 0.0
    %518 = vmatprep.subr.mxu0 0.0
    %519 = vmatpush2.msra.mxu0 0.0
    %520 = vmatprep.subr.mxu0 0.0
    %521 = vmatpush2.msra.mxu0 0.0
    %522 = vmatprep.subr.mxu0 0.0
    %523 = vmatpush2.msra.mxu0 0.0
    %524 = vmatprep.subr.mxu0 0.0
    %525 = vmatpush2.msra.mxu0 0.0
    %526 = vmatprep.subr.mxu0 0.0
    %527 = vmatpush2.msra.mxu0 0.0
    %528 = vmatprep.subr.mxu0 0.0
    %529 = vmatpush2.msra.mxu0 0.0
    %530 = vmatprep.subr.mxu0 0.0
    %531 = vmatpush2.msra.mxu0 0.0
    %532 = vmatprep.subr.mxu0 0.0
    %533 = vmatpush2.msra.mxu0 0.0
    %534 = vmatprep.subr.mxu0 0.0
    %535 = vmatpush2.msra.mxu0 0.0
    %536 = vmatprep.mubr.f32.mxu0 0.0
    %537 = vmatmul.mubr.f32.gmra.mxu0 %v77
    %v538 = vpop.f32.mrf.mxu0
    %v539 = vadd.f32 %v470, %v538
    %v540 = vpop.f32.mrf.mxu0
    %541 = vmatprep.mubr.f32.mxu0 0.0
    %542 = vmatmul.mubr.f32.gmra.mxu0 %v80
    %v543 = vpop.f32.mrf.mxu0
    %v544 = vadd.f32 %v470, %v543
    %v545 = vpop.f32.mrf.mxu0
    %546 = vmatprep.mubr.f32.mxu0 0.0
    %547 = vmatmul.mubr.f32.gmra.mxu0 %v83
    %v548 = vpop.f32.mrf.mxu0
    %v549 = vadd.f32 %v470, %v548
    %v550 = vpop.f32.mrf.mxu0
    %551 = vmatprep.mubr.f32.mxu0 0.0
    %552 = vmatmul.mubr.f32.gmra.mxu0 %v86
    %v553 = vpop.f32.mrf.mxu0
    %v554 = vadd.f32 %v470, %v553
    %v555 = vpop.f32.mrf.mxu0
    %556 = vmatprep.mubr.f32.mxu0 0.0
    %557 = vmatmul.mubr.f32.gmra.mxu0 %v89
    %v558 = vpop.f32.mrf.mxu0
    %v559 = vadd.f32 %v470, %v558
    %v560 = vpop.f32.mrf.mxu0
    %561 = vmatprep.mubr.f32.mxu0 0.0
    %562 = vmatmul.mubr.f32.gmra.mxu0 %v92
    %v563 = vpop.f32.mrf.mxu0
    %v564 = vadd.f32 %v470, %v563
    %v565 = vpop.f32.mrf.mxu0
    %566 = vmatprep.mubr.f32.mxu0 0.0
    %567 = vmatmul.mubr.f32.gmra.mxu0 %v95
    %v568 = vpop.f32.mrf.mxu0
    %v569 = vadd.f32 %v470, %v568
    %v570 = vpop.f32.mrf.mxu0
    %571 = vmatprep.mubr.f32.mxu0 0.0
    %572 = vmatmul.mubr.f32.gmra.mxu0 %v98
    %v573 = vpop.f32.mrf.mxu0
    %v574 = vadd.f32 %v470, %v573
    %v575 = vpop.f32.mrf.mxu0
    %576 = vdwg.mxu0
    %s577 = scalar_lea.vmem [#allocation2], 192
    %578 = vst.msk [vmem:[%s577] sm:$0xff] %vm205, %v539
    %579 = vst.msk [vmem:[%s577 + $0x8] sm:$0xff] %vm205, %v544
    %580 = vst.msk [vmem:[%s577 + $0x10] sm:$0xff] %vm205, %v549
    %581 = vst.msk [vmem:[%s577 + $0x18] sm:$0xff] %vm205, %v554
    %582 = vst.msk [vmem:[%s577 + $0x20] sm:$0xff] %vm205, %v559
    %583 = vst.msk [vmem:[%s577 + $0x28] sm:$0xff] %vm205, %v564
    %584 = vst.msk [vmem:[%s577 + $0x30] sm:$0xff] %vm205, %v569
    %585 = vst.msk [vmem:[%s577 + $0x38] sm:$0xff] %vm205, %v574
    %v586 = vld [vmem:[#allocation2] sm:$0xff]
    %v587 = vld [vmem:[%s2] sm:$0xff]
    %v588 = vld [vmem:[%s2 + $0x8] sm:$0xff]
    %v589 = vld [vmem:[%s2 + $0x10] sm:$0xff]
    %v590 = vld [vmem:[%s2 + $0x18] sm:$0xff]
    %v592 = vsel %vm205, 0.0, 0
    %594 = vmatprep.subr.mxu0 0.0
    %595 = vmatpush1.msra.mxu0 0.0
    %596 = vmatprep.subr.mxu0 0.0
    %597 = vmatpush1.msra.mxu0 0.0
    %598 = vmatprep.subr.mxu0 0.0
    %599 = vmatpush1.msra.mxu0 0.0
    %600 = vmatprep.subr.mxu0 0.0
    %601 = vmatpush1.msra.mxu0 0.0
    %602 = vmatprep.subr.mxu0 0.0
    %603 = vmatpush1.msra.mxu0 0.0
    %604 = vmatprep.subr.mxu0 0.0
    %605 = vmatpush1.msra.mxu0 0.0
    %606 = vmatprep.subr.mxu0 0.0
    %607 = vmatpush1.msra.mxu0 0.0
    %608 = vmatprep.subr.mxu0 0.0
    %609 = vmatpush1.msra.mxu0 0.0
    %610 = vmatprep.subr.mxu0 0.0
    %611 = vmatpush1.msra.mxu0 0.0
    %612 = vmatprep.subr.mxu0 0.0
    %613 = vmatpush1.msra.mxu0 0.0
    %614 = vmatprep.subr.mxu0 0.0
    %615 = vmatpush1.msra.mxu0 0.0
    %616 = vmatprep.subr.mxu0 0.0
    %617 = vmatpush1.msra.mxu0 0.0
    %618 = vmatprep.subr.mxu0 0.0
    %619 = vmatpush1.msra.mxu0 %v590
    %620 = vmatprep.subr.mxu0 0.0
    %621 = vmatpush1.msra.mxu0 %v589
    %622 = vmatprep.subr.mxu0 0.0
    %623 = vmatpush1.msra.mxu0 %v588
    %624 = vmatprep.subr.mxu0 0.0
    %625 = vmatpush1.msra.mxu0 %v587
    %626 = vmatprep.subr.mxu0 0.0
    %627 = vmatpush2.msra.mxu0 0.0
    %628 = vmatprep.subr.mxu0 0.0
    %629 = vmatpush2.msra.mxu0 0.0
    %630 = vmatprep.subr.mxu0 0.0
    %631 = vmatpush2.msra.mxu0 0.0
    %632 = vmatprep.subr.mxu0 0.0
    %633 = vmatpush2.msra.mxu0 0.0
    %634 = vmatprep.subr.mxu0 0.0
    %635 = vmatpush2.msra.mxu0 0.0
    %636 = vmatprep.subr.mxu0 0.0
    %637 = vmatpush2.msra.mxu0 0.0
    %638 = vmatprep.subr.mxu0 0.0
    %639 = vmatpush2.msra.mxu0 0.0
    %640 = vmatprep.subr.mxu0 0.0
    %641 = vmatpush2.msra.mxu0 0.0
    %642 = vmatprep.subr.mxu0 0.0
    %643 = vmatpush2.msra.mxu0 0.0
    %644 = vmatprep.subr.mxu0 0.0
    %645 = vmatpush2.msra.mxu0 0.0
    %646 = vmatprep.subr.mxu0 0.0
    %647 = vmatpush2.msra.mxu0 0.0
    %648 = vmatprep.subr.mxu0 0.0
    %649 = vmatpush2.msra.mxu0 0.0
    %650 = vmatprep.subr.mxu0 0.0
    %651 = vmatpush2.msra.mxu0 0.0
    %652 = vmatprep.subr.mxu0 0.0
    %653 = vmatpush2.msra.mxu0 0.0
    %654 = vmatprep.subr.mxu0 0.0
    %655 = vmatpush2.msra.mxu0 0.0
    %656 = vmatprep.subr.mxu0 0.0
    %657 = vmatpush2.msra.mxu0 0.0
    %658 = vmatprep.mubr.f32.mxu0 0.0
    %659 = vmatmul.mubr.f32.gmra.mxu0 %v592
    %v660 = vpop.f32.mrf.mxu0
    %v661 = vadd.f32 0.0, %v660
    %v662 = vpop.f32.mrf.mxu0
    %663 = vdwg.mxu0
    %v664 = vadd.f32 %v586, %v661
    %v665 = vxor.u32 %v664, 2147483648
    %v666 = vmul.f32 %v665, 1.442695
    %v667 = vpow.pop %v666
    %v668 = vadd.f32 %v667, 1.0
    %v669 = vrcp.pop %v668
    %v670 = vmul.f32 1.0, %v669
    %s671 = sadd.s32 0, 64
    %s672 = scalar_lea.vmem [#allocation2], %s671
    %v673 = vld [vmem:[%s672] sm:$0xff]
    %s674 = scalar_lea.vmem %s2, 32
    %v675 = vld [vmem:[%s674] sm:$0xff]
    %v676 = vld [vmem:[%s674 + $0x8] sm:$0xff]
    %v677 = vld [vmem:[%s674 + $0x10] sm:$0xff]
    %v678 = vld [vmem:[%s674 + $0x18] sm:$0xff]
    %679 = vmatprep.subr.mxu0 0.0
    %680 = vmatpush1.msra.mxu0 0.0
    %681 = vmatprep.subr.mxu0 0.0
    %682 = vmatpush1.msra.mxu0 0.0
    %683 = vmatprep.subr.mxu0 0.0
    %684 = vmatpush1.msra.mxu0 0.0
    %685 = vmatprep.subr.mxu0 0.0
    %686 = vmatpush1.msra.mxu0 0.0
    %687 = vmatprep.subr.mxu0 0.0
    %688 = vmatpush1.msra.mxu0 0.0
    %689 = vmatprep.subr.mxu0 0.0
    %690 = vmatpush1.msra.mxu0 0.0
    %691 = vmatprep.subr.mxu0 0.0
    %692 = vmatpush1.msra.mxu0 0.0
    %693 = vmatprep.subr.mxu0 0.0
    %694 = vmatpush1.msra.mxu0 0.0
    %695 = vmatprep.subr.mxu0 0.0
    %696 = vmatpush1.msra.mxu0 0.0
    %697 = vmatprep.subr.mxu0 0.0
    %698 = vmatpush1.msra.mxu0 0.0
    %699 = vmatprep.subr.mxu0 0.0
    %700 = vmatpush1.msra.mxu0 0.0
    %701 = vmatprep.subr.mxu0 0.0
    %702 = vmatpush1.msra.mxu0 0.0
    %703 = vmatprep.subr.mxu0 0.0
    %704 = vmatpush1.msra.mxu0 %v678
    %705 = vmatprep.subr.mxu0 0.0
    %706 = vmatpush1.msra.mxu0 %v677
    %707 = vmatprep.subr.mxu0 0.0
    %708 = vmatpush1.msra.mxu0 %v676
    %709 = vmatprep.subr.mxu0 0.0
    %710 = vmatpush1.msra.mxu0 %v675
    %711 = vmatprep.subr.mxu0 0.0
    %712 = vmatpush2.msra.mxu0 0.0
    %713 = vmatprep.subr.mxu0 0.0
    %714 = vmatpush2.msra.mxu0 0.0
    %715 = vmatprep.subr.mxu0 0.0
    %716 = vmatpush2.msra.mxu0 0.0
    %717 = vmatprep.subr.mxu0 0.0
    %718 = vmatpush2.msra.mxu0 0.0
    %719 = vmatprep.subr.mxu0 0.0
    %720 = vmatpush2.msra.mxu0 0.0
    %721 = vmatprep.subr.mxu0 0.0
    %722 = vmatpush2.msra.mxu0 0.0
    %723 = vmatprep.subr.mxu0 0.0
    %724 = vmatpush2.msra.mxu0 0.0
    %725 = vmatprep.subr.mxu0 0.0
    %726 = vmatpush2.msra.mxu0 0.0
    %727 = vmatprep.subr.mxu0 0.0
    %728 = vmatpush2.msra.mxu0 0.0
    %729 = vmatprep.subr.mxu0 0.0
    %730 = vmatpush2.msra.mxu0 0.0
    %731 = vmatprep.subr.mxu0 0.0
    %732 = vmatpush2.msra.mxu0 0.0
    %733 = vmatprep.subr.mxu0 0.0
    %734 = vmatpush2.msra.mxu0 0.0
    %735 = vmatprep.subr.mxu0 0.0
    %736 = vmatpush2.msra.mxu0 0.0
    %737 = vmatprep.subr.mxu0 0.0
    %738 = vmatpush2.msra.mxu0 0.0
    %739 = vmatprep.subr.mxu0 0.0
    %740 = vmatpush2.msra.mxu0 0.0
    %741 = vmatprep.subr.mxu0 0.0
    %742 = vmatpush2.msra.mxu0 0.0
    %743 = vmatprep.mubr.f32.mxu0 0.0
    %744 = vmatmul.mubr.f32.gmra.mxu0 %v592
    %v745 = vpop.f32.mrf.mxu0
    %v746 = vadd.f32 0.0, %v745
    %v747 = vpop.f32.mrf.mxu0
    %748 = vdwg.mxu0
    %v749 = vadd.f32 %v673, %v746
    %v750 = vxor.u32 %v749, 2147483648
    %v751 = vmul.f32 %v750, 1.442695
    %v752 = vpow.pop %v751
    %v753 = vadd.f32 %v752, 1.0
    %v754 = vrcp.pop %v753
    %v755 = vmul.f32 1.0, %v754
    %s756 = sadd.s32 0, 128
    %s757 = scalar_lea.vmem [#allocation2], %s756
    %v758 = vld [vmem:[%s757] sm:$0xff]
    %s759 = scalar_lea.vmem %s2, 64
    %v760 = vld [vmem:[%s759] sm:$0xff]
    %v761 = vld [vmem:[%s759 + $0x8] sm:$0xff]
    %v762 = vld [vmem:[%s759 + $0x10] sm:$0xff]
    %v763 = vld [vmem:[%s759 + $0x18] sm:$0xff]
    %764 = vmatprep.subr.mxu0 0.0
    %765 = vmatpush1.msra.mxu0 0.0
    %766 = vmatprep.subr.mxu0 0.0
    %767 = vmatpush1.msra.mxu0 0.0
    %768 = vmatprep.subr.mxu0 0.0
    %769 = vmatpush1.msra.mxu0 0.0
    %770 = vmatprep.subr.mxu0 0.0
    %771 = vmatpush1.msra.mxu0 0.0
    %772 = vmatprep.subr.mxu0 0.0
    %773 = vmatpush1.msra.mxu0 0.0
    %774 = vmatprep.subr.mxu0 0.0
    %775 = vmatpush1.msra.mxu0 0.0
    %776 = vmatprep.subr.mxu0 0.0
    %777 = vmatpush1.msra.mxu0 0.0
    %778 = vmatprep.subr.mxu0 0.0
    %779 = vmatpush1.msra.mxu0 0.0
    %780 = vmatprep.subr.mxu0 0.0
    %781 = vmatpush1.msra.mxu0 0.0
    %782 = vmatprep.subr.mxu0 0.0
    %783 = vmatpush1.msra.mxu0 0.0
    %784 = vmatprep.subr.mxu0 0.0
    %785 = vmatpush1.msra.mxu0 0.0
    %786 = vmatprep.subr.mxu0 0.0
    %787 = vmatpush1.msra.mxu0 0.0
    %788 = vmatprep.subr.mxu0 0.0
    %789 = vmatpush1.msra.mxu0 %v763
    %790 = vmatprep.subr.mxu0 0.0
    %791 = vmatpush1.msra.mxu0 %v762
    %792 = vmatprep.subr.mxu0 0.0
    %793 = vmatpush1.msra.mxu0 %v761
    %794 = vmatprep.subr.mxu0 0.0
    %795 = vmatpush1.msra.mxu0 %v760
    %796 = vmatprep.subr.mxu0 0.0
    %797 = vmatpush2.msra.mxu0 0.0
    %798 = vmatprep.subr.mxu0 0.0
    %799 = vmatpush2.msra.mxu0 0.0
    %800 = vmatprep.subr.mxu0 0.0
    %801 = vmatpush2.msra.mxu0 0.0
    %802 = vmatprep.subr.mxu0 0.0
    %803 = vmatpush2.msra.mxu0 0.0
    %804 = vmatprep.subr.mxu0 0.0
    %805 = vmatpush2.msra.mxu0 0.0
    %806 = vmatprep.subr.mxu0 0.0
    %807 = vmatpush2.msra.mxu0 0.0
    %808 = vmatprep.subr.mxu0 0.0
    %809 = vmatpush2.msra.mxu0 0.0
    %810 = vmatprep.subr.mxu0 0.0
    %811 = vmatpush2.msra.mxu0 0.0
    %812 = vmatprep.subr.mxu0 0.0
    %813 = vmatpush2.msra.mxu0 0.0
    %814 = vmatprep.subr.mxu0 0.0
    %815 = vmatpush2.msra.mxu0 0.0
    %816 = vmatprep.subr.mxu0 0.0
    %817 = vmatpush2.msra.mxu0 0.0
    %818 = vmatprep.subr.mxu0 0.0
    %819 = vmatpush2.msra.mxu0 0.0
    %820 = vmatprep.subr.mxu0 0.0
    %821 = vmatpush2.msra.mxu0 0.0
    %822 = vmatprep.subr.mxu0 0.0
    %823 = vmatpush2.msra.mxu0 0.0
    %824 = vmatprep.subr.mxu0 0.0
    %825 = vmatpush2.msra.mxu0 0.0
    %826 = vmatprep.subr.mxu0 0.0
    %827 = vmatpush2.msra.mxu0 0.0
    %828 = vmatprep.mubr.f32.mxu0 0.0
    %829 = vmatmul.mubr.f32.gmra.mxu0 %v592
    %v830 = vpop.f32.mrf.mxu0
    %v831 = vadd.f32 0.0, %v830
    %v832 = vpop.f32.mrf.mxu0
    %833 = vdwg.mxu0
    %v834 = vadd.f32 %v758, %v831
    %v835 = vtanh.pop %v834
    %s836 = sadd.s32 0, 192
    %s837 = scalar_lea.vmem [#allocation2], %s836
    %v838 = vld [vmem:[%s837] sm:$0xff]
    %s839 = scalar_lea.vmem %s2, 96
    %v840 = vld [vmem:[%s839] sm:$0xff]
    %v841 = vld [vmem:[%s839 + $0x8] sm:$0xff]
    %v842 = vld [vmem:[%s839 + $0x10] sm:$0xff]
    %v843 = vld [vmem:[%s839 + $0x18] sm:$0xff]
    %844 = vmatprep.subr.mxu0 0.0
    %845 = vmatpush1.msra.mxu0 0.0
    %846 = vmatprep.subr.mxu0 0.0
    %847 = vmatpush1.msra.mxu0 0.0
    %848 = vmatprep.subr.mxu0 0.0
    %849 = vmatpush1.msra.mxu0 0.0
    %850 = vmatprep.subr.mxu0 0.0
    %851 = vmatpush1.msra.mxu0 0.0
    %852 = vmatprep.subr.mxu0 0.0
    %853 = vmatpush1.msra.mxu0 0.0
    %854 = vmatprep.subr.mxu0 0.0
    %855 = vmatpush1.msra.mxu0 0.0
    %856 = vmatprep.subr.mxu0 0.0
    %857 = vmatpush1.msra.mxu0 0.0
    %858 = vmatprep.subr.mxu0 0.0
    %859 = vmatpush1.msra.mxu0 0.0
    %860 = vmatprep.subr.mxu0 0.0
    %861 = vmatpush1.msra.mxu0 0.0
    %862 = vmatprep.subr.mxu0 0.0
    %863 = vmatpush1.msra.mxu0 0.0
    %864 = vmatprep.subr.mxu0 0.0
    %865 = vmatpush1.msra.mxu0 0.0
    %866 = vmatprep.subr.mxu0 0.0
    %867 = vmatpush1.msra.mxu0 0.0
    %868 = vmatprep.subr.mxu0 0.0
    %869 = vmatpush1.msra.mxu0 %v843
    %870 = vmatprep.subr.mxu0 0.0
    %871 = vmatpush1.msra.mxu0 %v842
    %872 = vmatprep.subr.mxu0 0.0
    %873 = vmatpush1.msra.mxu0 %v841
    %874 = vmatprep.subr.mxu0 0.0
    %875 = vmatpush1.msra.mxu0 %v840
    %876 = vmatprep.subr.mxu0 0.0
    %877 = vmatpush2.msra.mxu0 0.0
    %878 = vmatprep.subr.mxu0 0.0
    %879 = vmatpush2.msra.mxu0 0.0
    %880 = vmatprep.subr.mxu0 0.0
    %881 = vmatpush2.msra.mxu0 0.0
    %882 = vmatprep.subr.mxu0 0.0
    %883 = vmatpush2.msra.mxu0 0.0
    %884 = vmatprep.subr.mxu0 0.0
    %885 = vmatpush2.msra.mxu0 0.0
    %886 = vmatprep.subr.mxu0 0.0
    %887 = vmatpush2.msra.mxu0 0.0
    %888 = vmatprep.subr.mxu0 0.0
    %889 = vmatpush2.msra.mxu0 0.0
    %890 = vmatprep.subr.mxu0 0.0
    %891 = vmatpush2.msra.mxu0 0.0
    %892 = vmatprep.subr.mxu0 0.0
    %893 = vmatpush2.msra.mxu0 0.0
    %894 = vmatprep.subr.mxu0 0.0
    %895 = vmatpush2.msra.mxu0 0.0
    %896 = vmatprep.subr.mxu0 0.0
    %897 = vmatpush2.msra.mxu0 0.0
    %898 = vmatprep.subr.mxu0 0.0
    %899 = vmatpush2.msra.mxu0 0.0
    %900 = vmatprep.subr.mxu0 0.0
    %901 = vmatpush2.msra.mxu0 0.0
    %902 = vmatprep.subr.mxu0 0.0
    %903 = vmatpush2.msra.mxu0 0.0
    %904 = vmatprep.subr.mxu0 0.0
    %905 = vmatpush2.msra.mxu0 0.0
    %906 = vmatprep.subr.mxu0 0.0
    %907 = vmatpush2.msra.mxu0 0.0
    %908 = vmatprep.mubr.f32.mxu0 0.0
    %909 = vmatmul.mubr.f32.gmra.mxu0 %v592
    %v910 = vpop.f32.mrf.mxu0
    %v911 = vadd.f32 0.0, %v910
    %v912 = vpop.f32.mrf.mxu0
    %913 = vdwg.mxu0
    %v914 = vadd.f32 %v838, %v911
    %v915 = vxor.u32 %v914, 2147483648
    %v916 = vmul.f32 %v915, 1.442695
    %v917 = vpow.pop %v916
    %v918 = vadd.f32 %v917, 1.0
    %v919 = vrcp.pop %v918
    %v920 = vmul.f32 1.0, %v919
    %v921 = vmul.f32 %v755, 0.0
    %v922 = vmul.f32 %v670, %v835
    %v923 = vadd.f32 %v921, %v922
    %v924 = vtanh.pop %v923
    %v925 = vmul.f32 %v920, %v924
    %926 = vst.msk [vmem:[#allocation3] sm:$0xff] %vm205, %v925
    %s927 = scalar_lea.vmem [#allocation2], 8
    %v928 = vld [vmem:[%s927] sm:$0xff]
    %v929 = vld [vmem:[%s2] sm:$0xff]
    %v930 = vld [vmem:[%s2 + $0x8] sm:$0xff]
    %v931 = vld [vmem:[%s2 + $0x10] sm:$0xff]
    %v932 = vld [vmem:[%s2 + $0x18] sm:$0xff]
    %v934 = vsel %vm205, %v925, 0
    %936 = vmatprep.subr.mxu0 0.0
    %937 = vmatpush1.msra.mxu0 0.0
    %938 = vmatprep.subr.mxu0 0.0
    %939 = vmatpush1.msra.mxu0 0.0
    %940 = vmatprep.subr.mxu0 0.0
    %941 = vmatpush1.msra.mxu0 0.0
    %942 = vmatprep.subr.mxu0 0.0
    %943 = vmatpush1.msra.mxu0 0.0
    %944 = vmatprep.subr.mxu0 0.0
    %945 = vmatpush1.msra.mxu0 0.0
    %946 = vmatprep.subr.mxu0 0.0
    %947 = vmatpush1.msra.mxu0 0.0
    %948 = vmatprep.subr.mxu0 0.0
    %949 = vmatpush1.msra.mxu0 0.0
    %950 = vmatprep.subr.mxu0 0.0
    %951 = vmatpush1.msra.mxu0 0.0
    %952 = vmatprep.subr.mxu0 0.0
    %953 = vmatpush1.msra.mxu0 0.0
    %954 = vmatprep.subr.mxu0 0.0
    %955 = vmatpush1.msra.mxu0 0.0
    %956 = vmatprep.subr.mxu0 0.0
    %957 = vmatpush1.msra.mxu0 0.0
    %958 = vmatprep.subr.mxu0 0.0
    %959 = vmatpush1.msra.mxu0 0.0
    %960 = vmatprep.subr.mxu0 0.0
    %961 = vmatpush1.msra.mxu0 %v932
    %962 = vmatprep.subr.mxu0 0.0
    %963 = vmatpush1.msra.mxu0 %v931
    %964 = vmatprep.subr.mxu0 0.0
    %965 = vmatpush1.msra.mxu0 %v930
    %966 = vmatprep.subr.mxu0 0.0
    %967 = vmatpush1.msra.mxu0 %v929
    %968 = vmatprep.subr.mxu0 0.0
    %969 = vmatpush2.msra.mxu0 0.0
    %970 = vmatprep.subr.mxu0 0.0
    %971 = vmatpush2.msra.mxu0 0.0
    %972 = vmatprep.subr.mxu0 0.0
    %973 = vmatpush2.msra.mxu0 0.0
    %974 = vmatprep.subr.mxu0 0.0
    %975 = vmatpush2.msra.mxu0 0.0
    %976 = vmatprep.subr.mxu0 0.0
    %977 = vmatpush2.msra.mxu0 0.0
    %978 = vmatprep.subr.mxu0 0.0
    %979 = vmatpush2.msra.mxu0 0.0
    %980 = vmatprep.subr.mxu0 0.0
    %981 = vmatpush2.msra.mxu0 0.0
    %982 = vmatprep.subr.mxu0 0.0
    %983 = vmatpush2.msra.mxu0 0.0
    %984 = vmatprep.subr.mxu0 0.0
    %985 = vmatpush2.msra.mxu0 0.0
    %986 = vmatprep.subr.mxu0 0.0
    %987 = vmatpush2.msra.mxu0 0.0
    %988 = vmatprep.subr.mxu0 0.0
    %989 = vmatpush2.msra.mxu0 0.0
    %990 = vmatprep.subr.mxu0 0.0
    %991 = vmatpush2.msra.mxu0 0.0
    %992 = vmatprep.subr.mxu0 0.0
    %993 = vmatpush2.msra.mxu0 0.0
    %994 = vmatprep.subr.mxu0 0.0
    %995 = vmatpush2.msra.mxu0 0.0
    %996 = vmatprep.subr.mxu0 0.0
    %997 = vmatpush2.msra.mxu0 0.0
    %998 = vmatprep.subr.mxu0 0.0
    %999 = vmatpush2.msra.mxu0 0.0
    %1000 = vmatprep.mubr.f32.mxu0 0.0
    %1001 = vmatmul.mubr.f32.gmra.mxu0 %v934
    %v1002 = vpop.f32.mrf.mxu0
    %v1003 = vadd.f32 0.0, %v1002
    %v1004 = vpop.f32.mrf.mxu0
    %1005 = vdwg.mxu0
    %v1006 = vadd.f32 %v928, %v1003
    %v1007 = vxor.u32 %v1006, 2147483648
    %v1008 = vmul.f32 %v1007, 1.442695
    %v1009 = vpow.pop %v1008
    %v1010 = vadd.f32 %v1009, 1.0
    %v1011 = vrcp.pop %v1010
    %v1012 = vmul.f32 1.0, %v1011
    %s1013 = sadd.s32 8, 64
    %s1014 = scalar_lea.vmem [#allocation2], %s1013
    %v1015 = vld [vmem:[%s1014] sm:$0xff]
    %v1016 = vld [vmem:[%s674] sm:$0xff]
    %v1017 = vld [vmem:[%s674 + $0x8] sm:$0xff]
    %v1018 = vld [vmem:[%s674 + $0x10] sm:$0xff]
    %v1019 = vld [vmem:[%s674 + $0x18] sm:$0xff]
    %1020 = vmatprep.subr.mxu0 0.0
    %1021 = vmatpush1.msra.mxu0 0.0
    %1022 = vmatprep.subr.mxu0 0.0
    %1023 = vmatpush1.msra.mxu0 0.0
    %1024 = vmatprep.subr.mxu0 0.0
    %1025 = vmatpush1.msra.mxu0 0.0
    %1026 = vmatprep.subr.mxu0 0.0
    %1027 = vmatpush1.msra.mxu0 0.0
    %1028 = vmatprep.subr.mxu0 0.0
    %1029 = vmatpush1.msra.mxu0 0.0
    %1030 = vmatprep.subr.mxu0 0.0
    %1031 = vmatpush1.msra.mxu0 0.0
    %1032 = vmatprep.subr.mxu0 0.0
    %1033 = vmatpush1.msra.mxu0 0.0
    %1034 = vmatprep.subr.mxu0 0.0
    %1035 = vmatpush1.msra.mxu0 0.0
    %1036 = vmatprep.subr.mxu0 0.0
    %1037 = vmatpush1.msra.mxu0 0.0
    %1038 = vmatprep.subr.mxu0 0.0
    %1039 = vmatpush1.msra.mxu0 0.0
    %1040 = vmatprep.subr.mxu0 0.0
    %1041 = vmatpush1.msra.mxu0 0.0
    %1042 = vmatprep.subr.mxu0 0.0
    %1043 = vmatpush1.msra.mxu0 0.0
    %1044 = vmatprep.subr.mxu0 0.0
    %1045 = vmatpush1.msra.mxu0 %v1019
    %1046 = vmatprep.subr.mxu0 0.0
    %1047 = vmatpush1.msra.mxu0 %v1018
    %1048 = vmatprep.subr.mxu0 0.0
    %1049 = vmatpush1.msra.mxu0 %v1017
    %1050 = vmatprep.subr.mxu0 0.0
    %1051 = vmatpush1.msra.mxu0 %v1016
    %1052 = vmatprep.subr.mxu0 0.0
    %1053 = vmatpush2.msra.mxu0 0.0
    %1054 = vmatprep.subr.mxu0 0.0
    %1055 = vmatpush2.msra.mxu0 0.0
    %1056 = vmatprep.subr.mxu0 0.0
    %1057 = vmatpush2.msra.mxu0 0.0
    %1058 = vmatprep.subr.mxu0 0.0
    %1059 = vmatpush2.msra.mxu0 0.0
    %1060 = vmatprep.subr.mxu0 0.0
    %1061 = vmatpush2.msra.mxu0 0.0
    %1062 = vmatprep.subr.mxu0 0.0
    %1063 = vmatpush2.msra.mxu0 0.0
    %1064 = vmatprep.subr.mxu0 0.0
    %1065 = vmatpush2.msra.mxu0 0.0
    %1066 = vmatprep.subr.mxu0 0.0
    %1067 = vmatpush2.msra.mxu0 0.0
    %1068 = vmatprep.subr.mxu0 0.0
    %1069 = vmatpush2.msra.mxu0 0.0
    %1070 = vmatprep.subr.mxu0 0.0
    %1071 = vmatpush2.msra.mxu0 0.0
    %1072 = vmatprep.subr.mxu0 0.0
    %1073 = vmatpush2.msra.mxu0 0.0
    %1074 = vmatprep.subr.mxu0 0.0
    %1075 = vmatpush2.msra.mxu0 0.0
    %1076 = vmatprep.subr.mxu0 0.0
    %1077 = vmatpush2.msra.mxu0 0.0
    %1078 = vmatprep.subr.mxu0 0.0
    %1079 = vmatpush2.msra.mxu0 0.0
    %1080 = vmatprep.subr.mxu0 0.0
    %1081 = vmatpush2.msra.mxu0 0.0
    %1082 = vmatprep.subr.mxu0 0.0
    %1083 = vmatpush2.msra.mxu0 0.0
    %1084 = vmatprep.mubr.f32.mxu0 0.0
    %1085 = vmatmul.mubr.f32.gmra.mxu0 %v934
    %v1086 = vpop.f32.mrf.mxu0
    %v1087 = vadd.f32 0.0, %v1086
    %v1088 = vpop.f32.mrf.mxu0
    %1089 = vdwg.mxu0
    %v1090 = vadd.f32 %v1015, %v1087
    %v1091 = vxor.u32 %v1090, 2147483648
    %v1092 = vmul.f32 %v1091, 1.442695
    %v1093 = vpow.pop %v1092
    %v1094 = vadd.f32 %v1093, 1.0
    %v1095 = vrcp.pop %v1094
    %v1096 = vmul.f32 1.0, %v1095
    %s1097 = sadd.s32 8, 128
    %s1098 = scalar_lea.vmem [#allocation2], %s1097
    %v1099 = vld [vmem:[%s1098] sm:$0xff]
    %v1100 = vld [vmem:[%s759] sm:$0xff]
    %v1101 = vld [vmem:[%s759 + $0x8] sm:$0xff]
    %v1102 = vld [vmem:[%s759 + $0x10] sm:$0xff]
    %v1103 = vld [vmem:[%s759 + $0x18] sm:$0xff]
    %1104 = vmatprep.subr.mxu0 0.0
    %1105 = vmatpush1.msra.mxu0 0.0
    %1106 = vmatprep.subr.mxu0 0.0
    %1107 = vmatpush1.msra.mxu0 0.0
    %1108 = vmatprep.subr.mxu0 0.0
    %1109 = vmatpush1.msra.mxu0 0.0
    %1110 = vmatprep.subr.mxu0 0.0
    %1111 = vmatpush1.msra.mxu0 0.0
    %1112 = vmatprep.subr.mxu0 0.0
    %1113 = vmatpush1.msra.mxu0 0.0
    %1114 = vmatprep.subr.mxu0 0.0
    %1115 = vmatpush1.msra.mxu0 0.0
    %1116 = vmatprep.subr.mxu0 0.0
    %1117 = vmatpush1.msra.mxu0 0.0
    %1118 = vmatprep.subr.mxu0 0.0
    %1119 = vmatpush1.msra.mxu0 0.0
    %1120 = vmatprep.subr.mxu0 0.0
    %1121 = vmatpush1.msra.mxu0 0.0
    %1122 = vmatprep.subr.mxu0 0.0
    %1123 = vmatpush1.msra.mxu0 0.0
    %1124 = vmatprep.subr.mxu0 0.0
    %1125 = vmatpush1.msra.mxu0 0.0
    %1126 = vmatprep.subr.mxu0 0.0
    %1127 = vmatpush1.msra.mxu0 0.0
    %1128 = vmatprep.subr.mxu0 0.0
    %1129 = vmatpush1.msra.mxu0 %v1103
    %1130 = vmatprep.subr.mxu0 0.0
    %1131 = vmatpush1.msra.mxu0 %v1102
    %1132 = vmatprep.subr.mxu0 0.0
    %1133 = vmatpush1.msra.mxu0 %v1101
    %1134 = vmatprep.subr.mxu0 0.0
    %1135 = vmatpush1.msra.mxu0 %v1100
    %1136 = vmatprep.subr.mxu0 0.0
    %1137 = vmatpush2.msra.mxu0 0.0
    %1138 = vmatprep.subr.mxu0 0.0
    %1139 = vmatpush2.msra.mxu0 0.0
    %1140 = vmatprep.subr.mxu0 0.0
    %1141 = vmatpush2.msra.mxu0 0.0
    %1142 = vmatprep.subr.mxu0 0.0
    %1143 = vmatpush2.msra.mxu0 0.0
    %1144 = vmatprep.subr.mxu0 0.0
    %1145 = vmatpush2.msra.mxu0 0.0
    %1146 = vmatprep.subr.mxu0 0.0
    %1147 = vmatpush2.msra.mxu0 0.0
    %1148 = vmatprep.subr.mxu0 0.0
    %1149 = vmatpush2.msra.mxu0 0.0
    %1150 = vmatprep.subr.mxu0 0.0
    %1151 = vmatpush2.msra.mxu0 0.0
    %1152 = vmatprep.subr.mxu0 0.0
    %1153 = vmatpush2.msra.mxu0 0.0
    %1154 = vmatprep.subr.mxu0 0.0
    %1155 = vmatpush2.msra.mxu0 0.0
    %1156 = vmatprep.subr.mxu0 0.0
    %1157 = vmatpush2.msra.mxu0 0.0
    %1158 = vmatprep.subr.mxu0 0.0
    %1159 = vmatpush2.msra.mxu0 0.0
    %1160 = vmatprep.subr.mxu0 0.0
    %1161 = vmatpush2.msra.mxu0 0.0
    %1162 = vmatprep.subr.mxu0 0.0
    %1163 = vmatpush2.msra.mxu0 0.0
    %1164 = vmatprep.subr.mxu0 0.0
    %1165 = vmatpush2.msra.mxu0 0.0
    %1166 = vmatprep.subr.mxu0 0.0
    %1167 = vmatpush2.msra.mxu0 0.0
    %1168 = vmatprep.mubr.f32.mxu0 0.0
    %1169 = vmatmul.mubr.f32.gmra.mxu0 %v934
    %v1170 = vpop.f32.mrf.mxu0
    %v1171 = vadd.f32 0.0, %v1170
    %v1172 = vpop.f32.mrf.mxu0
    %1173 = vdwg.mxu0
    %v1174 = vadd.f32 %v1099, %v1171
    %v1175 = vtanh.pop %v1174
    %s1176 = sadd.s32 8, 192
    %s1177 = scalar_lea.vmem [#allocation2], %s1176
    %v1178 = vld [vmem:[%s1177] sm:$0xff]
    %v1179 = vld [vmem:[%s839] sm:$0xff]
    %v1180 = vld [vmem:[%s839 + $0x8] sm:$0xff]
    %v1181 = vld [vmem:[%s839 + $0x10] sm:$0xff]
    %v1182 = vld [vmem:[%s839 + $0x18] sm:$0xff]
    %1183 = vmatprep.subr.mxu0 0.0
    %1184 = vmatpush1.msra.mxu0 0.0
    %1185 = vmatprep.subr.mxu0 0.0
    %1186 = vmatpush1.msra.mxu0 0.0
    %1187 = vmatprep.subr.mxu0 0.0
    %1188 = vmatpush1.msra.mxu0 0.0
    %1189 = vmatprep.subr.mxu0 0.0
    %1190 = vmatpush1.msra.mxu0 0.0
    %1191 = vmatprep.subr.mxu0 0.0
    %1192 = vmatpush1.msra.mxu0 0.0
    %1193 = vmatprep.subr.mxu0 0.0
    %1194 = vmatpush1.msra.mxu0 0.0
    %1195 = vmatprep.subr.mxu0 0.0
    %1196 = vmatpush1.msra.mxu0 0.0
    %1197 = vmatprep.subr.mxu0 0.0
    %1198 = vmatpush1.msra.mxu0 0.0
    %1199 = vmatprep.subr.mxu0 0.0
    %1200 = vmatpush1.msra.mxu0 0.0
    %1201 = vmatprep.subr.mxu0 0.0
    %1202 = vmatpush1.msra.mxu0 0.0
    %1203 = vmatprep.subr.mxu0 0.0
    %1204 = vmatpush1.msra.mxu0 0.0
    %1205 = vmatprep.subr.mxu0 0.0
    %1206 = vmatpush1.msra.mxu0 0.0
    %1207 = vmatprep.subr.mxu0 0.0
    %1208 = vmatpush1.msra.mxu0 %v1182
    %1209 = vmatprep.subr.mxu0 0.0
    %1210 = vmatpush1.msra.mxu0 %v1181
    %1211 = vmatprep.subr.mxu0 0.0
    %1212 = vmatpush1.msra.mxu0 %v1180
    %1213 = vmatprep.subr.mxu0 0.0
    %1214 = vmatpush1.msra.mxu0 %v1179
    %1215 = vmatprep.subr.mxu0 0.0
    %1216 = vmatpush2.msra.mxu0 0.0
    %1217 = vmatprep.subr.mxu0 0.0
    %1218 = vmatpush2.msra.mxu0 0.0
    %1219 = vmatprep.subr.mxu0 0.0
    %1220 = vmatpush2.msra.mxu0 0.0
    %1221 = vmatprep.subr.mxu0 0.0
    %1222 = vmatpush2.msra.mxu0 0.0
    %1223 = vmatprep.subr.mxu0 0.0
    %1224 = vmatpush2.msra.mxu0 0.0
    %1225 = vmatprep.subr.mxu0 0.0
    %1226 = vmatpush2.msra.mxu0 0.0
    %1227 = vmatprep.subr.mxu0 0.0
    %1228 = vmatpush2.msra.mxu0 0.0
    %1229 = vmatprep.subr.mxu0 0.0
    %1230 = vmatpush2.msra.mxu0 0.0
    %1231 = vmatprep.subr.mxu0 0.0
    %1232 = vmatpush2.msra.mxu0 0.0
    %1233 = vmatprep.subr.mxu0 0.0
    %1234 = vmatpush2.msra.mxu0 0.0
    %1235 = vmatprep.subr.mxu0 0.0
    %1236 = vmatpush2.msra.mxu0 0.0
    %1237 = vmatprep.subr.mxu0 0.0
    %1238 = vmatpush2.msra.mxu0 0.0
    %1239 = vmatprep.subr.mxu0 0.0
    %1240 = vmatpush2.msra.mxu0 0.0
    %1241 = vmatprep.subr.mxu0 0.0
    %1242 = vmatpush2.msra.mxu0 0.0
    %1243 = vmatprep.subr.mxu0 0.0
    %1244 = vmatpush2.msra.mxu0 0.0
    %1245 = vmatprep.subr.mxu0 0.0
    %1246 = vmatpush2.msra.mxu0 0.0
    %1247 = vmatprep.mubr.f32.mxu0 0.0
    %1248 = vmatmul.mubr.f32.gmra.mxu0 %v934
    %v1249 = vpop.f32.mrf.mxu0
    %v1250 = vadd.f32 0.0, %v1249
    %v1251 = vpop.f32.mrf.mxu0
    %1252 = vdwg.mxu0
    %v1253 = vadd.f32 %v1178, %v1250
    %v1254 = vxor.u32 %v1253, 2147483648
    %v1255 = vmul.f32 %v1254, 1.442695
    %v1256 = vpow.pop %v1255
    %v1257 = vadd.f32 %v1256, 1.0
    %v1258 = vrcp.pop %v1257
    %v1259 = vmul.f32 1.0, %v1258
    %v1260 = vmul.f32 %v1096, %v923
    %v1261 = vmul.f32 %v1012, %v1175
    %v1262 = vadd.f32 %v1260, %v1261
    %v1263 = vtanh.pop %v1262
    %v1264 = vmul.f32 %v1259, %v1263
    %s1265 = scalar_lea.vmem [#allocation3], 8
    %1266 = vst.msk [vmem:[%s1265] sm:$0xff] %vm205, %v1264
    %s1267 = scalar_lea.vmem [#allocation2], 16
    %v1268 = vld [vmem:[%s1267] sm:$0xff]
    %v1269 = vld [vmem:[%s2] sm:$0xff]
    %v1270 = vld [vmem:[%s2 + $0x8] sm:$0xff]
    %v1271 = vld [vmem:[%s2 + $0x10] sm:$0xff]
    %v1272 = vld [vmem:[%s2 + $0x18] sm:$0xff]
    %v1274 = vsel %vm205, %v1264, 0
    %1276 = vmatprep.subr.mxu0 0.0
    %1277 = vmatpush1.msra.mxu0 0.0
    %1278 = vmatprep.subr.mxu0 0.0
    %1279 = vmatpush1.msra.mxu0 0.0
    %1280 = vmatprep.subr.mxu0 0.0
    %1281 = vmatpush1.msra.mxu0 0.0
    %1282 = vmatprep.subr.mxu0 0.0
    %1283 = vmatpush1.msra.mxu0 0.0
    %1284 = vmatprep.subr.mxu0 0.0
    %1285 = vmatpush1.msra.mxu0 0.0
    %1286 = vmatprep.subr.mxu0 0.0
    %1287 = vmatpush1.msra.mxu0 0.0
    %1288 = vmatprep.subr.mxu0 0.0
    %1289 = vmatpush1.msra.mxu0 0.0
    %1290 = vmatprep.subr.mxu0 0.0
    %1291 = vmatpush1.msra.mxu0 0.0
    %1292 = vmatprep.subr.mxu0 0.0
    %1293 = vmatpush1.msra.mxu0 0.0
    %1294 = vmatprep.subr.mxu0 0.0
    %1295 = vmatpush1.msra.mxu0 0.0
    %1296 = vmatprep.subr.mxu0 0.0
    %1297 = vmatpush1.msra.mxu0 0.0
    %1298 = vmatprep.subr.mxu0 0.0
    %1299 = vmatpush1.msra.mxu0 0.0
    %1300 = vmatprep.subr.mxu0 0.0
    %1301 = vmatpush1.msra.mxu0 %v1272
    %1302 = vmatprep.subr.mxu0 0.0
    %1303 = vmatpush1.msra.mxu0 %v1271
    %1304 = vmatprep.subr.mxu0 0.0
    %1305 = vmatpush1.msra.mxu0 %v1270
    %1306 = vmatprep.subr.mxu0 0.0
    %1307 = vmatpush1.msra.mxu0 %v1269
    %1308 = vmatprep.subr.mxu0 0.0
    %1309 = vmatpush2.msra.mxu0 0.0
    %1310 = vmatprep.subr.mxu0 0.0
    %1311 = vmatpush2.msra.mxu0 0.0
    %1312 = vmatprep.subr.mxu0 0.0
    %1313 = vmatpush2.msra.mxu0 0.0
    %1314 = vmatprep.subr.mxu0 0.0
    %1315 = vmatpush2.msra.mxu0 0.0
    %1316 = vmatprep.subr.mxu0 0.0
    %1317 = vmatpush2.msra.mxu0 0.0
    %1318 = vmatprep.subr.mxu0 0.0
    %1319 = vmatpush2.msra.mxu0 0.0
    %1320 = vmatprep.subr.mxu0 0.0
    %1321 = vmatpush2.msra.mxu0 0.0
    %1322 = vmatprep.subr.mxu0 0.0
    %1323 = vmatpush2.msra.mxu0 0.0
    %1324 = vmatprep.subr.mxu0 0.0
    %1325 = vmatpush2.msra.mxu0 0.0
    %1326 = vmatprep.subr.mxu0 0.0
    %1327 = vmatpush2.msra.mxu0 0.0
    %1328 = vmatprep.subr.mxu0 0.0
    %1329 = vmatpush2.msra.mxu0 0.0
    %1330 = vmatprep.subr.mxu0 0.0
    %1331 = vmatpush2.msra.mxu0 0.0
    %1332 = vmatprep.subr.mxu0 0.0
    %1333 = vmatpush2.msra.mxu0 0.0
    %1334 = vmatprep.subr.mxu0 0.0
    %1335 = vmatpush2.msra.mxu0 0.0
    %1336 = vmatprep.subr.mxu0 0.0
    %1337 = vmatpush2.msra.mxu0 0.0
    %1338 = vmatprep.subr.mxu0 0.0
    %1339 = vmatpush2.msra.mxu0 0.0
    %1340 = vmatprep.mubr.f32.mxu0 0.0
    %1341 = vmatmul.mubr.f32.gmra.mxu0 %v1274
    %v1342 = vpop.f32.mrf.mxu0
    %v1343 = vadd.f32 0.0, %v1342
    %v1344 = vpop.f32.mrf.mxu0
    %1345 = vdwg.mxu0
    %v1346 = vadd.f32 %v1268, %v1343
    %v1347 = vxor.u32 %v1346, 2147483648
    %v1348 = vmul.f32 %v1347, 1.442695
    %v1349 = vpow.pop %v1348
    %v1350 = vadd.f32 %v1349, 1.0
    %v1351 = vrcp.pop %v1350
    %v1352 = vmul.f32 1.0, %v1351
    %s1353 = sadd.s32 16, 64
    %s1354 = scalar_lea.vmem [#allocation2], %s1353
    %v1355 = vld [vmem:[%s1354] sm:$0xff]
    %v1356 = vld [vmem:[%s674] sm:$0xff]
    %v1357 = vld [vmem:[%s674 + $0x8] sm:$0xff]
    %v1358 = vld [vmem:[%s674 + $0x10] sm:$0xff]
    %v1359 = vld [vmem:[%s674 + $0x18] sm:$0xff]
    %1360 = vmatprep.subr.mxu0 0.0
    %1361 = vmatpush1.msra.mxu0 0.0
    %1362 = vmatprep.subr.mxu0 0.0
    %1363 = vmatpush1.msra.mxu0 0.0
    %1364 = vmatprep.subr.mxu0 0.0
    %1365 = vmatpush1.msra.mxu0 0.0
    %1366 = vmatprep.subr.mxu0 0.0
    %1367 = vmatpush1.msra.mxu0 0.0
    %1368 = vmatprep.subr.mxu0 0.0
    %1369 = vmatpush1.msra.mxu0 0.0
    %1370 = vmatprep.subr.mxu0 0.0
    %1371 = vmatpush1.msra.mxu0 0.0
    %1372 = vmatprep.subr.mxu0 0.0
    %1373 = vmatpush1.msra.mxu0 0.0
    %1374 = vmatprep.subr.mxu0 0.0
    %1375 = vmatpush1.msra.mxu0 0.0
    %1376 = vmatprep.subr.mxu0 0.0
    %1377 = vmatpush1.msra.mxu0 0.0
    %1378 = vmatprep.subr.mxu0 0.0
    %1379 = vmatpush1.msra.mxu0 0.0
    %1380 = vmatprep.subr.mxu0 0.0
    %1381 = vmatpush1.msra.mxu0 0.0
    %1382 = vmatprep.subr.mxu0 0.0
    %1383 = vmatpush1.msra.mxu0 0.0
    %1384 = vmatprep.subr.mxu0 0.0
    %1385 = vmatpush1.msra.mxu0 %v1359
    %1386 = vmatprep.subr.mxu0 0.0
    %1387 = vmatpush1.msra.mxu0 %v1358
    %1388 = vmatprep.subr.mxu0 0.0
    %1389 = vmatpush1.msra.mxu0 %v1357
    %1390 = vmatprep.subr.mxu0 0.0
    %1391 = vmatpush1.msra.mxu0 %v1356
    %1392 = vmatprep.subr.mxu0 0.0
    %1393 = vmatpush2.msra.mxu0 0.0
    %1394 = vmatprep.subr.mxu0 0.0
    %1395 = vmatpush2.msra.mxu0 0.0
    %1396 = vmatprep.subr.mxu0 0.0
    %1397 = vmatpush2.msra.mxu0 0.0
    %1398 = vmatprep.subr.mxu0 0.0
    %1399 = vmatpush2.msra.mxu0 0.0
    %1400 = vmatprep.subr.mxu0 0.0
    %1401 = vmatpush2.msra.mxu0 0.0
    %1402 = vmatprep.subr.mxu0 0.0
    %1403 = vmatpush2.msra.mxu0 0.0
    %1404 = vmatprep.subr.mxu0 0.0
    %1405 = vmatpush2.msra.mxu0 0.0
    %1406 = vmatprep.subr.mxu0 0.0
    %1407 = vmatpush2.msra.mxu0 0.0
    %1408 = vmatprep.subr.mxu0 0.0
    %1409 = vmatpush2.msra.mxu0 0.0
    %1410 = vmatprep.subr.mxu0 0.0
    %1411 = vmatpush2.msra.mxu0 0.0
    %1412 = vmatprep.subr.mxu0 0.0
    %1413 = vmatpush2.msra.mxu0 0.0
    %1414 = vmatprep.subr.mxu0 0.0
    %1415 = vmatpush2.msra.mxu0 0.0
    %1416 = vmatprep.subr.mxu0 0.0
    %1417 = vmatpush2.msra.mxu0 0.0
    %1418 = vmatprep.subr.mxu0 0.0
    %1419 = vmatpush2.msra.mxu0 0.0
    %1420 = vmatprep.subr.mxu0 0.0
    %1421 = vmatpush2.msra.mxu0 0.0
    %1422 = vmatprep.subr.mxu0 0.0
    %1423 = vmatpush2.msra.mxu0 0.0
    %1424 = vmatprep.mubr.f32.mxu0 0.0
    %1425 = vmatmul.mubr.f32.gmra.mxu0 %v1274
    %v1426 = vpop.f32.mrf.mxu0
    %v1427 = vadd.f32 0.0, %v1426
    %v1428 = vpop.f32.mrf.mxu0
    %1429 = vdwg.mxu0
    %v1430 = vadd.f32 %v1355, %v1427
    %v1431 = vxor.u32 %v1430, 2147483648
    %v1432 = vmul.f32 %v1431, 1.442695
    %v1433 = vpow.pop %v1432
    %v1434 = vadd.f32 %v1433, 1.0
    %v1435 = vrcp.pop %v1434
    %v1436 = vmul.f32 1.0, %v1435
    %s1437 = sadd.s32 16, 128
    %s1438 = scalar_lea.vmem [#allocation2], %s1437
    %v1439 = vld [vmem:[%s1438] sm:$0xff]
    %v1440 = vld [vmem:[%s759] sm:$0xff]
    %v1441 = vld [vmem:[%s759 + $0x8] sm:$0xff]
    %v1442 = vld [vmem:[%s759 + $0x10] sm:$0xff]
    %v1443 = vld [vmem:[%s759 + $0x18] sm:$0xff]
    %1444 = vmatprep.subr.mxu0 0.0
    %1445 = vmatpush1.msra.mxu0 0.0
    %1446 = vmatprep.subr.mxu0 0.0
    %1447 = vmatpush1.msra.mxu0 0.0
    %1448 = vmatprep.subr.mxu0 0.0
    %1449 = vmatpush1.msra.mxu0 0.0
    %1450 = vmatprep.subr.mxu0 0.0
    %1451 = vmatpush1.msra.mxu0 0.0
    %1452 = vmatprep.subr.mxu0 0.0
    %1453 = vmatpush1.msra.mxu0 0.0
    %1454 = vmatprep.subr.mxu0 0.0
    %1455 = vmatpush1.msra.mxu0 0.0
    %1456 = vmatprep.subr.mxu0 0.0
    %1457 = vmatpush1.msra.mxu0 0.0
    %1458 = vmatprep.subr.mxu0 0.0
    %1459 = vmatpush1.msra.mxu0 0.0
    %1460 = vmatprep.subr.mxu0 0.0
    %1461 = vmatpush1.msra.mxu0 0.0
    %1462 = vmatprep.subr.mxu0 0.0
    %1463 = vmatpush1.msra.mxu0 0.0
    %1464 = vmatprep.subr.mxu0 0.0
    %1465 = vmatpush1.msra.mxu0 0.0
    %1466 = vmatprep.subr.mxu0 0.0
    %1467 = vmatpush1.msra.mxu0 0.0
    %1468 = vmatprep.subr.mxu0 0.0
    %1469 = vmatpush1.msra.mxu0 %v1443
    %1470 = vmatprep.subr.mxu0 0.0
    %1471 = vmatpush1.msra.mxu0 %v1442
    %1472 = vmatprep.subr.mxu0 0.0
    %1473 = vmatpush1.msra.mxu0 %v1441
    %1474 = vmatprep.subr.mxu0 0.0
    %1475 = vmatpush1.msra.mxu0 %v1440
    %1476 = vmatprep.subr.mxu0 0.0
    %1477 = vmatpush2.msra.mxu0 0.0
    %1478 = vmatprep.subr.mxu0 0.0
    %1479 = vmatpush2.msra.mxu0 0.0
    %1480 = vmatprep.subr.mxu0 0.0
    %1481 = vmatpush2.msra.mxu0 0.0
    %1482 = vmatprep.subr.mxu0 0.0
    %1483 = vmatpush2.msra.mxu0 0.0
    %1484 = vmatprep.subr.mxu0 0.0
    %1485 = vmatpush2.msra.mxu0 0.0
    %1486 = vmatprep.subr.mxu0 0.0
    %1487 = vmatpush2.msra.mxu0 0.0
    %1488 = vmatprep.subr.mxu0 0.0
    %1489 = vmatpush2.msra.mxu0 0.0
    %1490 = vmatprep.subr.mxu0 0.0
    %1491 = vmatpush2.msra.mxu0 0.0
    %1492 = vmatprep.subr.mxu0 0.0
    %1493 = vmatpush2.msra.mxu0 0.0
    %1494 = vmatprep.subr.mxu0 0.0
    %1495 = vmatpush2.msra.mxu0 0.0
    %1496 = vmatprep.subr.mxu0 0.0
    %1497 = vmatpush2.msra.mxu0 0.0
    %1498 = vmatprep.subr.mxu0 0.0
    %1499 = vmatpush2.msra.mxu0 0.0
    %1500 = vmatprep.subr.mxu0 0.0
    %1501 = vmatpush2.msra.mxu0 0.0
    %1502 = vmatprep.subr.mxu0 0.0
    %1503 = vmatpush2.msra.mxu0 0.0
    %1504 = vmatprep.subr.mxu0 0.0
    %1505 = vmatpush2.msra.mxu0 0.0
    %1506 = vmatprep.subr.mxu0 0.0
    %1507 = vmatpush2.msra.mxu0 0.0
    %1508 = vmatprep.mubr.f32.mxu0 0.0
    %1509 = vmatmul.mubr.f32.gmra.mxu0 %v1274
    %v1510 = vpop.f32.mrf.mxu0
    %v1511 = vadd.f32 0.0, %v1510
    %v1512 = vpop.f32.mrf.mxu0
    %1513 = vdwg.mxu0
    %v1514 = vadd.f32 %v1439, %v1511
    %v1515 = vtanh.pop %v1514
    %s1516 = sadd.s32 16, 192
    %s1517 = scalar_lea.vmem [#allocation2], %s1516
    %v1518 = vld [vmem:[%s1517] sm:$0xff]
    %v1519 = vld [vmem:[%s839] sm:$0xff]
    %v1520 = vld [vmem:[%s839 + $0x8] sm:$0xff]
    %v1521 = vld [vmem:[%s839 + $0x10] sm:$0xff]
    %v1522 = vld [vmem:[%s839 + $0x18] sm:$0xff]
    %1523 = vmatprep.subr.mxu0 0.0
    %1524 = vmatpush1.msra.mxu0 0.0
    %1525 = vmatprep.subr.mxu0 0.0
    %1526 = vmatpush1.msra.mxu0 0.0
    %1527 = vmatprep.subr.mxu0 0.0
    %1528 = vmatpush1.msra.mxu0 0.0
    %1529 = vmatprep.subr.mxu0 0.0
    %1530 = vmatpush1.msra.mxu0 0.0
    %1531 = vmatprep.subr.mxu0 0.0
    %1532 = vmatpush1.msra.mxu0 0.0
    %1533 = vmatprep.subr.mxu0 0.0
    %1534 = vmatpush1.msra.mxu0 0.0
    %1535 = vmatprep.subr.mxu0 0.0
    %1536 = vmatpush1.msra.mxu0 0.0
    %1537 = vmatprep.subr.mxu0 0.0
    %1538 = vmatpush1.msra.mxu0 0.0
    %1539 = vmatprep.subr.mxu0 0.0
    %1540 = vmatpush1.msra.mxu0 0.0
    %1541 = vmatprep.subr.mxu0 0.0
    %1542 = vmatpush1.msra.mxu0 0.0
    %1543 = vmatprep.subr.mxu0 0.0
    %1544 = vmatpush1.msra.mxu0 0.0
    %1545 = vmatprep.subr.mxu0 0.0
    %1546 = vmatpush1.msra.mxu0 0.0
    %1547 = vmatprep.subr.mxu0 0.0
    %1548 = vmatpush1.msra.mxu0 %v1522
    %1549 = vmatprep.subr.mxu0 0.0
    %1550 = vmatpush1.msra.mxu0 %v1521
    %1551 = vmatprep.subr.mxu0 0.0
    %1552 = vmatpush1.msra.mxu0 %v1520
    %1553 = vmatprep.subr.mxu0 0.0
    %1554 = vmatpush1.msra.mxu0 %v1519
    %1555 = vmatprep.subr.mxu0 0.0
    %1556 = vmatpush2.msra.mxu0 0.0
    %1557 = vmatprep.subr.mxu0 0.0
    %1558 = vmatpush2.msra.mxu0 0.0
    %1559 = vmatprep.subr.mxu0 0.0
    %1560 = vmatpush2.msra.mxu0 0.0
    %1561 = vmatprep.subr.mxu0 0.0
    %1562 = vmatpush2.msra.mxu0 0.0
    %1563 = vmatprep.subr.mxu0 0.0
    %1564 = vmatpush2.msra.mxu0 0.0
    %1565 = vmatprep.subr.mxu0 0.0
    %1566 = vmatpush2.msra.mxu0 0.0
    %1567 = vmatprep.subr.mxu0 0.0
    %1568 = vmatpush2.msra.mxu0 0.0
    %1569 = vmatprep.subr.mxu0 0.0
    %1570 = vmatpush2.msra.mxu0 0.0
    %1571 = vmatprep.subr.mxu0 0.0
    %1572 = vmatpush2.msra.mxu0 0.0
    %1573 = vmatprep.subr.mxu0 0.0
    %1574 = vmatpush2.msra.mxu0 0.0
    %1575 = vmatprep.subr.mxu0 0.0
    %1576 = vmatpush2.msra.mxu0 0.0
    %1577 = vmatprep.subr.mxu0 0.0
    %1578 = vmatpush2.msra.mxu0 0.0
    %1579 = vmatprep.subr.mxu0 0.0
    %1580 = vmatpush2.msra.mxu0 0.0
    %1581 = vmatprep.subr.mxu0 0.0
    %1582 = vmatpush2.msra.mxu0 0.0
    %1583 = vmatprep.subr.mxu0 0.0
    %1584 = vmatpush2.msra.mxu0 0.0
    %1585 = vmatprep.subr.mxu0 0.0
    %1586 = vmatpush2.msra.mxu0 0.0
    %1587 = vmatprep.mubr.f32.mxu0 0.0
    %1588 = vmatmul.mubr.f32.gmra.mxu0 %v1274
    %v1589 = vpop.f32.mrf.mxu0
    %v1590 = vadd.f32 0.0, %v1589
    %v1591 = vpop.f32.mrf.mxu0
    %1592 = vdwg.mxu0
    %v1593 = vadd.f32 %v1518, %v1590
    %v1594 = vxor.u32 %v1593, 2147483648
    %v1595 = vmul.f32 %v1594, 1.442695
    %v1596 = vpow.pop %v1595
    %v1597 = vadd.f32 %v1596, 1.0
    %v1598 = vrcp.pop %v1597
    %v1599 = vmul.f32 1.0, %v1598
    %v1600 = vmul.f32 %v1436, %v1262
    %v1601 = vmul.f32 %v1352, %v1515
    %v1602 = vadd.f32 %v1600, %v1601
    %v1603 = vtanh.pop %v1602
    %v1604 = vmul.f32 %v1599, %v1603
    %s1605 = scalar_lea.vmem [#allocation3], 16
    %1606 = vst.msk [vmem:[%s1605] sm:$0xff] %vm205, %v1604
    %s1607 = scalar_lea.vmem [#allocation2], 24
    %v1608 = vld [vmem:[%s1607] sm:$0xff]
    %v1609 = vld [vmem:[%s2] sm:$0xff]
    %v1610 = vld [vmem:[%s2 + $0x8] sm:$0xff]
    %v1611 = vld [vmem:[%s2 + $0x10] sm:$0xff]
    %v1612 = vld [vmem:[%s2 + $0x18] sm:$0xff]
    %v1614 = vsel %vm205, %v1604, 0
    %1616 = vmatprep.subr.mxu0 0.0
    %1617 = vmatpush1.msra.mxu0 0.0
    %1618 = vmatprep.subr.mxu0 0.0
    %1619 = vmatpush1.msra.mxu0 0.0
    %1620 = vmatprep.subr.mxu0 0.0
    %1621 = vmatpush1.msra.mxu0 0.0
    %1622 = vmatprep.subr.mxu0 0.0
    %1623 = vmatpush1.msra.mxu0 0.0
    %1624 = vmatprep.subr.mxu0 0.0
    %1625 = vmatpush1.msra.mxu0 0.0
    %1626 = vmatprep.subr.mxu0 0.0
    %1627 = vmatpush1.msra.mxu0 0.0
    %1628 = vmatprep.subr.mxu0 0.0
    %1629 = vmatpush1.msra.mxu0 0.0
    %1630 = vmatprep.subr.mxu0 0.0
    %1631 = vmatpush1.msra.mxu0 0.0
    %1632 = vmatprep.subr.mxu0 0.0
    %1633 = vmatpush1.msra.mxu0 0.0
    %1634 = vmatprep.subr.mxu0 0.0
    %1635 = vmatpush1.msra.mxu0 0.0
    %1636 = vmatprep.subr.mxu0 0.0
    %1637 = vmatpush1.msra.mxu0 0.0
    %1638 = vmatprep.subr.mxu0 0.0
    %1639 = vmatpush1.msra.mxu0 0.0
    %1640 = vmatprep.subr.mxu0 0.0
    %1641 = vmatpush1.msra.mxu0 %v1612
    %1642 = vmatprep.subr.mxu0 0.0
    %1643 = vmatpush1.msra.mxu0 %v1611
    %1644 = vmatprep.subr.mxu0 0.0
    %1645 = vmatpush1.msra.mxu0 %v1610
    %1646 = vmatprep.subr.mxu0 0.0
    %1647 = vmatpush1.msra.mxu0 %v1609
    %1648 = vmatprep.subr.mxu0 0.0
    %1649 = vmatpush2.msra.mxu0 0.0
    %1650 = vmatprep.subr.mxu0 0.0
    %1651 = vmatpush2.msra.mxu0 0.0
    %1652 = vmatprep.subr.mxu0 0.0
    %1653 = vmatpush2.msra.mxu0 0.0
    %1654 = vmatprep.subr.mxu0 0.0
    %1655 = vmatpush2.msra.mxu0 0.0
    %1656 = vmatprep.subr.mxu0 0.0
    %1657 = vmatpush2.msra.mxu0 0.0
    %1658 = vmatprep.subr.mxu0 0.0
    %1659 = vmatpush2.msra.mxu0 0.0
    %1660 = vmatprep.subr.mxu0 0.0
    %1661 = vmatpush2.msra.mxu0 0.0
    %1662 = vmatprep.subr.mxu0 0.0
    %1663 = vmatpush2.msra.mxu0 0.0
    %1664 = vmatprep.subr.mxu0 0.0
    %1665 = vmatpush2.msra.mxu0 0.0
    %1666 = vmatprep.subr.mxu0 0.0
    %1667 = vmatpush2.msra.mxu0 0.0
    %1668 = vmatprep.subr.mxu0 0.0
    %1669 = vmatpush2.msra.mxu0 0.0
    %1670 = vmatprep.subr.mxu0 0.0
    %1671 = vmatpush2.msra.mxu0 0.0
    %1672 = vmatprep.subr.mxu0 0.0
    %1673 = vmatpush2.msra.mxu0 0.0
    %1674 = vmatprep.subr.mxu0 0.0
    %1675 = vmatpush2.msra.mxu0 0.0
    %1676 = vmatprep.subr.mxu0 0.0
    %1677 = vmatpush2.msra.mxu0 0.0
    %1678 = vmatprep.subr.mxu0 0.0
    %1679 = vmatpush2.msra.mxu0 0.0
    %1680 = vmatprep.mubr.f32.mxu0 0.0
    %1681 = vmatmul.mubr.f32.gmra.mxu0 %v1614
    %v1682 = vpop.f32.mrf.mxu0
    %v1683 = vadd.f32 0.0, %v1682
    %v1684 = vpop.f32.mrf.mxu0
    %1685 = vdwg.mxu0
    %v1686 = vadd.f32 %v1608, %v1683
    %v1687 = vxor.u32 %v1686, 2147483648
    %v1688 = vmul.f32 %v1687, 1.442695
    %v1689 = vpow.pop %v1688
    %v1690 = vadd.f32 %v1689, 1.0
    %v1691 = vrcp.pop %v1690
    %v1692 = vmul.f32 1.0, %v1691
    %s1693 = sadd.s32 24, 64
    %s1694 = scalar_lea.vmem [#allocation2], %s1693
    %v1695 = vld [vmem:[%s1694] sm:$0xff]
    %v1696 = vld [vmem:[%s674] sm:$0xff]
    %v1697 = vld [vmem:[%s674 + $0x8] sm:$0xff]
    %v1698 = vld [vmem:[%s674 + $0x10] sm:$0xff]
    %v1699 = vld [vmem:[%s674 + $0x18] sm:$0xff]
    %1700 = vmatprep.subr.mxu0 0.0
    %1701 = vmatpush1.msra.mxu0 0.0
    %1702 = vmatprep.subr.mxu0 0.0
    %1703 = vmatpush1.msra.mxu0 0.0
    %1704 = vmatprep.subr.mxu0 0.0
    %1705 = vmatpush1.msra.mxu0 0.0
    %1706 = vmatprep.subr.mxu0 0.0
    %1707 = vmatpush1.msra.mxu0 0.0
    %1708 = vmatprep.subr.mxu0 0.0
    %1709 = vmatpush1.msra.mxu0 0.0
    %1710 = vmatprep.subr.mxu0 0.0
    %1711 = vmatpush1.msra.mxu0 0.0
    %1712 = vmatprep.subr.mxu0 0.0
    %1713 = vmatpush1.msra.mxu0 0.0
    %1714 = vmatprep.subr.mxu0 0.0
    %1715 = vmatpush1.msra.mxu0 0.0
    %1716 = vmatprep.subr.mxu0 0.0
    %1717 = vmatpush1.msra.mxu0 0.0
    %1718 = vmatprep.subr.mxu0 0.0
    %1719 = vmatpush1.msra.mxu0 0.0
    %1720 = vmatprep.subr.mxu0 0.0
    %1721 = vmatpush1.msra.mxu0 0.0
    %1722 = vmatprep.subr.mxu0 0.0
    %1723 = vmatpush1.msra.mxu0 0.0
    %1724 = vmatprep.subr.mxu0 0.0
    %1725 = vmatpush1.msra.mxu0 %v1699
    %1726 = vmatprep.subr.mxu0 0.0
    %1727 = vmatpush1.msra.mxu0 %v1698
    %1728 = vmatprep.subr.mxu0 0.0
    %1729 = vmatpush1.msra.mxu0 %v1697
    %1730 = vmatprep.subr.mxu0 0.0
    %1731 = vmatpush1.msra.mxu0 %v1696
    %1732 = vmatprep.subr.mxu0 0.0
    %1733 = vmatpush2.msra.mxu0 0.0
    %1734 = vmatprep.subr.mxu0 0.0
    %1735 = vmatpush2.msra.mxu0 0.0
    %1736 = vmatprep.subr.mxu0 0.0
    %1737 = vmatpush2.msra.mxu0 0.0
    %1738 = vmatprep.subr.mxu0 0.0
    %1739 = vmatpush2.msra.mxu0 0.0
    %1740 = vmatprep.subr.mxu0 0.0
    %1741 = vmatpush2.msra.mxu0 0.0
    %1742 = vmatprep.subr.mxu0 0.0
    %1743 = vmatpush2.msra.mxu0 0.0
    %1744 = vmatprep.subr.mxu0 0.0
    %1745 = vmatpush2.msra.mxu0 0.0
    %1746 = vmatprep.subr.mxu0 0.0
    %1747 = vmatpush2.msra.mxu0 0.0
    %1748 = vmatprep.subr.mxu0 0.0
    %1749 = vmatpush2.msra.mxu0 0.0
    %1750 = vmatprep.subr.mxu0 0.0
    %1751 = vmatpush2.msra.mxu0 0.0
    %1752 = vmatprep.subr.mxu0 0.0
    %1753 = vmatpush2.msra.mxu0 0.0
    %1754 = vmatprep.subr.mxu0 0.0
    %1755 = vmatpush2.msra.mxu0 0.0
    %1756 = vmatprep.subr.mxu0 0.0
    %1757 = vmatpush2.msra.mxu0 0.0
    %1758 = vmatprep.subr.mxu0 0.0
    %1759 = vmatpush2.msra.mxu0 0.0
    %1760 = vmatprep.subr.mxu0 0.0
    %1761 = vmatpush2.msra.mxu0 0.0
    %1762 = vmatprep.subr.mxu0 0.0
    %1763 = vmatpush2.msra.mxu0 0.0
    %1764 = vmatprep.mubr.f32.mxu0 0.0
    %1765 = vmatmul.mubr.f32.gmra.mxu0 %v1614
    %v1766 = vpop.f32.mrf.mxu0
    %v1767 = vadd.f32 0.0, %v1766
    %v1768 = vpop.f32.mrf.mxu0
    %1769 = vdwg.mxu0
    %v1770 = vadd.f32 %v1695, %v1767
    %v1771 = vxor.u32 %v1770, 2147483648
    %v1772 = vmul.f32 %v1771, 1.442695
    %v1773 = vpow.pop %v1772
    %v1774 = vadd.f32 %v1773, 1.0
    %v1775 = vrcp.pop %v1774
    %v1776 = vmul.f32 1.0, %v1775
    %s1777 = sadd.s32 24, 128
    %s1778 = scalar_lea.vmem [#allocation2], %s1777
    %v1779 = vld [vmem:[%s1778] sm:$0xff]
    %v1780 = vld [vmem:[%s759] sm:$0xff]
    %v1781 = vld [vmem:[%s759 + $0x8] sm:$0xff]
    %v1782 = vld [vmem:[%s759 + $0x10] sm:$0xff]
    %v1783 = vld [vmem:[%s759 + $0x18] sm:$0xff]
    %1784 = vmatprep.subr.mxu0 0.0
    %1785 = vmatpush1.msra.mxu0 0.0
    %1786 = vmatprep.subr.mxu0 0.0
    %1787 = vmatpush1.msra.mxu0 0.0
    %1788 = vmatprep.subr.mxu0 0.0
    %1789 = vmatpush1.msra.mxu0 0.0
    %1790 = vmatprep.subr.mxu0 0.0
    %1791 = vmatpush1.msra.mxu0 0.0
    %1792 = vmatprep.subr.mxu0 0.0
    %1793 = vmatpush1.msra.mxu0 0.0
    %1794 = vmatprep.subr.mxu0 0.0
    %1795 = vmatpush1.msra.mxu0 0.0
    %1796 = vmatprep.subr.mxu0 0.0
    %1797 = vmatpush1.msra.mxu0 0.0
    %1798 = vmatprep.subr.mxu0 0.0
    %1799 = vmatpush1.msra.mxu0 0.0
    %1800 = vmatprep.subr.mxu0 0.0
    %1801 = vmatpush1.msra.mxu0 0.0
    %1802 = vmatprep.subr.mxu0 0.0
    %1803 = vmatpush1.msra.mxu0 0.0
    %1804 = vmatprep.subr.mxu0 0.0
    %1805 = vmatpush1.msra.mxu0 0.0
    %1806 = vmatprep.subr.mxu0 0.0
    %1807 = vmatpush1.msra.mxu0 0.0
    %1808 = vmatprep.subr.mxu0 0.0
    %1809 = vmatpush1.msra.mxu0 %v1783
    %1810 = vmatprep.subr.mxu0 0.0
    %1811 = vmatpush1.msra.mxu0 %v1782
    %1812 = vmatprep.subr.mxu0 0.0
    %1813 = vmatpush1.msra.mxu0 %v1781
    %1814 = vmatprep.subr.mxu0 0.0
    %1815 = vmatpush1.msra.mxu0 %v1780
    %1816 = vmatprep.subr.mxu0 0.0
    %1817 = vmatpush2.msra.mxu0 0.0
    %1818 = vmatprep.subr.mxu0 0.0
    %1819 = vmatpush2.msra.mxu0 0.0
    %1820 = vmatprep.subr.mxu0 0.0
    %1821 = vmatpush2.msra.mxu0 0.0
    %1822 = vmatprep.subr.mxu0 0.0
    %1823 = vmatpush2.msra.mxu0 0.0
    %1824 = vmatprep.subr.mxu0 0.0
    %1825 = vmatpush2.msra.mxu0 0.0
    %1826 = vmatprep.subr.mxu0 0.0
    %1827 = vmatpush2.msra.mxu0 0.0
    %1828 = vmatprep.subr.mxu0 0.0
    %1829 = vmatpush2.msra.mxu0 0.0
    %1830 = vmatprep.subr.mxu0 0.0
    %1831 = vmatpush2.msra.mxu0 0.0
    %1832 = vmatprep.subr.mxu0 0.0
    %1833 = vmatpush2.msra.mxu0 0.0
    %1834 = vmatprep.subr.mxu0 0.0
    %1835 = vmatpush2.msra.mxu0 0.0
    %1836 = vmatprep.subr.mxu0 0.0
    %1837 = vmatpush2.msra.mxu0 0.0
    %1838 = vmatprep.subr.mxu0 0.0
    %1839 = vmatpush2.msra.mxu0 0.0
    %1840 = vmatprep.subr.mxu0 0.0
    %1841 = vmatpush2.msra.mxu0 0.0
    %1842 = vmatprep.subr.mxu0 0.0
    %1843 = vmatpush2.msra.mxu0 0.0
    %1844 = vmatprep.subr.mxu0 0.0
    %1845 = vmatpush2.msra.mxu0 0.0
    %1846 = vmatprep.subr.mxu0 0.0
    %1847 = vmatpush2.msra.mxu0 0.0
    %1848 = vmatprep.mubr.f32.mxu0 0.0
    %1849 = vmatmul.mubr.f32.gmra.mxu0 %v1614
    %v1850 = vpop.f32.mrf.mxu0
    %v1851 = vadd.f32 0.0, %v1850
    %v1852 = vpop.f32.mrf.mxu0
    %1853 = vdwg.mxu0
    %v1854 = vadd.f32 %v1779, %v1851
    %v1855 = vtanh.pop %v1854
    %s1856 = sadd.s32 24, 192
    %s1857 = scalar_lea.vmem [#allocation2], %s1856
    %v1858 = vld [vmem:[%s1857] sm:$0xff]
    %v1859 = vld [vmem:[%s839] sm:$0xff]
    %v1860 = vld [vmem:[%s839 + $0x8] sm:$0xff]
    %v1861 = vld [vmem:[%s839 + $0x10] sm:$0xff]
    %v1862 = vld [vmem:[%s839 + $0x18] sm:$0xff]
    %1863 = vmatprep.subr.mxu0 0.0
    %1864 = vmatpush1.msra.mxu0 0.0
    %1865 = vmatprep.subr.mxu0 0.0
    %1866 = vmatpush1.msra.mxu0 0.0
    %1867 = vmatprep.subr.mxu0 0.0
    %1868 = vmatpush1.msra.mxu0 0.0
    %1869 = vmatprep.subr.mxu0 0.0
    %1870 = vmatpush1.msra.mxu0 0.0
    %1871 = vmatprep.subr.mxu0 0.0
    %1872 = vmatpush1.msra.mxu0 0.0
    %1873 = vmatprep.subr.mxu0 0.0
    %1874 = vmatpush1.msra.mxu0 0.0
    %1875 = vmatprep.subr.mxu0 0.0
    %1876 = vmatpush1.msra.mxu0 0.0
    %1877 = vmatprep.subr.mxu0 0.0
    %1878 = vmatpush1.msra.mxu0 0.0
    %1879 = vmatprep.subr.mxu0 0.0
    %1880 = vmatpush1.msra.mxu0 0.0
    %1881 = vmatprep.subr.mxu0 0.0
    %1882 = vmatpush1.msra.mxu0 0.0
    %1883 = vmatprep.subr.mxu0 0.0
    %1884 = vmatpush1.msra.mxu0 0.0
    %1885 = vmatprep.subr.mxu0 0.0
    %1886 = vmatpush1.msra.mxu0 0.0
    %1887 = vmatprep.subr.mxu0 0.0
    %1888 = vmatpush1.msra.mxu0 %v1862
    %1889 = vmatprep.subr.mxu0 0.0
    %1890 = vmatpush1.msra.mxu0 %v1861
    %1891 = vmatprep.subr.mxu0 0.0
    %1892 = vmatpush1.msra.mxu0 %v1860
    %1893 = vmatprep.subr.mxu0 0.0
    %1894 = vmatpush1.msra.mxu0 %v1859
    %1895 = vmatprep.subr.mxu0 0.0
    %1896 = vmatpush2.msra.mxu0 0.0
    %1897 = vmatprep.subr.mxu0 0.0
    %1898 = vmatpush2.msra.mxu0 0.0
    %1899 = vmatprep.subr.mxu0 0.0
    %1900 = vmatpush2.msra.mxu0 0.0
    %1901 = vmatprep.subr.mxu0 0.0
    %1902 = vmatpush2.msra.mxu0 0.0
    %1903 = vmatprep.subr.mxu0 0.0
    %1904 = vmatpush2.msra.mxu0 0.0
    %1905 = vmatprep.subr.mxu0 0.0
    %1906 = vmatpush2.msra.mxu0 0.0
    %1907 = vmatprep.subr.mxu0 0.0
    %1908 = vmatpush2.msra.mxu0 0.0
    %1909 = vmatprep.subr.mxu0 0.0
    %1910 = vmatpush2.msra.mxu0 0.0
    %1911 = vmatprep.subr.mxu0 0.0
    %1912 = vmatpush2.msra.mxu0 0.0
    %1913 = vmatprep.subr.mxu0 0.0
    %1914 = vmatpush2.msra.mxu0 0.0
    %1915 = vmatprep.subr.mxu0 0.0
    %1916 = vmatpush2.msra.mxu0 0.0
    %1917 = vmatprep.subr.mxu0 0.0
    %1918 = vmatpush2.msra.mxu0 0.0
    %1919 = vmatprep.subr.mxu0 0.0
    %1920 = vmatpush2.msra.mxu0 0.0
    %1921 = vmatprep.subr.mxu0 0.0
    %1922 = vmatpush2.msra.mxu0 0.0
    %1923 = vmatprep.subr.mxu0 0.0
    %1924 = vmatpush2.msra.mxu0 0.0
    %1925 = vmatprep.subr.mxu0 0.0
    %1926 = vmatpush2.msra.mxu0 0.0
    %1927 = vmatprep.mubr.f32.mxu0 0.0
    %1928 = vmatmul.mubr.f32.gmra.mxu0 %v1614
    %v1929 = vpop.f32.mrf.mxu0
    %v1930 = vadd.f32 0.0, %v1929
    %v1931 = vpop.f32.mrf.mxu0
    %1932 = vdwg.mxu0
    %v1933 = vadd.f32 %v1858, %v1930
    %v1934 = vxor.u32 %v1933, 2147483648
    %v1935 = vmul.f32 %v1934, 1.442695
    %v1936 = vpow.pop %v1935
    %v1937 = vadd.f32 %v1936, 1.0
    %v1938 = vrcp.pop %v1937
    %v1939 = vmul.f32 1.0, %v1938
    %v1940 = vmul.f32 %v1776, %v1602
    %v1941 = vmul.f32 %v1692, %v1855
    %v1942 = vadd.f32 %v1940, %v1941
    %v1943 = vtanh.pop %v1942
    %v1944 = vmul.f32 %v1939, %v1943
    %s1945 = scalar_lea.vmem [#allocation3], 24
    %1946 = vst.msk [vmem:[%s1945] sm:$0xff] %vm205, %v1944
    %s1947 = scalar_lea.vmem [#allocation2], 32
    %v1948 = vld [vmem:[%s1947] sm:$0xff]
    %v1949 = vld [vmem:[%s2] sm:$0xff]
    %v1950 = vld [vmem:[%s2 + $0x8] sm:$0xff]
    %v1951 = vld [vmem:[%s2 + $0x10] sm:$0xff]
    %v1952 = vld [vmem:[%s2 + $0x18] sm:$0xff]
    %v1954 = vsel %vm205, %v1944, 0
    %1956 = vmatprep.subr.mxu0 0.0
    %1957 = vmatpush1.msra.mxu0 0.0
    %1958 = vmatprep.subr.mxu0 0.0
    %1959 = vmatpush1.msra.mxu0 0.0
    %1960 = vmatprep.subr.mxu0 0.0
    %1961 = vmatpush1.msra.mxu0 0.0
    %1962 = vmatprep.subr.mxu0 0.0
    %1963 = vmatpush1.msra.mxu0 0.0
    %1964 = vmatprep.subr.mxu0 0.0
    %1965 = vmatpush1.msra.mxu0 0.0
    %1966 = vmatprep.subr.mxu0 0.0
    %1967 = vmatpush1.msra.mxu0 0.0
    %1968 = vmatprep.subr.mxu0 0.0
    %1969 = vmatpush1.msra.mxu0 0.0
    %1970 = vmatprep.subr.mxu0 0.0
    %1971 = vmatpush1.msra.mxu0 0.0
    %1972 = vmatprep.subr.mxu0 0.0
    %1973 = vmatpush1.msra.mxu0 0.0
    %1974 = vmatprep.subr.mxu0 0.0
    %1975 = vmatpush1.msra.mxu0 0.0
    %1976 = vmatprep.subr.mxu0 0.0
    %1977 = vmatpush1.msra.mxu0 0.0
    %1978 = vmatprep.subr.mxu0 0.0
    %1979 = vmatpush1.msra.mxu0 0.0
    %1980 = vmatprep.subr.mxu0 0.0
    %1981 = vmatpush1.msra.mxu0 %v1952
    %1982 = vmatprep.subr.mxu0 0.0
    %1983 = vmatpush1.msra.mxu0 %v1951
    %1984 = vmatprep.subr.mxu0 0.0
    %1985 = vmatpush1.msra.mxu0 %v1950
    %1986 = vmatprep.subr.mxu0 0.0
    %1987 = vmatpush1.msra.mxu0 %v1949
    %1988 = vmatprep.subr.mxu0 0.0
    %1989 = vmatpush2.msra.mxu0 0.0
    %1990 = vmatprep.subr.mxu0 0.0
    %1991 = vmatpush2.msra.mxu0 0.0
    %1992 = vmatprep.subr.mxu0 0.0
    %1993 = vmatpush2.msra.mxu0 0.0
    %1994 = vmatprep.subr.mxu0 0.0
    %1995 = vmatpush2.msra.mxu0 0.0
    %1996 = vmatprep.subr.mxu0 0.0
    %1997 = vmatpush2.msra.mxu0 0.0
    %1998 = vmatprep.subr.mxu0 0.0
    %1999 = vmatpush2.msra.mxu0 0.0
    %2000 = vmatprep.subr.mxu0 0.0
    %2001 = vmatpush2.msra.mxu0 0.0
    %2002 = vmatprep.subr.mxu0 0.0
    %2003 = vmatpush2.msra.mxu0 0.0
    %2004 = vmatprep.subr.mxu0 0.0
    %2005 = vmatpush2.msra.mxu0 0.0
    %2006 = vmatprep.subr.mxu0 0.0
    %2007 = vmatpush2.msra.mxu0 0.0
    %2008 = vmatprep.subr.mxu0 0.0
    %2009 = vmatpush2.msra.mxu0 0.0
    %2010 = vmatprep.subr.mxu0 0.0
    %2011 = vmatpush2.msra.mxu0 0.0
    %2012 = vmatprep.subr.mxu0 0.0
    %2013 = vmatpush2.msra.mxu0 0.0
    %2014 = vmatprep.subr.mxu0 0.0
    %2015 = vmatpush2.msra.mxu0 0.0
    %2016 = vmatprep.subr.mxu0 0.0
    %2017 = vmatpush2.msra.mxu0 0.0
    %2018 = vmatprep.subr.mxu0 0.0
    %2019 = vmatpush2.msra.mxu0 0.0
    %2020 = vmatprep.mubr.f32.mxu0 0.0
    %2021 = vmatmul.mubr.f32.gmra.mxu0 %v1954
    %v2022 = vpop.f32.mrf.mxu0
    %v2023 = vadd.f32 0.0, %v2022
    %v2024 = vpop.f32.mrf.mxu0
    %2025 = vdwg.mxu0
    %v2026 = vadd.f32 %v1948, %v2023
    %v2027 = vxor.u32 %v2026, 2147483648
    %v2028 = vmul.f32 %v2027, 1.442695
    %v2029 = vpow.pop %v2028
    %v2030 = vadd.f32 %v2029, 1.0
    %v2031 = vrcp.pop %v2030
    %v2032 = vmul.f32 1.0, %v2031
    %s2033 = sadd.s32 32, 64
    %s2034 = scalar_lea.vmem [#allocation2], %s2033
    %v2035 = vld [vmem:[%s2034] sm:$0xff]
    %v2036 = vld [vmem:[%s674] sm:$0xff]
    %v2037 = vld [vmem:[%s674 + $0x8] sm:$0xff]
    %v2038 = vld [vmem:[%s674 + $0x10] sm:$0xff]
    %v2039 = vld [vmem:[%s674 + $0x18] sm:$0xff]
    %2040 = vmatprep.subr.mxu0 0.0
    %2041 = vmatpush1.msra.mxu0 0.0
    %2042 = vmatprep.subr.mxu0 0.0
    %2043 = vmatpush1.msra.mxu0 0.0
    %2044 = vmatprep.subr.mxu0 0.0
    %2045 = vmatpush1.msra.mxu0 0.0
    %2046 = vmatprep.subr.mxu0 0.0
    %2047 = vmatpush1.msra.mxu0 0.0
    %2048 = vmatprep.subr.mxu0 0.0
    %2049 = vmatpush1.msra.mxu0 0.0
    %2050 = vmatprep.subr.mxu0 0.0
    %2051 = vmatpush1.msra.mxu0 0.0
    %2052 = vmatprep.subr.mxu0 0.0
    %2053 = vmatpush1.msra.mxu0 0.0
    %2054 = vmatprep.subr.mxu0 0.0
    %2055 = vmatpush1.msra.mxu0 0.0
    %2056 = vmatprep.subr.mxu0 0.0
    %2057 = vmatpush1.msra.mxu0 0.0
    %2058 = vmatprep.subr.mxu0 0.0
    %2059 = vmatpush1.msra.mxu0 0.0
    %2060 = vmatprep.subr.mxu0 0.0
    %2061 = vmatpush1.msra.mxu0 0.0
    %2062 = vmatprep.subr.mxu0 0.0
    %2063 = vmatpush1.msra.mxu0 0.0
    %2064 = vmatprep.subr.mxu0 0.0
    %2065 = vmatpush1.msra.mxu0 %v2039
    %2066 = vmatprep.subr.mxu0 0.0
    %2067 = vmatpush1.msra.mxu0 %v2038
    %2068 = vmatprep.subr.mxu0 0.0
    %2069 = vmatpush1.msra.mxu0 %v2037
    %2070 = vmatprep.subr.mxu0 0.0
    %2071 = vmatpush1.msra.mxu0 %v2036
    %2072 = vmatprep.subr.mxu0 0.0
    %2073 = vmatpush2.msra.mxu0 0.0
    %2074 = vmatprep.subr.mxu0 0.0
    %2075 = vmatpush2.msra.mxu0 0.0
    %2076 = vmatprep.subr.mxu0 0.0
    %2077 = vmatpush2.msra.mxu0 0.0
    %2078 = vmatprep.subr.mxu0 0.0
    %2079 = vmatpush2.msra.mxu0 0.0
    %2080 = vmatprep.subr.mxu0 0.0
    %2081 = vmatpush2.msra.mxu0 0.0
    %2082 = vmatprep.subr.mxu0 0.0
    %2083 = vmatpush2.msra.mxu0 0.0
    %2084 = vmatprep.subr.mxu0 0.0
    %2085 = vmatpush2.msra.mxu0 0.0
    %2086 = vmatprep.subr.mxu0 0.0
    %2087 = vmatpush2.msra.mxu0 0.0
    %2088 = vmatprep.subr.mxu0 0.0
    %2089 = vmatpush2.msra.mxu0 0.0
    %2090 = vmatprep.subr.mxu0 0.0
    %2091 = vmatpush2.msra.mxu0 0.0
    %2092 = vmatprep.subr.mxu0 0.0
    %2093 = vmatpush2.msra.mxu0 0.0
    %2094 = vmatprep.subr.mxu0 0.0
    %2095 = vmatpush2.msra.mxu0 0.0
    %2096 = vmatprep.subr.mxu0 0.0
    %2097 = vmatpush2.msra.mxu0 0.0
    %2098 = vmatprep.subr.mxu0 0.0
    %2099 = vmatpush2.msra.mxu0 0.0
    %2100 = vmatprep.subr.mxu0 0.0
    %2101 = vmatpush2.msra.mxu0 0.0
    %2102 = vmatprep.subr.mxu0 0.0
    %2103 = vmatpush2.msra.mxu0 0.0
    %2104 = vmatprep.mubr.f32.mxu0 0.0
    %2105 = vmatmul.mubr.f32.gmra.mxu0 %v1954
    %v2106 = vpop.f32.mrf.mxu0
    %v2107 = vadd.f32 0.0, %v2106
    %v2108 = vpop.f32.mrf.mxu0
    %2109 = vdwg.mxu0
    %v2110 = vadd.f32 %v2035, %v2107
    %v2111 = vxor.u32 %v2110, 2147483648
    %v2112 = vmul.f32 %v2111, 1.442695
    %v2113 = vpow.pop %v2112
    %v2114 = vadd.f32 %v2113, 1.0
    %v2115 = vrcp.pop %v2114
    %v2116 = vmul.f32 1.0, %v2115
    %s2117 = sadd.s32 32, 128
    %s2118 = scalar_lea.vmem [#allocation2], %s2117
    %v2119 = vld [vmem:[%s2118] sm:$0xff]
    %v2120 = vld [vmem:[%s759] sm:$0xff]
    %v2121 = vld [vmem:[%s759 + $0x8] sm:$0xff]
    %v2122 = vld [vmem:[%s759 + $0x10] sm:$0xff]
    %v2123 = vld [vmem:[%s759 + $0x18] sm:$0xff]
    %2124 = vmatprep.subr.mxu0 0.0
    %2125 = vmatpush1.msra.mxu0 0.0
    %2126 = vmatprep.subr.mxu0 0.0
    %2127 = vmatpush1.msra.mxu0 0.0
    %2128 = vmatprep.subr.mxu0 0.0
    %2129 = vmatpush1.msra.mxu0 0.0
    %2130 = vmatprep.subr.mxu0 0.0
    %2131 = vmatpush1.msra.mxu0 0.0
    %2132 = vmatprep.subr.mxu0 0.0
    %2133 = vmatpush1.msra.mxu0 0.0
    %2134 = vmatprep.subr.mxu0 0.0
    %2135 = vmatpush1.msra.mxu0 0.0
    %2136 = vmatprep.subr.mxu0 0.0
    %2137 = vmatpush1.msra.mxu0 0.0
    %2138 = vmatprep.subr.mxu0 0.0
    %2139 = vmatpush1.msra.mxu0 0.0
    %2140 = vmatprep.subr.mxu0 0.0
    %2141 = vmatpush1.msra.mxu0 0.0
    %2142 = vmatprep.subr.mxu0 0.0
    %2143 = vmatpush1.msra.mxu0 0.0
    %2144 = vmatprep.subr.mxu0 0.0
    %2145 = vmatpush1.msra.mxu0 0.0
    %2146 = vmatprep.subr.mxu0 0.0
    %2147 = vmatpush1.msra.mxu0 0.0
    %2148 = vmatprep.subr.mxu0 0.0
    %2149 = vmatpush1.msra.mxu0 %v2123
    %2150 = vmatprep.subr.mxu0 0.0
    %2151 = vmatpush1.msra.mxu0 %v2122
    %2152 = vmatprep.subr.mxu0 0.0
    %2153 = vmatpush1.msra.mxu0 %v2121
    %2154 = vmatprep.subr.mxu0 0.0
    %2155 = vmatpush1.msra.mxu0 %v2120
    %2156 = vmatprep.subr.mxu0 0.0
    %2157 = vmatpush2.msra.mxu0 0.0
    %2158 = vmatprep.subr.mxu0 0.0
    %2159 = vmatpush2.msra.mxu0 0.0
    %2160 = vmatprep.subr.mxu0 0.0
    %2161 = vmatpush2.msra.mxu0 0.0
    %2162 = vmatprep.subr.mxu0 0.0
    %2163 = vmatpush2.msra.mxu0 0.0
    %2164 = vmatprep.subr.mxu0 0.0
    %2165 = vmatpush2.msra.mxu0 0.0
    %2166 = vmatprep.subr.mxu0 0.0
    %2167 = vmatpush2.msra.mxu0 0.0
    %2168 = vmatprep.subr.mxu0 0.0
    %2169 = vmatpush2.msra.mxu0 0.0
    %2170 = vmatprep.subr.mxu0 0.0
    %2171 = vmatpush2.msra.mxu0 0.0
    %2172 = vmatprep.subr.mxu0 0.0
    %2173 = vmatpush2.msra.mxu0 0.0
    %2174 = vmatprep.subr.mxu0 0.0
    %2175 = vmatpush2.msra.mxu0 0.0
    %2176 = vmatprep.subr.mxu0 0.0
    %2177 = vmatpush2.msra.mxu0 0.0
    %2178 = vmatprep.subr.mxu0 0.0
    %2179 = vmatpush2.msra.mxu0 0.0
    %2180 = vmatprep.subr.mxu0 0.0
    %2181 = vmatpush2.msra.mxu0 0.0
    %2182 = vmatprep.subr.mxu0 0.0
    %2183 = vmatpush2.msra.mxu0 0.0
    %2184 = vmatprep.subr.mxu0 0.0
    %2185 = vmatpush2.msra.mxu0 0.0
    %2186 = vmatprep.subr.mxu0 0.0
    %2187 = vmatpush2.msra.mxu0 0.0
    %2188 = vmatprep.mubr.f32.mxu0 0.0
    %2189 = vmatmul.mubr.f32.gmra.mxu0 %v1954
    %v2190 = vpop.f32.mrf.mxu0
    %v2191 = vadd.f32 0.0, %v2190
    %v2192 = vpop.f32.mrf.mxu0
    %2193 = vdwg.mxu0
    %v2194 = vadd.f32 %v2119, %v2191
    %v2195 = vtanh.pop %v2194
    %s2196 = sadd.s32 32, 192
    %s2197 = scalar_lea.vmem [#allocation2], %s2196
    %v2198 = vld [vmem:[%s2197] sm:$0xff]
    %v2199 = vld [vmem:[%s839] sm:$0xff]
    %v2200 = vld [vmem:[%s839 + $0x8] sm:$0xff]
    %v2201 = vld [vmem:[%s839 + $0x10] sm:$0xff]
    %v2202 = vld [vmem:[%s839 + $0x18] sm:$0xff]
    %2203 = vmatprep.subr.mxu0 0.0
    %2204 = vmatpush1.msra.mxu0 0.0
    %2205 = vmatprep.subr.mxu0 0.0
    %2206 = vmatpush1.msra.mxu0 0.0
    %2207 = vmatprep.subr.mxu0 0.0
    %2208 = vmatpush1.msra.mxu0 0.0
    %2209 = vmatprep.subr.mxu0 0.0
    %2210 = vmatpush1.msra.mxu0 0.0
    %2211 = vmatprep.subr.mxu0 0.0
    %2212 = vmatpush1.msra.mxu0 0.0
    %2213 = vmatprep.subr.mxu0 0.0
    %2214 = vmatpush1.msra.mxu0 0.0
    %2215 = vmatprep.subr.mxu0 0.0
    %2216 = vmatpush1.msra.mxu0 0.0
    %2217 = vmatprep.subr.mxu0 0.0
    %2218 = vmatpush1.msra.mxu0 0.0
    %2219 = vmatprep.subr.mxu0 0.0
    %2220 = vmatpush1.msra.mxu0 0.0
    %2221 = vmatprep.subr.mxu0 0.0
    %2222 = vmatpush1.msra.mxu0 0.0
    %2223 = vmatprep.subr.mxu0 0.0
    %2224 = vmatpush1.msra.mxu0 0.0
    %2225 = vmatprep.subr.mxu0 0.0
    %2226 = vmatpush1.msra.mxu0 0.0
    %2227 = vmatprep.subr.mxu0 0.0
    %2228 = vmatpush1.msra.mxu0 %v2202
    %2229 = vmatprep.subr.mxu0 0.0
    %2230 = vmatpush1.msra.mxu0 %v2201
    %2231 = vmatprep.subr.mxu0 0.0
    %2232 = vmatpush1.msra.mxu0 %v2200
    %2233 = vmatprep.subr.mxu0 0.0
    %2234 = vmatpush1.msra.mxu0 %v2199
    %2235 = vmatprep.subr.mxu0 0.0
    %2236 = vmatpush2.msra.mxu0 0.0
    %2237 = vmatprep.subr.mxu0 0.0
    %2238 = vmatpush2.msra.mxu0 0.0
    %2239 = vmatprep.subr.mxu0 0.0
    %2240 = vmatpush2.msra.mxu0 0.0
    %2241 = vmatprep.subr.mxu0 0.0
    %2242 = vmatpush2.msra.mxu0 0.0
    %2243 = vmatprep.subr.mxu0 0.0
    %2244 = vmatpush2.msra.mxu0 0.0
    %2245 = vmatprep.subr.mxu0 0.0
    %2246 = vmatpush2.msra.mxu0 0.0
    %2247 = vmatprep.subr.mxu0 0.0
    %2248 = vmatpush2.msra.mxu0 0.0
    %2249 = vmatprep.subr.mxu0 0.0
    %2250 = vmatpush2.msra.mxu0 0.0
    %2251 = vmatprep.subr.mxu0 0.0
    %2252 = vmatpush2.msra.mxu0 0.0
    %2253 = vmatprep.subr.mxu0 0.0
    %2254 = vmatpush2.msra.mxu0 0.0
    %2255 = vmatprep.subr.mxu0 0.0
    %2256 = vmatpush2.msra.mxu0 0.0
    %2257 = vmatprep.subr.mxu0 0.0
    %2258 = vmatpush2.msra.mxu0 0.0
    %2259 = vmatprep.subr.mxu0 0.0
    %2260 = vmatpush2.msra.mxu0 0.0
    %2261 = vmatprep.subr.mxu0 0.0
    %2262 = vmatpush2.msra.mxu0 0.0
    %2263 = vmatprep.subr.mxu0 0.0
    %2264 = vmatpush2.msra.mxu0 0.0
    %2265 = vmatprep.subr.mxu0 0.0
    %2266 = vmatpush2.msra.mxu0 0.0
    %2267 = vmatprep.mubr.f32.mxu0 0.0
    %2268 = vmatmul.mubr.f32.gmra.mxu0 %v1954
    %v2269 = vpop.f32.mrf.mxu0
    %v2270 = vadd.f32 0.0, %v2269
    %v2271 = vpop.f32.mrf.mxu0
    %2272 = vdwg.mxu0
    %v2273 = vadd.f32 %v2198, %v2270
    %v2274 = vxor.u32 %v2273, 2147483648
    %v2275 = vmul.f32 %v2274, 1.442695
    %v2276 = vpow.pop %v2275
    %v2277 = vadd.f32 %v2276, 1.0
    %v2278 = vrcp.pop %v2277
    %v2279 = vmul.f32 1.0, %v2278
    %v2280 = vmul.f32 %v2116, %v1942
    %v2281 = vmul.f32 %v2032, %v2195
    %v2282 = vadd.f32 %v2280, %v2281
    %v2283 = vtanh.pop %v2282
    %v2284 = vmul.f32 %v2279, %v2283
    %s2285 = scalar_lea.vmem [#allocation3], 32
    %2286 = vst.msk [vmem:[%s2285] sm:$0xff] %vm205, %v2284
    %s2287 = scalar_lea.vmem [#allocation2], 40
    %v2288 = vld [vmem:[%s2287] sm:$0xff]
    %v2289 = vld [vmem:[%s2] sm:$0xff]
    %v2290 = vld [vmem:[%s2 + $0x8] sm:$0xff]
    %v2291 = vld [vmem:[%s2 + $0x10] sm:$0xff]
    %v2292 = vld [vmem:[%s2 + $0x18] sm:$0xff]
    %v2294 = vsel %vm205, %v2284, 0
    %2296 = vmatprep.subr.mxu0 0.0
    %2297 = vmatpush1.msra.mxu0 0.0
    %2298 = vmatprep.subr.mxu0 0.0
    %2299 = vmatpush1.msra.mxu0 0.0
    %2300 = vmatprep.subr.mxu0 0.0
    %2301 = vmatpush1.msra.mxu0 0.0
    %2302 = vmatprep.subr.mxu0 0.0
    %2303 = vmatpush1.msra.mxu0 0.0
    %2304 = vmatprep.subr.mxu0 0.0
    %2305 = vmatpush1.msra.mxu0 0.0
    %2306 = vmatprep.subr.mxu0 0.0
    %2307 = vmatpush1.msra.mxu0 0.0
    %2308 = vmatprep.subr.mxu0 0.0
    %2309 = vmatpush1.msra.mxu0 0.0
    %2310 = vmatprep.subr.mxu0 0.0
    %2311 = vmatpush1.msra.mxu0 0.0
    %2312 = vmatprep.subr.mxu0 0.0
    %2313 = vmatpush1.msra.mxu0 0.0
    %2314 = vmatprep.subr.mxu0 0.0
    %2315 = vmatpush1.msra.mxu0 0.0
    %2316 = vmatprep.subr.mxu0 0.0
    %2317 = vmatpush1.msra.mxu0 0.0
    %2318 = vmatprep.subr.mxu0 0.0
    %2319 = vmatpush1.msra.mxu0 0.0
    %2320 = vmatprep.subr.mxu0 0.0
    %2321 = vmatpush1.msra.mxu0 %v2292
    %2322 = vmatprep.subr.mxu0 0.0
    %2323 = vmatpush1.msra.mxu0 %v2291
    %2324 = vmatprep.subr.mxu0 0.0
    %2325 = vmatpush1.msra.mxu0 %v2290
    %2326 = vmatprep.subr.mxu0 0.0
    %2327 = vmatpush1.msra.mxu0 %v2289
    %2328 = vmatprep.subr.mxu0 0.0
    %2329 = vmatpush2.msra.mxu0 0.0
    %2330 = vmatprep.subr.mxu0 0.0
    %2331 = vmatpush2.msra.mxu0 0.0
    %2332 = vmatprep.subr.mxu0 0.0
    %2333 = vmatpush2.msra.mxu0 0.0
    %2334 = vmatprep.subr.mxu0 0.0
    %2335 = vmatpush2.msra.mxu0 0.0
    %2336 = vmatprep.subr.mxu0 0.0
    %2337 = vmatpush2.msra.mxu0 0.0
    %2338 = vmatprep.subr.mxu0 0.0
    %2339 = vmatpush2.msra.mxu0 0.0
    %2340 = vmatprep.subr.mxu0 0.0
    %2341 = vmatpush2.msra.mxu0 0.0
    %2342 = vmatprep.subr.mxu0 0.0
    %2343 = vmatpush2.msra.mxu0 0.0
    %2344 = vmatprep.subr.mxu0 0.0
    %2345 = vmatpush2.msra.mxu0 0.0
    %2346 = vmatprep.subr.mxu0 0.0
    %2347 = vmatpush2.msra.mxu0 0.0
    %2348 = vmatprep.subr.mxu0 0.0
    %2349 = vmatpush2.msra.mxu0 0.0
    %2350 = vmatprep.subr.mxu0 0.0
    %2351 = vmatpush2.msra.mxu0 0.0
    %2352 = vmatprep.subr.mxu0 0.0
    %2353 = vmatpush2.msra.mxu0 0.0
    %2354 = vmatprep.subr.mxu0 0.0
    %2355 = vmatpush2.msra.mxu0 0.0
    %2356 = vmatprep.subr.mxu0 0.0
    %2357 = vmatpush2.msra.mxu0 0.0
    %2358 = vmatprep.subr.mxu0 0.0
    %2359 = vmatpush2.msra.mxu0 0.0
    %2360 = vmatprep.mubr.f32.mxu0 0.0
    %2361 = vmatmul.mubr.f32.gmra.mxu0 %v2294
    %v2362 = vpop.f32.mrf.mxu0
    %v2363 = vadd.f32 0.0, %v2362
    %v2364 = vpop.f32.mrf.mxu0
    %2365 = vdwg.mxu0
    %v2366 = vadd.f32 %v2288, %v2363
    %v2367 = vxor.u32 %v2366, 2147483648
    %v2368 = vmul.f32 %v2367, 1.442695
    %v2369 = vpow.pop %v2368
    %v2370 = vadd.f32 %v2369, 1.0
    %v2371 = vrcp.pop %v2370
    %v2372 = vmul.f32 1.0, %v2371
    %s2373 = sadd.s32 40, 64
    %s2374 = scalar_lea.vmem [#allocation2], %s2373
    %v2375 = vld [vmem:[%s2374] sm:$0xff]
    %v2376 = vld [vmem:[%s674] sm:$0xff]
    %v2377 = vld [vmem:[%s674 + $0x8] sm:$0xff]
    %v2378 = vld [vmem:[%s674 + $0x10] sm:$0xff]
    %v2379 = vld [vmem:[%s674 + $0x18] sm:$0xff]
    %2380 = vmatprep.subr.mxu0 0.0
    %2381 = vmatpush1.msra.mxu0 0.0
    %2382 = vmatprep.subr.mxu0 0.0
    %2383 = vmatpush1.msra.mxu0 0.0
    %2384 = vmatprep.subr.mxu0 0.0
    %2385 = vmatpush1.msra.mxu0 0.0
    %2386 = vmatprep.subr.mxu0 0.0
    %2387 = vmatpush1.msra.mxu0 0.0
    %2388 = vmatprep.subr.mxu0 0.0
    %2389 = vmatpush1.msra.mxu0 0.0
    %2390 = vmatprep.subr.mxu0 0.0
    %2391 = vmatpush1.msra.mxu0 0.0
    %2392 = vmatprep.subr.mxu0 0.0
    %2393 = vmatpush1.msra.mxu0 0.0
    %2394 = vmatprep.subr.mxu0 0.0
    %2395 = vmatpush1.msra.mxu0 0.0
    %2396 = vmatprep.subr.mxu0 0.0
    %2397 = vmatpush1.msra.mxu0 0.0
    %2398 = vmatprep.subr.mxu0 0.0
    %2399 = vmatpush1.msra.mxu0 0.0
    %2400 = vmatprep.subr.mxu0 0.0
    %2401 = vmatpush1.msra.mxu0 0.0
    %2402 = vmatprep.subr.mxu0 0.0
    %2403 = vmatpush1.msra.mxu0 0.0
    %2404 = vmatprep.subr.mxu0 0.0
    %2405 = vmatpush1.msra.mxu0 %v2379
    %2406 = vmatprep.subr.mxu0 0.0
    %2407 = vmatpush1.msra.mxu0 %v2378
    %2408 = vmatprep.subr.mxu0 0.0
    %2409 = vmatpush1.msra.mxu0 %v2377
    %2410 = vmatprep.subr.mxu0 0.0
    %2411 = vmatpush1.msra.mxu0 %v2376
    %2412 = vmatprep.subr.mxu0 0.0
    %2413 = vmatpush2.msra.mxu0 0.0
    %2414 = vmatprep.subr.mxu0 0.0
    %2415 = vmatpush2.msra.mxu0 0.0
    %2416 = vmatprep.subr.mxu0 0.0
    %2417 = vmatpush2.msra.mxu0 0.0
    %2418 = vmatprep.subr.mxu0 0.0
    %2419 = vmatpush2.msra.mxu0 0.0
    %2420 = vmatprep.subr.mxu0 0.0
    %2421 = vmatpush2.msra.mxu0 0.0
    %2422 = vmatprep.subr.mxu0 0.0
    %2423 = vmatpush2.msra.mxu0 0.0
    %2424 = vmatprep.subr.mxu0 0.0
    %2425 = vmatpush2.msra.mxu0 0.0
    %2426 = vmatprep.subr.mxu0 0.0
    %2427 = vmatpush2.msra.mxu0 0.0
    %2428 = vmatprep.subr.mxu0 0.0
    %2429 = vmatpush2.msra.mxu0 0.0
    %2430 = vmatprep.subr.mxu0 0.0
    %2431 = vmatpush2.msra.mxu0 0.0
    %2432 = vmatprep.subr.mxu0 0.0
    %2433 = vmatpush2.msra.mxu0 0.0
    %2434 = vmatprep.subr.mxu0 0.0
    %2435 = vmatpush2.msra.mxu0 0.0
    %2436 = vmatprep.subr.mxu0 0.0
    %2437 = vmatpush2.msra.mxu0 0.0
    %2438 = vmatprep.subr.mxu0 0.0
    %2439 = vmatpush2.msra.mxu0 0.0
    %2440 = vmatprep.subr.mxu0 0.0
    %2441 = vmatpush2.msra.mxu0 0.0
    %2442 = vmatprep.subr.mxu0 0.0
    %2443 = vmatpush2.msra.mxu0 0.0
    %2444 = vmatprep.mubr.f32.mxu0 0.0
    %2445 = vmatmul.mubr.f32.gmra.mxu0 %v2294
    %v2446 = vpop.f32.mrf.mxu0
    %v2447 = vadd.f32 0.0, %v2446
    %v2448 = vpop.f32.mrf.mxu0
    %2449 = vdwg.mxu0
    %v2450 = vadd.f32 %v2375, %v2447
    %v2451 = vxor.u32 %v2450, 2147483648
    %v2452 = vmul.f32 %v2451, 1.442695
    %v2453 = vpow.pop %v2452
    %v2454 = vadd.f32 %v2453, 1.0
    %v2455 = vrcp.pop %v2454
    %v2456 = vmul.f32 1.0, %v2455
    %s2457 = sadd.s32 40, 128
    %s2458 = scalar_lea.vmem [#allocation2], %s2457
    %v2459 = vld [vmem:[%s2458] sm:$0xff]
    %v2460 = vld [vmem:[%s759] sm:$0xff]
    %v2461 = vld [vmem:[%s759 + $0x8] sm:$0xff]
    %v2462 = vld [vmem:[%s759 + $0x10] sm:$0xff]
    %v2463 = vld [vmem:[%s759 + $0x18] sm:$0xff]
    %2464 = vmatprep.subr.mxu0 0.0
    %2465 = vmatpush1.msra.mxu0 0.0
    %2466 = vmatprep.subr.mxu0 0.0
    %2467 = vmatpush1.msra.mxu0 0.0
    %2468 = vmatprep.subr.mxu0 0.0
    %2469 = vmatpush1.msra.mxu0 0.0
    %2470 = vmatprep.subr.mxu0 0.0
    %2471 = vmatpush1.msra.mxu0 0.0
    %2472 = vmatprep.subr.mxu0 0.0
    %2473 = vmatpush1.msra.mxu0 0.0
    %2474 = vmatprep.subr.mxu0 0.0
    %2475 = vmatpush1.msra.mxu0 0.0
    %2476 = vmatprep.subr.mxu0 0.0
    %2477 = vmatpush1.msra.mxu0 0.0
    %2478 = vmatprep.subr.mxu0 0.0
    %2479 = vmatpush1.msra.mxu0 0.0
    %2480 = vmatprep.subr.mxu0 0.0
    %2481 = vmatpush1.msra.mxu0 0.0
    %2482 = vmatprep.subr.mxu0 0.0
    %2483 = vmatpush1.msra.mxu0 0.0
    %2484 = vmatprep.subr.mxu0 0.0
    %2485 = vmatpush1.msra.mxu0 0.0
    %2486 = vmatprep.subr.mxu0 0.0
    %2487 = vmatpush1.msra.mxu0 0.0
    %2488 = vmatprep.subr.mxu0 0.0
    %2489 = vmatpush1.msra.mxu0 %v2463
    %2490 = vmatprep.subr.mxu0 0.0
    %2491 = vmatpush1.msra.mxu0 %v2462
    %2492 = vmatprep.subr.mxu0 0.0
    %2493 = vmatpush1.msra.mxu0 %v2461
    %2494 = vmatprep.subr.mxu0 0.0
    %2495 = vmatpush1.msra.mxu0 %v2460
    %2496 = vmatprep.subr.mxu0 0.0
    %2497 = vmatpush2.msra.mxu0 0.0
    %2498 = vmatprep.subr.mxu0 0.0
    %2499 = vmatpush2.msra.mxu0 0.0
    %2500 = vmatprep.subr.mxu0 0.0
    %2501 = vmatpush2.msra.mxu0 0.0
    %2502 = vmatprep.subr.mxu0 0.0
    %2503 = vmatpush2.msra.mxu0 0.0
    %2504 = vmatprep.subr.mxu0 0.0
    %2505 = vmatpush2.msra.mxu0 0.0
    %2506 = vmatprep.subr.mxu0 0.0
    %2507 = vmatpush2.msra.mxu0 0.0
    %2508 = vmatprep.subr.mxu0 0.0
    %2509 = vmatpush2.msra.mxu0 0.0
    %2510 = vmatprep.subr.mxu0 0.0
    %2511 = vmatpush2.msra.mxu0 0.0
    %2512 = vmatprep.subr.mxu0 0.0
    %2513 = vmatpush2.msra.mxu0 0.0
    %2514 = vmatprep.subr.mxu0 0.0
    %2515 = vmatpush2.msra.mxu0 0.0
    %2516 = vmatprep.subr.mxu0 0.0
    %2517 = vmatpush2.msra.mxu0 0.0
    %2518 = vmatprep.subr.mxu0 0.0
    %2519 = vmatpush2.msra.mxu0 0.0
    %2520 = vmatprep.subr.mxu0 0.0
    %2521 = vmatpush2.msra.mxu0 0.0
    %2522 = vmatprep.subr.mxu0 0.0
    %2523 = vmatpush2.msra.mxu0 0.0
    %2524 = vmatprep.subr.mxu0 0.0
    %2525 = vmatpush2.msra.mxu0 0.0
    %2526 = vmatprep.subr.mxu0 0.0
    %2527 = vmatpush2.msra.mxu0 0.0
    %2528 = vmatprep.mubr.f32.mxu0 0.0
    %2529 = vmatmul.mubr.f32.gmra.mxu0 %v2294
    %v2530 = vpop.f32.mrf.mxu0
    %v2531 = vadd.f32 0.0, %v2530
    %v2532 = vpop.f32.mrf.mxu0
    %2533 = vdwg.mxu0
    %v2534 = vadd.f32 %v2459, %v2531
    %v2535 = vtanh.pop %v2534
    %s2536 = sadd.s32 40, 192
    %s2537 = scalar_lea.vmem [#allocation2], %s2536
    %v2538 = vld [vmem:[%s2537] sm:$0xff]
    %v2539 = vld [vmem:[%s839] sm:$0xff]
    %v2540 = vld [vmem:[%s839 + $0x8] sm:$0xff]
    %v2541 = vld [vmem:[%s839 + $0x10] sm:$0xff]
    %v2542 = vld [vmem:[%s839 + $0x18] sm:$0xff]
    %2543 = vmatprep.subr.mxu0 0.0
    %2544 = vmatpush1.msra.mxu0 0.0
    %2545 = vmatprep.subr.mxu0 0.0
    %2546 = vmatpush1.msra.mxu0 0.0
    %2547 = vmatprep.subr.mxu0 0.0
    %2548 = vmatpush1.msra.mxu0 0.0
    %2549 = vmatprep.subr.mxu0 0.0
    %2550 = vmatpush1.msra.mxu0 0.0
    %2551 = vmatprep.subr.mxu0 0.0
    %2552 = vmatpush1.msra.mxu0 0.0
    %2553 = vmatprep.subr.mxu0 0.0
    %2554 = vmatpush1.msra.mxu0 0.0
    %2555 = vmatprep.subr.mxu0 0.0
    %2556 = vmatpush1.msra.mxu0 0.0
    %2557 = vmatprep.subr.mxu0 0.0
    %2558 = vmatpush1.msra.mxu0 0.0
    %2559 = vmatprep.subr.mxu0 0.0
    %2560 = vmatpush1.msra.mxu0 0.0
    %2561 = vmatprep.subr.mxu0 0.0
    %2562 = vmatpush1.msra.mxu0 0.0
    %2563 = vmatprep.subr.mxu0 0.0
    %2564 = vmatpush1.msra.mxu0 0.0
    %2565 = vmatprep.subr.mxu0 0.0
    %2566 = vmatpush1.msra.mxu0 0.0
    %2567 = vmatprep.subr.mxu0 0.0
    %2568 = vmatpush1.msra.mxu0 %v2542
    %2569 = vmatprep.subr.mxu0 0.0
    %2570 = vmatpush1.msra.mxu0 %v2541
    %2571 = vmatprep.subr.mxu0 0.0
    %2572 = vmatpush1.msra.mxu0 %v2540
    %2573 = vmatprep.subr.mxu0 0.0
    %2574 = vmatpush1.msra.mxu0 %v2539
    %2575 = vmatprep.subr.mxu0 0.0
    %2576 = vmatpush2.msra.mxu0 0.0
    %2577 = vmatprep.subr.mxu0 0.0
    %2578 = vmatpush2.msra.mxu0 0.0
    %2579 = vmatprep.subr.mxu0 0.0
    %2580 = vmatpush2.msra.mxu0 0.0
    %2581 = vmatprep.subr.mxu0 0.0
    %2582 = vmatpush2.msra.mxu0 0.0
    %2583 = vmatprep.subr.mxu0 0.0
    %2584 = vmatpush2.msra.mxu0 0.0
    %2585 = vmatprep.subr.mxu0 0.0
    %2586 = vmatpush2.msra.mxu0 0.0
    %2587 = vmatprep.subr.mxu0 0.0
    %2588 = vmatpush2.msra.mxu0 0.0
    %2589 = vmatprep.subr.mxu0 0.0
    %2590 = vmatpush2.msra.mxu0 0.0
    %2591 = vmatprep.subr.mxu0 0.0
    %2592 = vmatpush2.msra.mxu0 0.0
    %2593 = vmatprep.subr.mxu0 0.0
    %2594 = vmatpush2.msra.mxu0 0.0
    %2595 = vmatprep.subr.mxu0 0.0
    %2596 = vmatpush2.msra.mxu0 0.0
    %2597 = vmatprep.subr.mxu0 0.0
    %2598 = vmatpush2.msra.mxu0 0.0
    %2599 = vmatprep.subr.mxu0 0.0
    %2600 = vmatpush2.msra.mxu0 0.0
    %2601 = vmatprep.subr.mxu0 0.0
    %2602 = vmatpush2.msra.mxu0 0.0
    %2603 = vmatprep.subr.mxu0 0.0
    %2604 = vmatpush2.msra.mxu0 0.0
    %2605 = vmatprep.subr.mxu0 0.0
    %2606 = vmatpush2.msra.mxu0 0.0
    %2607 = vmatprep.mubr.f32.mxu0 0.0
    %2608 = vmatmul.mubr.f32.gmra.mxu0 %v2294
    %v2609 = vpop.f32.mrf.mxu0
    %v2610 = vadd.f32 0.0, %v2609
    %v2611 = vpop.f32.mrf.mxu0
    %2612 = vdwg.mxu0
    %v2613 = vadd.f32 %v2538, %v2610
    %v2614 = vxor.u32 %v2613, 2147483648
    %v2615 = vmul.f32 %v2614, 1.442695
    %v2616 = vpow.pop %v2615
    %v2617 = vadd.f32 %v2616, 1.0
    %v2618 = vrcp.pop %v2617
    %v2619 = vmul.f32 1.0, %v2618
    %v2620 = vmul.f32 %v2456, %v2282
    %v2621 = vmul.f32 %v2372, %v2535
    %v2622 = vadd.f32 %v2620, %v2621
    %v2623 = vtanh.pop %v2622
    %v2624 = vmul.f32 %v2619, %v2623
    %s2625 = scalar_lea.vmem [#allocation3], 40
    %2626 = vst.msk [vmem:[%s2625] sm:$0xff] %vm205, %v2624
    %s2627 = scalar_lea.vmem [#allocation2], 48
    %v2628 = vld [vmem:[%s2627] sm:$0xff]
    %v2629 = vld [vmem:[%s2] sm:$0xff]
    %v2630 = vld [vmem:[%s2 + $0x8] sm:$0xff]
    %v2631 = vld [vmem:[%s2 + $0x10] sm:$0xff]
    %v2632 = vld [vmem:[%s2 + $0x18] sm:$0xff]
    %v2634 = vsel %vm205, %v2624, 0
    %2636 = vmatprep.subr.mxu0 0.0
    %2637 = vmatpush1.msra.mxu0 0.0
    %2638 = vmatprep.subr.mxu0 0.0
    %2639 = vmatpush1.msra.mxu0 0.0
    %2640 = vmatprep.subr.mxu0 0.0
    %2641 = vmatpush1.msra.mxu0 0.0
    %2642 = vmatprep.subr.mxu0 0.0
    %2643 = vmatpush1.msra.mxu0 0.0
    %2644 = vmatprep.subr.mxu0 0.0
    %2645 = vmatpush1.msra.mxu0 0.0
    %2646 = vmatprep.subr.mxu0 0.0
    %2647 = vmatpush1.msra.mxu0 0.0
    %2648 = vmatprep.subr.mxu0 0.0
    %2649 = vmatpush1.msra.mxu0 0.0
    %2650 = vmatprep.subr.mxu0 0.0
    %2651 = vmatpush1.msra.mxu0 0.0
    %2652 = vmatprep.subr.mxu0 0.0
    %2653 = vmatpush1.msra.mxu0 0.0
    %2654 = vmatprep.subr.mxu0 0.0
    %2655 = vmatpush1.msra.mxu0 0.0
    %2656 = vmatprep.subr.mxu0 0.0
    %2657 = vmatpush1.msra.mxu0 0.0
    %2658 = vmatprep.subr.mxu0 0.0
    %2659 = vmatpush1.msra.mxu0 0.0
    %2660 = vmatprep.subr.mxu0 0.0
    %2661 = vmatpush1.msra.mxu0 %v2632
    %2662 = vmatprep.subr.mxu0 0.0
    %2663 = vmatpush1.msra.mxu0 %v2631
    %2664 = vmatprep.subr.mxu0 0.0
    %2665 = vmatpush1.msra.mxu0 %v2630
    %2666 = vmatprep.subr.mxu0 0.0
    %2667 = vmatpush1.msra.mxu0 %v2629
    %2668 = vmatprep.subr.mxu0 0.0
    %2669 = vmatpush2.msra.mxu0 0.0
    %2670 = vmatprep.subr.mxu0 0.0
    %2671 = vmatpush2.msra.mxu0 0.0
    %2672 = vmatprep.subr.mxu0 0.0
    %2673 = vmatpush2.msra.mxu0 0.0
    %2674 = vmatprep.subr.mxu0 0.0
    %2675 = vmatpush2.msra.mxu0 0.0
    %2676 = vmatprep.subr.mxu0 0.0
    %2677 = vmatpush2.msra.mxu0 0.0
    %2678 = vmatprep.subr.mxu0 0.0
    %2679 = vmatpush2.msra.mxu0 0.0
    %2680 = vmatprep.subr.mxu0 0.0
    %2681 = vmatpush2.msra.mxu0 0.0
    %2682 = vmatprep.subr.mxu0 0.0
    %2683 = vmatpush2.msra.mxu0 0.0
    %2684 = vmatprep.subr.mxu0 0.0
    %2685 = vmatpush2.msra.mxu0 0.0
    %2686 = vmatprep.subr.mxu0 0.0
    %2687 = vmatpush2.msra.mxu0 0.0
    %2688 = vmatprep.subr.mxu0 0.0
    %2689 = vmatpush2.msra.mxu0 0.0
    %2690 = vmatprep.subr.mxu0 0.0
    %2691 = vmatpush2.msra.mxu0 0.0
    %2692 = vmatprep.subr.mxu0 0.0
    %2693 = vmatpush2.msra.mxu0 0.0
    %2694 = vmatprep.subr.mxu0 0.0
    %2695 = vmatpush2.msra.mxu0 0.0
    %2696 = vmatprep.subr.mxu0 0.0
    %2697 = vmatpush2.msra.mxu0 0.0
    %2698 = vmatprep.subr.mxu0 0.0
    %2699 = vmatpush2.msra.mxu0 0.0
    %2700 = vmatprep.mubr.f32.mxu0 0.0
    %2701 = vmatmul.mubr.f32.gmra.mxu0 %v2634
    %v2702 = vpop.f32.mrf.mxu0
    %v2703 = vadd.f32 0.0, %v2702
    %v2704 = vpop.f32.mrf.mxu0
    %2705 = vdwg.mxu0
    %v2706 = vadd.f32 %v2628, %v2703
    %v2707 = vxor.u32 %v2706, 2147483648
    %v2708 = vmul.f32 %v2707, 1.442695
    %v2709 = vpow.pop %v2708
    %v2710 = vadd.f32 %v2709, 1.0
    %v2711 = vrcp.pop %v2710
    %v2712 = vmul.f32 1.0, %v2711
    %s2713 = sadd.s32 48, 64
    %s2714 = scalar_lea.vmem [#allocation2], %s2713
    %v2715 = vld [vmem:[%s2714] sm:$0xff]
    %v2716 = vld [vmem:[%s674] sm:$0xff]
    %v2717 = vld [vmem:[%s674 + $0x8] sm:$0xff]
    %v2718 = vld [vmem:[%s674 + $0x10] sm:$0xff]
    %v2719 = vld [vmem:[%s674 + $0x18] sm:$0xff]
    %2720 = vmatprep.subr.mxu0 0.0
    %2721 = vmatpush1.msra.mxu0 0.0
    %2722 = vmatprep.subr.mxu0 0.0
    %2723 = vmatpush1.msra.mxu0 0.0
    %2724 = vmatprep.subr.mxu0 0.0
    %2725 = vmatpush1.msra.mxu0 0.0
    %2726 = vmatprep.subr.mxu0 0.0
    %2727 = vmatpush1.msra.mxu0 0.0
    %2728 = vmatprep.subr.mxu0 0.0
    %2729 = vmatpush1.msra.mxu0 0.0
    %2730 = vmatprep.subr.mxu0 0.0
    %2731 = vmatpush1.msra.mxu0 0.0
    %2732 = vmatprep.subr.mxu0 0.0
    %2733 = vmatpush1.msra.mxu0 0.0
    %2734 = vmatprep.subr.mxu0 0.0
    %2735 = vmatpush1.msra.mxu0 0.0
    %2736 = vmatprep.subr.mxu0 0.0
    %2737 = vmatpush1.msra.mxu0 0.0
    %2738 = vmatprep.subr.mxu0 0.0
    %2739 = vmatpush1.msra.mxu0 0.0
    %2740 = vmatprep.subr.mxu0 0.0
    %2741 = vmatpush1.msra.mxu0 0.0
    %2742 = vmatprep.subr.mxu0 0.0
    %2743 = vmatpush1.msra.mxu0 0.0
    %2744 = vmatprep.subr.mxu0 0.0
    %2745 = vmatpush1.msra.mxu0 %v2719
    %2746 = vmatprep.subr.mxu0 0.0
    %2747 = vmatpush1.msra.mxu0 %v2718
    %2748 = vmatprep.subr.mxu0 0.0
    %2749 = vmatpush1.msra.mxu0 %v2717
    %2750 = vmatprep.subr.mxu0 0.0
    %2751 = vmatpush1.msra.mxu0 %v2716
    %2752 = vmatprep.subr.mxu0 0.0
    %2753 = vmatpush2.msra.mxu0 0.0
    %2754 = vmatprep.subr.mxu0 0.0
    %2755 = vmatpush2.msra.mxu0 0.0
    %2756 = vmatprep.subr.mxu0 0.0
    %2757 = vmatpush2.msra.mxu0 0.0
    %2758 = vmatprep.subr.mxu0 0.0
    %2759 = vmatpush2.msra.mxu0 0.0
    %2760 = vmatprep.subr.mxu0 0.0
    %2761 = vmatpush2.msra.mxu0 0.0
    %2762 = vmatprep.subr.mxu0 0.0
    %2763 = vmatpush2.msra.mxu0 0.0
    %2764 = vmatprep.subr.mxu0 0.0
    %2765 = vmatpush2.msra.mxu0 0.0
    %2766 = vmatprep.subr.mxu0 0.0
    %2767 = vmatpush2.msra.mxu0 0.0
    %2768 = vmatprep.subr.mxu0 0.0
    %2769 = vmatpush2.msra.mxu0 0.0
    %2770 = vmatprep.subr.mxu0 0.0
    %2771 = vmatpush2.msra.mxu0 0.0
    %2772 = vmatprep.subr.mxu0 0.0
    %2773 = vmatpush2.msra.mxu0 0.0
    %2774 = vmatprep.subr.mxu0 0.0
    %2775 = vmatpush2.msra.mxu0 0.0
    %2776 = vmatprep.subr.mxu0 0.0
    %2777 = vmatpush2.msra.mxu0 0.0
    %2778 = vmatprep.subr.mxu0 0.0
    %2779 = vmatpush2.msra.mxu0 0.0
    %2780 = vmatprep.subr.mxu0 0.0
    %2781 = vmatpush2.msra.mxu0 0.0
    %2782 = vmatprep.subr.mxu0 0.0
    %2783 = vmatpush2.msra.mxu0 0.0
    %2784 = vmatprep.mubr.f32.mxu0 0.0
    %2785 = vmatmul.mubr.f32.gmra.mxu0 %v2634
    %v2786 = vpop.f32.mrf.mxu0
    %v2787 = vadd.f32 0.0, %v2786
    %v2788 = vpop.f32.mrf.mxu0
    %2789 = vdwg.mxu0
    %v2790 = vadd.f32 %v2715, %v2787
    %v2791 = vxor.u32 %v2790, 2147483648
    %v2792 = vmul.f32 %v2791, 1.442695
    %v2793 = vpow.pop %v2792
    %v2794 = vadd.f32 %v2793, 1.0
    %v2795 = vrcp.pop %v2794
    %v2796 = vmul.f32 1.0, %v2795
    %s2797 = sadd.s32 48, 128
    %s2798 = scalar_lea.vmem [#allocation2], %s2797
    %v2799 = vld [vmem:[%s2798] sm:$0xff]
    %v2800 = vld [vmem:[%s759] sm:$0xff]
    %v2801 = vld [vmem:[%s759 + $0x8] sm:$0xff]
    %v2802 = vld [vmem:[%s759 + $0x10] sm:$0xff]
    %v2803 = vld [vmem:[%s759 + $0x18] sm:$0xff]
    %2804 = vmatprep.subr.mxu0 0.0
    %2805 = vmatpush1.msra.mxu0 0.0
    %2806 = vmatprep.subr.mxu0 0.0
    %2807 = vmatpush1.msra.mxu0 0.0
    %2808 = vmatprep.subr.mxu0 0.0
    %2809 = vmatpush1.msra.mxu0 0.0
    %2810 = vmatprep.subr.mxu0 0.0
    %2811 = vmatpush1.msra.mxu0 0.0
    %2812 = vmatprep.subr.mxu0 0.0
    %2813 = vmatpush1.msra.mxu0 0.0
    %2814 = vmatprep.subr.mxu0 0.0
    %2815 = vmatpush1.msra.mxu0 0.0
    %2816 = vmatprep.subr.mxu0 0.0
    %2817 = vmatpush1.msra.mxu0 0.0
    %2818 = vmatprep.subr.mxu0 0.0
    %2819 = vmatpush1.msra.mxu0 0.0
    %2820 = vmatprep.subr.mxu0 0.0
    %2821 = vmatpush1.msra.mxu0 0.0
    %2822 = vmatprep.subr.mxu0 0.0
    %2823 = vmatpush1.msra.mxu0 0.0
    %2824 = vmatprep.subr.mxu0 0.0
    %2825 = vmatpush1.msra.mxu0 0.0
    %2826 = vmatprep.subr.mxu0 0.0
    %2827 = vmatpush1.msra.mxu0 0.0
    %2828 = vmatprep.subr.mxu0 0.0
    %2829 = vmatpush1.msra.mxu0 %v2803
    %2830 = vmatprep.subr.mxu0 0.0
    %2831 = vmatpush1.msra.mxu0 %v2802
    %2832 = vmatprep.subr.mxu0 0.0
    %2833 = vmatpush1.msra.mxu0 %v2801
    %2834 = vmatprep.subr.mxu0 0.0
    %2835 = vmatpush1.msra.mxu0 %v2800
    %2836 = vmatprep.subr.mxu0 0.0
    %2837 = vmatpush2.msra.mxu0 0.0
    %2838 = vmatprep.subr.mxu0 0.0
    %2839 = vmatpush2.msra.mxu0 0.0
    %2840 = vmatprep.subr.mxu0 0.0
    %2841 = vmatpush2.msra.mxu0 0.0
    %2842 = vmatprep.subr.mxu0 0.0
    %2843 = vmatpush2.msra.mxu0 0.0
    %2844 = vmatprep.subr.mxu0 0.0
    %2845 = vmatpush2.msra.mxu0 0.0
    %2846 = vmatprep.subr.mxu0 0.0
    %2847 = vmatpush2.msra.mxu0 0.0
    %2848 = vmatprep.subr.mxu0 0.0
    %2849 = vmatpush2.msra.mxu0 0.0
    %2850 = vmatprep.subr.mxu0 0.0
    %2851 = vmatpush2.msra.mxu0 0.0
    %2852 = vmatprep.subr.mxu0 0.0
    %2853 = vmatpush2.msra.mxu0 0.0
    %2854 = vmatprep.subr.mxu0 0.0
    %2855 = vmatpush2.msra.mxu0 0.0
    %2856 = vmatprep.subr.mxu0 0.0
    %2857 = vmatpush2.msra.mxu0 0.0
    %2858 = vmatprep.subr.mxu0 0.0
    %2859 = vmatpush2.msra.mxu0 0.0
    %2860 = vmatprep.subr.mxu0 0.0
    %2861 = vmatpush2.msra.mxu0 0.0
    %2862 = vmatprep.subr.mxu0 0.0
    %2863 = vmatpush2.msra.mxu0 0.0
    %2864 = vmatprep.subr.mxu0 0.0
    %2865 = vmatpush2.msra.mxu0 0.0
    %2866 = vmatprep.subr.mxu0 0.0
    %2867 = vmatpush2.msra.mxu0 0.0
    %2868 = vmatprep.mubr.f32.mxu0 0.0
    %2869 = vmatmul.mubr.f32.gmra.mxu0 %v2634
    %v2870 = vpop.f32.mrf.mxu0
    %v2871 = vadd.f32 0.0, %v2870
    %v2872 = vpop.f32.mrf.mxu0
    %2873 = vdwg.mxu0
    %v2874 = vadd.f32 %v2799, %v2871
    %v2875 = vtanh.pop %v2874
    %s2876 = sadd.s32 48, 192
    %s2877 = scalar_lea.vmem [#allocation2], %s2876
    %v2878 = vld [vmem:[%s2877] sm:$0xff]
    %v2879 = vld [vmem:[%s839] sm:$0xff]
    %v2880 = vld [vmem:[%s839 + $0x8] sm:$0xff]
    %v2881 = vld [vmem:[%s839 + $0x10] sm:$0xff]
    %v2882 = vld [vmem:[%s839 + $0x18] sm:$0xff]
    %2883 = vmatprep.subr.mxu0 0.0
    %2884 = vmatpush1.msra.mxu0 0.0
    %2885 = vmatprep.subr.mxu0 0.0
    %2886 = vmatpush1.msra.mxu0 0.0
    %2887 = vmatprep.subr.mxu0 0.0
    %2888 = vmatpush1.msra.mxu0 0.0
    %2889 = vmatprep.subr.mxu0 0.0
    %2890 = vmatpush1.msra.mxu0 0.0
    %2891 = vmatprep.subr.mxu0 0.0
    %2892 = vmatpush1.msra.mxu0 0.0
    %2893 = vmatprep.subr.mxu0 0.0
    %2894 = vmatpush1.msra.mxu0 0.0
    %2895 = vmatprep.subr.mxu0 0.0
    %2896 = vmatpush1.msra.mxu0 0.0
    %2897 = vmatprep.subr.mxu0 0.0
    %2898 = vmatpush1.msra.mxu0 0.0
    %2899 = vmatprep.subr.mxu0 0.0
    %2900 = vmatpush1.msra.mxu0 0.0
    %2901 = vmatprep.subr.mxu0 0.0
    %2902 = vmatpush1.msra.mxu0 0.0
    %2903 = vmatprep.subr.mxu0 0.0
    %2904 = vmatpush1.msra.mxu0 0.0
    %2905 = vmatprep.subr.mxu0 0.0
    %2906 = vmatpush1.msra.mxu0 0.0
    %2907 = vmatprep.subr.mxu0 0.0
    %2908 = vmatpush1.msra.mxu0 %v2882
    %2909 = vmatprep.subr.mxu0 0.0
    %2910 = vmatpush1.msra.mxu0 %v2881
    %2911 = vmatprep.subr.mxu0 0.0
    %2912 = vmatpush1.msra.mxu0 %v2880
    %2913 = vmatprep.subr.mxu0 0.0
    %2914 = vmatpush1.msra.mxu0 %v2879
    %2915 = vmatprep.subr.mxu0 0.0
    %2916 = vmatpush2.msra.mxu0 0.0
    %2917 = vmatprep.subr.mxu0 0.0
    %2918 = vmatpush2.msra.mxu0 0.0
    %2919 = vmatprep.subr.mxu0 0.0
    %2920 = vmatpush2.msra.mxu0 0.0
    %2921 = vmatprep.subr.mxu0 0.0
    %2922 = vmatpush2.msra.mxu0 0.0
    %2923 = vmatprep.subr.mxu0 0.0
    %2924 = vmatpush2.msra.mxu0 0.0
    %2925 = vmatprep.subr.mxu0 0.0
    %2926 = vmatpush2.msra.mxu0 0.0
    %2927 = vmatprep.subr.mxu0 0.0
    %2928 = vmatpush2.msra.mxu0 0.0
    %2929 = vmatprep.subr.mxu0 0.0
    %2930 = vmatpush2.msra.mxu0 0.0
    %2931 = vmatprep.subr.mxu0 0.0
    %2932 = vmatpush2.msra.mxu0 0.0
    %2933 = vmatprep.subr.mxu0 0.0
    %2934 = vmatpush2.msra.mxu0 0.0
    %2935 = vmatprep.subr.mxu0 0.0
    %2936 = vmatpush2.msra.mxu0 0.0
    %2937 = vmatprep.subr.mxu0 0.0
    %2938 = vmatpush2.msra.mxu0 0.0
    %2939 = vmatprep.subr.mxu0 0.0
    %2940 = vmatpush2.msra.mxu0 0.0
    %2941 = vmatprep.subr.mxu0 0.0
    %2942 = vmatpush2.msra.mxu0 0.0
    %2943 = vmatprep.subr.mxu0 0.0
    %2944 = vmatpush2.msra.mxu0 0.0
    %2945 = vmatprep.subr.mxu0 0.0
    %2946 = vmatpush2.msra.mxu0 0.0
    %2947 = vmatprep.mubr.f32.mxu0 0.0
    %2948 = vmatmul.mubr.f32.gmra.mxu0 %v2634
    %v2949 = vpop.f32.mrf.mxu0
    %v2950 = vadd.f32 0.0, %v2949
    %v2951 = vpop.f32.mrf.mxu0
    %2952 = vdwg.mxu0
    %v2953 = vadd.f32 %v2878, %v2950
    %v2954 = vxor.u32 %v2953, 2147483648
    %v2955 = vmul.f32 %v2954, 1.442695
    %v2956 = vpow.pop %v2955
    %v2957 = vadd.f32 %v2956, 1.0
    %v2958 = vrcp.pop %v2957
    %v2959 = vmul.f32 1.0, %v2958
    %v2960 = vmul.f32 %v2796, %v2622
    %v2961 = vmul.f32 %v2712, %v2875
    %v2962 = vadd.f32 %v2960, %v2961
    %v2963 = vtanh.pop %v2962
    %v2964 = vmul.f32 %v2959, %v2963
    %s2965 = scalar_lea.vmem [#allocation3], 48
    %2966 = vst.msk [vmem:[%s2965] sm:$0xff] %vm205, %v2964
    %s2967 = scalar_lea.vmem [#allocation2], 56
    %v2968 = vld [vmem:[%s2967] sm:$0xff]
    %v2969 = vld [vmem:[%s2] sm:$0xff]
    %v2970 = vld [vmem:[%s2 + $0x8] sm:$0xff]
    %v2971 = vld [vmem:[%s2 + $0x10] sm:$0xff]
    %v2972 = vld [vmem:[%s2 + $0x18] sm:$0xff]
    %v2974 = vsel %vm205, %v2964, 0
    %2976 = vmatprep.subr.mxu0 0.0
    %2977 = vmatpush1.msra.mxu0 0.0
    %2978 = vmatprep.subr.mxu0 0.0
    %2979 = vmatpush1.msra.mxu0 0.0
    %2980 = vmatprep.subr.mxu0 0.0
    %2981 = vmatpush1.msra.mxu0 0.0
    %2982 = vmatprep.subr.mxu0 0.0
    %2983 = vmatpush1.msra.mxu0 0.0
    %2984 = vmatprep.subr.mxu0 0.0
    %2985 = vmatpush1.msra.mxu0 0.0
    %2986 = vmatprep.subr.mxu0 0.0
    %2987 = vmatpush1.msra.mxu0 0.0
    %2988 = vmatprep.subr.mxu0 0.0
    %2989 = vmatpush1.msra.mxu0 0.0
    %2990 = vmatprep.subr.mxu0 0.0
    %2991 = vmatpush1.msra.mxu0 0.0
    %2992 = vmatprep.subr.mxu0 0.0
    %2993 = vmatpush1.msra.mxu0 0.0
    %2994 = vmatprep.subr.mxu0 0.0
    %2995 = vmatpush1.msra.mxu0 0.0
    %2996 = vmatprep.subr.mxu0 0.0
    %2997 = vmatpush1.msra.mxu0 0.0
    %2998 = vmatprep.subr.mxu0 0.0
    %2999 = vmatpush1.msra.mxu0 0.0
    %3000 = vmatprep.subr.mxu0 0.0
    %3001 = vmatpush1.msra.mxu0 %v2972
    %3002 = vmatprep.subr.mxu0 0.0
    %3003 = vmatpush1.msra.mxu0 %v2971
    %3004 = vmatprep.subr.mxu0 0.0
    %3005 = vmatpush1.msra.mxu0 %v2970
    %3006 = vmatprep.subr.mxu0 0.0
    %3007 = vmatpush1.msra.mxu0 %v2969
    %3008 = vmatprep.subr.mxu0 0.0
    %3009 = vmatpush2.msra.mxu0 0.0
    %3010 = vmatprep.subr.mxu0 0.0
    %3011 = vmatpush2.msra.mxu0 0.0
    %3012 = vmatprep.subr.mxu0 0.0
    %3013 = vmatpush2.msra.mxu0 0.0
    %3014 = vmatprep.subr.mxu0 0.0
    %3015 = vmatpush2.msra.mxu0 0.0
    %3016 = vmatprep.subr.mxu0 0.0
    %3017 = vmatpush2.msra.mxu0 0.0
    %3018 = vmatprep.subr.mxu0 0.0
    %3019 = vmatpush2.msra.mxu0 0.0
    %3020 = vmatprep.subr.mxu0 0.0
    %3021 = vmatpush2.msra.mxu0 0.0
    %3022 = vmatprep.subr.mxu0 0.0
    %3023 = vmatpush2.msra.mxu0 0.0
    %3024 = vmatprep.subr.mxu0 0.0
    %3025 = vmatpush2.msra.mxu0 0.0
    %3026 = vmatprep.subr.mxu0 0.0
    %3027 = vmatpush2.msra.mxu0 0.0
    %3028 = vmatprep.subr.mxu0 0.0
    %3029 = vmatpush2.msra.mxu0 0.0
    %3030 = vmatprep.subr.mxu0 0.0
    %3031 = vmatpush2.msra.mxu0 0.0
    %3032 = vmatprep.subr.mxu0 0.0
    %3033 = vmatpush2.msra.mxu0 0.0
    %3034 = vmatprep.subr.mxu0 0.0
    %3035 = vmatpush2.msra.mxu0 0.0
    %3036 = vmatprep.subr.mxu0 0.0
    %3037 = vmatpush2.msra.mxu0 0.0
    %3038 = vmatprep.subr.mxu0 0.0
    %3039 = vmatpush2.msra.mxu0 0.0
    %3040 = vmatprep.mubr.f32.mxu0 0.0
    %3041 = vmatmul.mubr.f32.gmra.mxu0 %v2974
    %v3042 = vpop.f32.mrf.mxu0
    %v3043 = vadd.f32 0.0, %v3042
    %v3044 = vpop.f32.mrf.mxu0
    %3045 = vdwg.mxu0
    %v3046 = vadd.f32 %v2968, %v3043
    %v3047 = vxor.u32 %v3046, 2147483648
    %v3048 = vmul.f32 %v3047, 1.442695
    %v3049 = vpow.pop %v3048
    %v3050 = vadd.f32 %v3049, 1.0
    %v3051 = vrcp.pop %v3050
    %v3052 = vmul.f32 1.0, %v3051
    %s3053 = sadd.s32 56, 64
    %s3054 = scalar_lea.vmem [#allocation2], %s3053
    %v3055 = vld [vmem:[%s3054] sm:$0xff]
    %v3056 = vld [vmem:[%s674] sm:$0xff]
    %v3057 = vld [vmem:[%s674 + $0x8] sm:$0xff]
    %v3058 = vld [vmem:[%s674 + $0x10] sm:$0xff]
    %v3059 = vld [vmem:[%s674 + $0x18] sm:$0xff]
    %3060 = vmatprep.subr.mxu0 0.0
    %3061 = vmatpush1.msra.mxu0 0.0
    %3062 = vmatprep.subr.mxu0 0.0
    %3063 = vmatpush1.msra.mxu0 0.0
    %3064 = vmatprep.subr.mxu0 0.0
    %3065 = vmatpush1.msra.mxu0 0.0
    %3066 = vmatprep.subr.mxu0 0.0
    %3067 = vmatpush1.msra.mxu0 0.0
    %3068 = vmatprep.subr.mxu0 0.0
    %3069 = vmatpush1.msra.mxu0 0.0
    %3070 = vmatprep.subr.mxu0 0.0
    %3071 = vmatpush1.msra.mxu0 0.0
    %3072 = vmatprep.subr.mxu0 0.0
    %3073 = vmatpush1.msra.mxu0 0.0
    %3074 = vmatprep.subr.mxu0 0.0
    %3075 = vmatpush1.msra.mxu0 0.0
    %3076 = vmatprep.subr.mxu0 0.0
    %3077 = vmatpush1.msra.mxu0 0.0
    %3078 = vmatprep.subr.mxu0 0.0
    %3079 = vmatpush1.msra.mxu0 0.0
    %3080 = vmatprep.subr.mxu0 0.0
    %3081 = vmatpush1.msra.mxu0 0.0
    %3082 = vmatprep.subr.mxu0 0.0
    %3083 = vmatpush1.msra.mxu0 0.0
    %3084 = vmatprep.subr.mxu0 0.0
    %3085 = vmatpush1.msra.mxu0 %v3059
    %3086 = vmatprep.subr.mxu0 0.0
    %3087 = vmatpush1.msra.mxu0 %v3058
    %3088 = vmatprep.subr.mxu0 0.0
    %3089 = vmatpush1.msra.mxu0 %v3057
    %3090 = vmatprep.subr.mxu0 0.0
    %3091 = vmatpush1.msra.mxu0 %v3056
    %3092 = vmatprep.subr.mxu0 0.0
    %3093 = vmatpush2.msra.mxu0 0.0
    %3094 = vmatprep.subr.mxu0 0.0
    %3095 = vmatpush2.msra.mxu0 0.0
    %3096 = vmatprep.subr.mxu0 0.0
    %3097 = vmatpush2.msra.mxu0 0.0
    %3098 = vmatprep.subr.mxu0 0.0
    %3099 = vmatpush2.msra.mxu0 0.0
    %3100 = vmatprep.subr.mxu0 0.0
    %3101 = vmatpush2.msra.mxu0 0.0
    %3102 = vmatprep.subr.mxu0 0.0
    %3103 = vmatpush2.msra.mxu0 0.0
    %3104 = vmatprep.subr.mxu0 0.0
    %3105 = vmatpush2.msra.mxu0 0.0
    %3106 = vmatprep.subr.mxu0 0.0
    %3107 = vmatpush2.msra.mxu0 0.0
    %3108 = vmatprep.subr.mxu0 0.0
    %3109 = vmatpush2.msra.mxu0 0.0
    %3110 = vmatprep.subr.mxu0 0.0
    %3111 = vmatpush2.msra.mxu0 0.0
    %3112 = vmatprep.subr.mxu0 0.0
    %3113 = vmatpush2.msra.mxu0 0.0
    %3114 = vmatprep.subr.mxu0 0.0
    %3115 = vmatpush2.msra.mxu0 0.0
    %3116 = vmatprep.subr.mxu0 0.0
    %3117 = vmatpush2.msra.mxu0 0.0
    %3118 = vmatprep.subr.mxu0 0.0
    %3119 = vmatpush2.msra.mxu0 0.0
    %3120 = vmatprep.subr.mxu0 0.0
    %3121 = vmatpush2.msra.mxu0 0.0
    %3122 = vmatprep.subr.mxu0 0.0
    %3123 = vmatpush2.msra.mxu0 0.0
    %3124 = vmatprep.mubr.f32.mxu0 0.0
    %3125 = vmatmul.mubr.f32.gmra.mxu0 %v2974
    %v3126 = vpop.f32.mrf.mxu0
    %v3127 = vadd.f32 0.0, %v3126
    %v3128 = vpop.f32.mrf.mxu0
    %3129 = vdwg.mxu0
    %v3130 = vadd.f32 %v3055, %v3127
    %v3131 = vxor.u32 %v3130, 2147483648
    %v3132 = vmul.f32 %v3131, 1.442695
    %v3133 = vpow.pop %v3132
    %v3134 = vadd.f32 %v3133, 1.0
    %v3135 = vrcp.pop %v3134
    %v3136 = vmul.f32 1.0, %v3135
    %s3137 = sadd.s32 56, 128
    %s3138 = scalar_lea.vmem [#allocation2], %s3137
    %v3139 = vld [vmem:[%s3138] sm:$0xff]
    %v3140 = vld [vmem:[%s759] sm:$0xff]
    %v3141 = vld [vmem:[%s759 + $0x8] sm:$0xff]
    %v3142 = vld [vmem:[%s759 + $0x10] sm:$0xff]
    %v3143 = vld [vmem:[%s759 + $0x18] sm:$0xff]
    %3144 = vmatprep.subr.mxu0 0.0
    %3145 = vmatpush1.msra.mxu0 0.0
    %3146 = vmatprep.subr.mxu0 0.0
    %3147 = vmatpush1.msra.mxu0 0.0
    %3148 = vmatprep.subr.mxu0 0.0
    %3149 = vmatpush1.msra.mxu0 0.0
    %3150 = vmatprep.subr.mxu0 0.0
    %3151 = vmatpush1.msra.mxu0 0.0
    %3152 = vmatprep.subr.mxu0 0.0
    %3153 = vmatpush1.msra.mxu0 0.0
    %3154 = vmatprep.subr.mxu0 0.0
    %3155 = vmatpush1.msra.mxu0 0.0
    %3156 = vmatprep.subr.mxu0 0.0
    %3157 = vmatpush1.msra.mxu0 0.0
    %3158 = vmatprep.subr.mxu0 0.0
    %3159 = vmatpush1.msra.mxu0 0.0
    %3160 = vmatprep.subr.mxu0 0.0
    %3161 = vmatpush1.msra.mxu0 0.0
    %3162 = vmatprep.subr.mxu0 0.0
    %3163 = vmatpush1.msra.mxu0 0.0
    %3164 = vmatprep.subr.mxu0 0.0
    %3165 = vmatpush1.msra.mxu0 0.0
    %3166 = vmatprep.subr.mxu0 0.0
    %3167 = vmatpush1.msra.mxu0 0.0
    %3168 = vmatprep.subr.mxu0 0.0
    %3169 = vmatpush1.msra.mxu0 %v3143
    %3170 = vmatprep.subr.mxu0 0.0
    %3171 = vmatpush1.msra.mxu0 %v3142
    %3172 = vmatprep.subr.mxu0 0.0
    %3173 = vmatpush1.msra.mxu0 %v3141
    %3174 = vmatprep.subr.mxu0 0.0
    %3175 = vmatpush1.msra.mxu0 %v3140
    %3176 = vmatprep.subr.mxu0 0.0
    %3177 = vmatpush2.msra.mxu0 0.0
    %3178 = vmatprep.subr.mxu0 0.0
    %3179 = vmatpush2.msra.mxu0 0.0
    %3180 = vmatprep.subr.mxu0 0.0
    %3181 = vmatpush2.msra.mxu0 0.0
    %3182 = vmatprep.subr.mxu0 0.0
    %3183 = vmatpush2.msra.mxu0 0.0
    %3184 = vmatprep.subr.mxu0 0.0
    %3185 = vmatpush2.msra.mxu0 0.0
    %3186 = vmatprep.subr.mxu0 0.0
    %3187 = vmatpush2.msra.mxu0 0.0
    %3188 = vmatprep.subr.mxu0 0.0
    %3189 = vmatpush2.msra.mxu0 0.0
    %3190 = vmatprep.subr.mxu0 0.0
    %3191 = vmatpush2.msra.mxu0 0.0
    %3192 = vmatprep.subr.mxu0 0.0
    %3193 = vmatpush2.msra.mxu0 0.0
    %3194 = vmatprep.subr.mxu0 0.0
    %3195 = vmatpush2.msra.mxu0 0.0
    %3196 = vmatprep.subr.mxu0 0.0
    %3197 = vmatpush2.msra.mxu0 0.0
    %3198 = vmatprep.subr.mxu0 0.0
    %3199 = vmatpush2.msra.mxu0 0.0
    %3200 = vmatprep.subr.mxu0 0.0
    %3201 = vmatpush2.msra.mxu0 0.0
    %3202 = vmatprep.subr.mxu0 0.0
    %3203 = vmatpush2.msra.mxu0 0.0
    %3204 = vmatprep.subr.mxu0 0.0
    %3205 = vmatpush2.msra.mxu0 0.0
    %3206 = vmatprep.subr.mxu0 0.0
    %3207 = vmatpush2.msra.mxu0 0.0
    %3208 = vmatprep.mubr.f32.mxu0 0.0
    %3209 = vmatmul.mubr.f32.gmra.mxu0 %v2974
    %v3210 = vpop.f32.mrf.mxu0
    %v3211 = vadd.f32 0.0, %v3210
    %v3212 = vpop.f32.mrf.mxu0
    %3213 = vdwg.mxu0
    %v3214 = vadd.f32 %v3139, %v3211
    %v3215 = vtanh.pop %v3214
    %s3216 = sadd.s32 56, 192
    %s3217 = scalar_lea.vmem [#allocation2], %s3216
    %v3218 = vld [vmem:[%s3217] sm:$0xff]
    %v3219 = vld [vmem:[%s839] sm:$0xff]
    %v3220 = vld [vmem:[%s839 + $0x8] sm:$0xff]
    %v3221 = vld [vmem:[%s839 + $0x10] sm:$0xff]
    %v3222 = vld [vmem:[%s839 + $0x18] sm:$0xff]
    %3223 = vmatprep.subr.mxu0 0.0
    %3224 = vmatpush1.msra.mxu0 0.0
    %3225 = vmatprep.subr.mxu0 0.0
    %3226 = vmatpush1.msra.mxu0 0.0
    %3227 = vmatprep.subr.mxu0 0.0
    %3228 = vmatpush1.msra.mxu0 0.0
    %3229 = vmatprep.subr.mxu0 0.0
    %3230 = vmatpush1.msra.mxu0 0.0
    %3231 = vmatprep.subr.mxu0 0.0
    %3232 = vmatpush1.msra.mxu0 0.0
    %3233 = vmatprep.subr.mxu0 0.0
    %3234 = vmatpush1.msra.mxu0 0.0
    %3235 = vmatprep.subr.mxu0 0.0
    %3236 = vmatpush1.msra.mxu0 0.0
    %3237 = vmatprep.subr.mxu0 0.0
    %3238 = vmatpush1.msra.mxu0 0.0
    %3239 = vmatprep.subr.mxu0 0.0
    %3240 = vmatpush1.msra.mxu0 0.0
    %3241 = vmatprep.subr.mxu0 0.0
    %3242 = vmatpush1.msra.mxu0 0.0
    %3243 = vmatprep.subr.mxu0 0.0
    %3244 = vmatpush1.msra.mxu0 0.0
    %3245 = vmatprep.subr.mxu0 0.0
    %3246 = vmatpush1.msra.mxu0 0.0
    %3247 = vmatprep.subr.mxu0 0.0
    %3248 = vmatpush1.msra.mxu0 %v3222
    %3249 = vmatprep.subr.mxu0 0.0
    %3250 = vmatpush1.msra.mxu0 %v3221
    %3251 = vmatprep.subr.mxu0 0.0
    %3252 = vmatpush1.msra.mxu0 %v3220
    %3253 = vmatprep.subr.mxu0 0.0
    %3254 = vmatpush1.msra.mxu0 %v3219
    %3255 = vmatprep.subr.mxu0 0.0
    %3256 = vmatpush2.msra.mxu0 0.0
    %3257 = vmatprep.subr.mxu0 0.0
    %3258 = vmatpush2.msra.mxu0 0.0
    %3259 = vmatprep.subr.mxu0 0.0
    %3260 = vmatpush2.msra.mxu0 0.0
    %3261 = vmatprep.subr.mxu0 0.0
    %3262 = vmatpush2.msra.mxu0 0.0
    %3263 = vmatprep.subr.mxu0 0.0
    %3264 = vmatpush2.msra.mxu0 0.0
    %3265 = vmatprep.subr.mxu0 0.0
    %3266 = vmatpush2.msra.mxu0 0.0
    %3267 = vmatprep.subr.mxu0 0.0
    %3268 = vmatpush2.msra.mxu0 0.0
    %3269 = vmatprep.subr.mxu0 0.0
    %3270 = vmatpush2.msra.mxu0 0.0
    %3271 = vmatprep.subr.mxu0 0.0
    %3272 = vmatpush2.msra.mxu0 0.0
    %3273 = vmatprep.subr.mxu0 0.0
    %3274 = vmatpush2.msra.mxu0 0.0
    %3275 = vmatprep.subr.mxu0 0.0
    %3276 = vmatpush2.msra.mxu0 0.0
    %3277 = vmatprep.subr.mxu0 0.0
    %3278 = vmatpush2.msra.mxu0 0.0
    %3279 = vmatprep.subr.mxu0 0.0
    %3280 = vmatpush2.msra.mxu0 0.0
    %3281 = vmatprep.subr.mxu0 0.0
    %3282 = vmatpush2.msra.mxu0 0.0
    %3283 = vmatprep.subr.mxu0 0.0
    %3284 = vmatpush2.msra.mxu0 0.0
    %3285 = vmatprep.subr.mxu0 0.0
    %3286 = vmatpush2.msra.mxu0 0.0
    %3287 = vmatprep.mubr.f32.mxu0 0.0
    %3288 = vmatmul.mubr.f32.gmra.mxu0 %v2974
    %v3289 = vpop.f32.mrf.mxu0
    %v3290 = vadd.f32 0.0, %v3289
    %v3291 = vpop.f32.mrf.mxu0
    %3292 = vdwg.mxu0
    %v3293 = vadd.f32 %v3218, %v3290
    %v3294 = vxor.u32 %v3293, 2147483648
    %v3295 = vmul.f32 %v3294, 1.442695
    %v3296 = vpow.pop %v3295
    %v3297 = vadd.f32 %v3296, 1.0
    %v3298 = vrcp.pop %v3297
    %v3299 = vmul.f32 1.0, %v3298
    %v3300 = vmul.f32 %v3136, %v2962
    %v3301 = vmul.f32 %v3052, %v3215
    %v3302 = vadd.f32 %v3300, %v3301
    %v3303 = vtanh.pop %v3302
    %v3304 = vmul.f32 %v3299, %v3303
    %s3305 = scalar_lea.vmem [#allocation3], 56
    %3306 = vst.msk [vmem:[%s3305] sm:$0xff] %vm205, %v3304
    %v3307 = vld [vmem:[#allocation3] sm:$0xff]
    %v3308 = vld [vmem:[#allocation3 + $0x8] sm:$0xff]
    %v3309 = vld [vmem:[#allocation3 + $0x10] sm:$0xff]
    %v3310 = vld [vmem:[#allocation3 + $0x18] sm:$0xff]
    %v3311 = vld [vmem:[#allocation3 + $0x20] sm:$0xff]
    %v3312 = vld [vmem:[#allocation3 + $0x28] sm:$0xff]
    %v3313 = vld [vmem:[#allocation3 + $0x30] sm:$0xff]
    %v3314 = vld [vmem:[#allocation3 + $0x38] sm:$0xff]
    %v3315 = vld [vmem:[%s4] sm:$0xff]
    %v3316 = vld [vmem:[%s4 + $0x8] sm:$0xff]
    %v3317 = vld [vmem:[%s4 + $0x10] sm:$0xff]
    %v3318 = vld [vmem:[%s4 + $0x18] sm:$0xff]
    %v3319 = vld [vmem:[%s5] sm:$0x1]
    %v3321 = vlaneseq
    %v3322 = vshrl.u32 %v3321, 7
    %v3323 = vsub.s32 0, %v3322
    %v3324 = vrot.slane %v3319, %v3323
    %v3327 = vsel %vm205, %v3307, 0
    %v3330 = vsel %vm205, %v3308, 0
    %v3333 = vsel %vm205, %v3309, 0
    %v3336 = vsel %vm205, %v3310, 0
    %v3339 = vsel %vm205, %v3311, 0
    %v3342 = vsel %vm205, %v3312, 0
    %v3345 = vsel %vm205, %v3313, 0
    %v3348 = vsel %vm205, %v3314, 0
    %3350 = vmatprep.subr.mxu0 0.0
    %3351 = vmatpush1.msra.mxu0 0.0
    %3352 = vmatprep.subr.mxu0 0.0
    %3353 = vmatpush1.msra.mxu0 0.0
    %3354 = vmatprep.subr.mxu0 0.0
    %3355 = vmatpush1.msra.mxu0 0.0
    %3356 = vmatprep.subr.mxu0 0.0
    %3357 = vmatpush1.msra.mxu0 0.0
    %3358 = vmatprep.subr.mxu0 0.0
    %3359 = vmatpush1.msra.mxu0 0.0
    %3360 = vmatprep.subr.mxu0 0.0
    %3361 = vmatpush1.msra.mxu0 0.0
    %3362 = vmatprep.subr.mxu0 0.0
    %3363 = vmatpush1.msra.mxu0 0.0
    %3364 = vmatprep.subr.mxu0 0.0
    %3365 = vmatpush1.msra.mxu0 0.0
    %3366 = vmatprep.subr.mxu0 0.0
    %3367 = vmatpush1.msra.mxu0 0.0
    %3368 = vmatprep.subr.mxu0 0.0
    %3369 = vmatpush1.msra.mxu0 0.0
    %3370 = vmatprep.subr.mxu0 0.0
    %3371 = vmatpush1.msra.mxu0 0.0
    %3372 = vmatprep.subr.mxu0 0.0
    %3373 = vmatpush1.msra.mxu0 0.0
    %3374 = vmatprep.subr.mxu0 0.0
    %3375 = vmatpush1.msra.mxu0 %v3318
    %3376 = vmatprep.subr.mxu0 0.0
    %3377 = vmatpush1.msra.mxu0 %v3317
    %3378 = vmatprep.subr.mxu0 0.0
    %3379 = vmatpush1.msra.mxu0 %v3316
    %3380 = vmatprep.subr.mxu0 0.0
    %3381 = vmatpush1.msra.mxu0 %v3315
    %3382 = vmatprep.subr.mxu0 0.0
    %3383 = vmatpush2.msra.mxu0 0.0
    %3384 = vmatprep.subr.mxu0 0.0
    %3385 = vmatpush2.msra.mxu0 0.0
    %3386 = vmatprep.subr.mxu0 0.0
    %3387 = vmatpush2.msra.mxu0 0.0
    %3388 = vmatprep.subr.mxu0 0.0
    %3389 = vmatpush2.msra.mxu0 0.0
    %3390 = vmatprep.subr.mxu0 0.0
    %3391 = vmatpush2.msra.mxu0 0.0
    %3392 = vmatprep.subr.mxu0 0.0
    %3393 = vmatpush2.msra.mxu0 0.0
    %3394 = vmatprep.subr.mxu0 0.0
    %3395 = vmatpush2.msra.mxu0 0.0
    %3396 = vmatprep.subr.mxu0 0.0
    %3397 = vmatpush2.msra.mxu0 0.0
    %3398 = vmatprep.subr.mxu0 0.0
    %3399 = vmatpush2.msra.mxu0 0.0
    %3400 = vmatprep.subr.mxu0 0.0
    %3401 = vmatpush2.msra.mxu0 0.0
    %3402 = vmatprep.subr.mxu0 0.0
    %3403 = vmatpush2.msra.mxu0 0.0
    %3404 = vmatprep.subr.mxu0 0.0
    %3405 = vmatpush2.msra.mxu0 0.0
    %3406 = vmatprep.subr.mxu0 0.0
    %3407 = vmatpush2.msra.mxu0 0.0
    %3408 = vmatprep.subr.mxu0 0.0
    %3409 = vmatpush2.msra.mxu0 0.0
    %3410 = vmatprep.subr.mxu0 0.0
    %3411 = vmatpush2.msra.mxu0 0.0
    %3412 = vmatprep.subr.mxu0 0.0
    %3413 = vmatpush2.msra.mxu0 0.0
    %3414 = vmatprep.mubr.f32.mxu0 0.0
    %3415 = vmatmul.mubr.f32.gmra.mxu0 %v3327
    %v3416 = vpop.f32.mrf.mxu0
    %v3417 = vadd.f32 %v3324, %v3416
    %v3418 = vpop.f32.mrf.mxu0
    %3419 = vmatprep.mubr.f32.mxu0 0.0
    %3420 = vmatmul.mubr.f32.gmra.mxu0 %v3330
    %v3421 = vpop.f32.mrf.mxu0
    %v3422 = vadd.f32 %v3324, %v3421
    %v3423 = vpop.f32.mrf.mxu0
    %3424 = vmatprep.mubr.f32.mxu0 0.0
    %3425 = vmatmul.mubr.f32.gmra.mxu0 %v3333
    %v3426 = vpop.f32.mrf.mxu0
    %v3427 = vadd.f32 %v3324, %v3426
    %v3428 = vpop.f32.mrf.mxu0
    %3429 = vmatprep.mubr.f32.mxu0 0.0
    %3430 = vmatmul.mubr.f32.gmra.mxu0 %v3336
    %v3431 = vpop.f32.mrf.mxu0
    %v3432 = vadd.f32 %v3324, %v3431
    %v3433 = vpop.f32.mrf.mxu0
    %3434 = vmatprep.mubr.f32.mxu0 0.0
    %3435 = vmatmul.mubr.f32.gmra.mxu0 %v3339
    %v3436 = vpop.f32.mrf.mxu0
    %v3437 = vadd.f32 %v3324, %v3436
    %v3438 = vpop.f32.mrf.mxu0
    %3439 = vmatprep.mubr.f32.mxu0 0.0
    %3440 = vmatmul.mubr.f32.gmra.mxu0 %v3342
    %v3441 = vpop.f32.mrf.mxu0
    %v3442 = vadd.f32 %v3324, %v3441
    %v3443 = vpop.f32.mrf.mxu0
    %3444 = vmatprep.mubr.f32.mxu0 0.0
    %3445 = vmatmul.mubr.f32.gmra.mxu0 %v3345
    %v3446 = vpop.f32.mrf.mxu0
    %v3447 = vadd.f32 %v3324, %v3446
    %v3448 = vpop.f32.mrf.mxu0
    %3449 = vmatprep.mubr.f32.mxu0 0.0
    %3450 = vmatmul.mubr.f32.gmra.mxu0 %v3348
    %v3451 = vpop.f32.mrf.mxu0
    %v3452 = vadd.f32 %v3324, %v3451
    %v3453 = vpop.f32.mrf.mxu0
    %3454 = vdwg.mxu0
    %v3455 = vmax.f32 %v3417, 0.0
    %v3456 = vmax.f32 %v3422, 0.0
    %v3457 = vmax.f32 %v3427, 0.0
    %v3458 = vmax.f32 %v3432, 0.0
    %v3459 = vmax.f32 %v3437, 0.0
    %v3460 = vmax.f32 %v3442, 0.0
    %v3461 = vmax.f32 %v3447, 0.0
    %v3462 = vmax.f32 %v3452, 0.0
    %v3463 = vld [vmem:[%s6] sm:$0xff]
    %v3464 = vld [vmem:[%s6 + $0x8] sm:$0xff]
    %v3465 = vld [vmem:[#allocation4] sm:$0x1]
    %v3467 = vlaneseq
    %v3468 = vshrl.u32 %v3467, 7
    %v3469 = vsub.s32 0, %v3468
    %v3470 = vrot.slane %v3465, %v3469
    %vm3472 = vcmask 130048
    %v3474 = vsel %vm3472, %v3455, 0
    %v3477 = vsel %vm3472, %v3456, 0
    %v3480 = vsel %vm3472, %v3457, 0
    %v3483 = vsel %vm3472, %v3458, 0
    %v3486 = vsel %vm3472, %v3459, 0
    %v3489 = vsel %vm3472, %v3460, 0
    %v3492 = vsel %vm3472, %v3461, 0
    %v3495 = vsel %vm3472, %v3462, 0
    %3497 = vmatprep.subr.mxu0 0.0
    %3498 = vmatpush1.msra.mxu0 0.0
    %3499 = vmatprep.subr.mxu0 0.0
    %3500 = vmatpush1.msra.mxu0 0.0
    %3501 = vmatprep.subr.mxu0 0.0
    %3502 = vmatpush1.msra.mxu0 0.0
    %3503 = vmatprep.subr.mxu0 0.0
    %3504 = vmatpush1.msra.mxu0 0.0
    %3505 = vmatprep.subr.mxu0 0.0
    %3506 = vmatpush1.msra.mxu0 0.0
    %3507 = vmatprep.subr.mxu0 0.0
    %3508 = vmatpush1.msra.mxu0 0.0
    %3509 = vmatprep.subr.mxu0 0.0
    %3510 = vmatpush1.msra.mxu0 0.0
    %3511 = vmatprep.subr.mxu0 0.0
    %3512 = vmatpush1.msra.mxu0 0.0
    %3513 = vmatprep.subr.mxu0 0.0
    %3514 = vmatpush1.msra.mxu0 0.0
    %3515 = vmatprep.subr.mxu0 0.0
    %3516 = vmatpush1.msra.mxu0 0.0
    %3517 = vmatprep.subr.mxu0 0.0
    %3518 = vmatpush1.msra.mxu0 0.0
    %3519 = vmatprep.subr.mxu0 0.0
    %3520 = vmatpush1.msra.mxu0 0.0
    %3521 = vmatprep.subr.mxu0 0.0
    %3522 = vmatpush1.msra.mxu0 0.0
    %3523 = vmatprep.subr.mxu0 0.0
    %3524 = vmatpush1.msra.mxu0 0.0
    %3525 = vmatprep.subr.mxu0 0.0
    %3526 = vmatpush1.msra.mxu0 %v3464
    %3527 = vmatprep.subr.mxu0 0.0
    %3528 = vmatpush1.msra.mxu0 %v3463
    %3529 = vmatprep.subr.mxu0 0.0
    %3530 = vmatpush2.msra.mxu0 0.0
    %3531 = vmatprep.subr.mxu0 0.0
    %3532 = vmatpush2.msra.mxu0 0.0
    %3533 = vmatprep.subr.mxu0 0.0
    %3534 = vmatpush2.msra.mxu0 0.0
    %3535 = vmatprep.subr.mxu0 0.0
    %3536 = vmatpush2.msra.mxu0 0.0
    %3537 = vmatprep.subr.mxu0 0.0
    %3538 = vmatpush2.msra.mxu0 0.0
    %3539 = vmatprep.subr.mxu0 0.0
    %3540 = vmatpush2.msra.mxu0 0.0
    %3541 = vmatprep.subr.mxu0 0.0
    %3542 = vmatpush2.msra.mxu0 0.0
    %3543 = vmatprep.subr.mxu0 0.0
    %3544 = vmatpush2.msra.mxu0 0.0
    %3545 = vmatprep.subr.mxu0 0.0
    %3546 = vmatpush2.msra.mxu0 0.0
    %3547 = vmatprep.subr.mxu0 0.0
    %3548 = vmatpush2.msra.mxu0 0.0
    %3549 = vmatprep.subr.mxu0 0.0
    %3550 = vmatpush2.msra.mxu0 0.0
    %3551 = vmatprep.subr.mxu0 0.0
    %3552 = vmatpush2.msra.mxu0 0.0
    %3553 = vmatprep.subr.mxu0 0.0
    %3554 = vmatpush2.msra.mxu0 0.0
    %3555 = vmatprep.subr.mxu0 0.0
    %3556 = vmatpush2.msra.mxu0 0.0
    %3557 = vmatprep.subr.mxu0 0.0
    %3558 = vmatpush2.msra.mxu0 0.0
    %3559 = vmatprep.subr.mxu0 0.0
    %3560 = vmatpush2.msra.mxu0 0.0
    %3561 = vmatprep.mubr.f32.mxu0 0.0
    %3562 = vmatmul.mubr.f32.gmra.mxu0 %v3474
    %v3563 = vpop.f32.mrf.mxu0
    %v3564 = vadd.f32 %v3470, %v3563
    %v3565 = vpop.f32.mrf.mxu0
    %3566 = vmatprep.mubr.f32.mxu0 0.0
    %3567 = vmatmul.mubr.f32.gmra.mxu0 %v3477
    %v3568 = vpop.f32.mrf.mxu0
    %v3569 = vadd.f32 %v3470, %v3568
    %v3570 = vpop.f32.mrf.mxu0
    %3571 = vmatprep.mubr.f32.mxu0 0.0
    %3572 = vmatmul.mubr.f32.gmra.mxu0 %v3480
    %v3573 = vpop.f32.mrf.mxu0
    %v3574 = vadd.f32 %v3470, %v3573
    %v3575 = vpop.f32.mrf.mxu0
    %3576 = vmatprep.mubr.f32.mxu0 0.0
    %3577 = vmatmul.mubr.f32.gmra.mxu0 %v3483
    %v3578 = vpop.f32.mrf.mxu0
    %v3579 = vadd.f32 %v3470, %v3578
    %v3580 = vpop.f32.mrf.mxu0
    %3581 = vmatprep.mubr.f32.mxu0 0.0
    %3582 = vmatmul.mubr.f32.gmra.mxu0 %v3486
    %v3583 = vpop.f32.mrf.mxu0
    %v3584 = vadd.f32 %v3470, %v3583
    %v3585 = vpop.f32.mrf.mxu0
    %3586 = vmatprep.mubr.f32.mxu0 0.0
    %3587 = vmatmul.mubr.f32.gmra.mxu0 %v3489
    %v3588 = vpop.f32.mrf.mxu0
    %v3589 = vadd.f32 %v3470, %v3588
    %v3590 = vpop.f32.mrf.mxu0
    %3591 = vmatprep.mubr.f32.mxu0 0.0
    %3592 = vmatmul.mubr.f32.gmra.mxu0 %v3492
    %v3593 = vpop.f32.mrf.mxu0
    %v3594 = vadd.f32 %v3470, %v3593
    %v3595 = vpop.f32.mrf.mxu0
    %3596 = vmatprep.mubr.f32.mxu0 0.0
    %3597 = vmatmul.mubr.f32.gmra.mxu0 %v3495
    %v3598 = vpop.f32.mrf.mxu0
    %v3599 = vadd.f32 %v3470, %v3598
    %v3600 = vpop.f32.mrf.mxu0
    %3601 = vdwg.mxu0
    %v3602 = vxor.u32 %v3564, 2147483648
    %v3603 = vxor.u32 %v3569, 2147483648
    %v3604 = vxor.u32 %v3574, 2147483648
    %v3605 = vxor.u32 %v3579, 2147483648
    %v3606 = vxor.u32 %v3584, 2147483648
    %v3607 = vxor.u32 %v3589, 2147483648
    %v3608 = vxor.u32 %v3594, 2147483648
    %v3609 = vxor.u32 %v3599, 2147483648
    %v3610 = vmul.f32 %v3602, 1.442695
    %v3611 = vpow.pop %v3610
    %v3612 = vmul.f32 %v3603, 1.442695
    %v3613 = vpow.pop %v3612
    %v3614 = vmul.f32 %v3604, 1.442695
    %v3615 = vpow.pop %v3614
    %v3616 = vmul.f32 %v3605, 1.442695
    %v3617 = vpow.pop %v3616
    %v3618 = vmul.f32 %v3606, 1.442695
    %v3619 = vpow.pop %v3618
    %v3620 = vmul.f32 %v3607, 1.442695
    %v3621 = vpow.pop %v3620
    %v3622 = vmul.f32 %v3608, 1.442695
    %v3623 = vpow.pop %v3622
    %v3624 = vmul.f32 %v3609, 1.442695
    %v3625 = vpow.pop %v3624
    %v3626 = vadd.f32 %v3611, 1.0
    %v3627 = vadd.f32 %v3613, 1.0
    %v3628 = vadd.f32 %v3615, 1.0
    %v3629 = vadd.f32 %v3617, 1.0
    %v3630 = vadd.f32 %v3619, 1.0
    %v3631 = vadd.f32 %v3621, 1.0
    %v3632 = vadd.f32 %v3623, 1.0
    %v3633 = vadd.f32 %v3625, 1.0
    %v3634 = vrcp.pop %v3626
    %v3635 = vmul.f32 1.0, %v3634
    %v3636 = vrcp.pop %v3627
    %v3637 = vmul.f32 1.0, %v3636
    %v3638 = vrcp.pop %v3628
    %v3639 = vmul.f32 1.0, %v3638
    %v3640 = vrcp.pop %v3629
    %v3641 = vmul.f32 1.0, %v3640
    %v3642 = vrcp.pop %v3630
    %v3643 = vmul.f32 1.0, %v3642
    %v3644 = vrcp.pop %v3631
    %v3645 = vmul.f32 1.0, %v3644
    %v3646 = vrcp.pop %v3632
    %v3647 = vmul.f32 1.0, %v3646
    %v3648 = vrcp.pop %v3633
    %v3649 = vmul.f32 1.0, %v3648
    %vm3650 = vcmask 7168
    %3651 = vst.msk [vmem:[%s8] sm:$0xff] %vm3650, %v3635
    %3652 = vst.msk [vmem:[%s8 + $0x8] sm:$0xff] %vm3650, %v3637
    %3653 = vst.msk [vmem:[%s8 + $0x10] sm:$0xff] %vm3650, %v3639
    %3654 = vst.msk [vmem:[%s8 + $0x18] sm:$0xff] %vm3650, %v3641
    %3655 = vst.msk [vmem:[%s8 + $0x20] sm:$0xff] %vm3650, %v3643
    %3656 = vst.msk [vmem:[%s8 + $0x28] sm:$0xff] %vm3650, %v3645
    %3657 = vst.msk [vmem:[%s8 + $0x30] sm:$0xff] %vm3650, %v3647
    %3658 = vst.msk [vmem:[%s8 + $0x38] sm:$0xff] %vm3650, %v3649
    // Predicated region
    $region42: #{tpu_custom_call.1} parent=1 // pred_check
      _
    $region43: #{tpu_custom_call.1} parent=1 // pred_check_branch
      %3660 = sbr.rel (0) target = $region45
    $region44: #{tpu_custom_call.1} parent=1 // pred_region
      _
    $region45: #{tpu_custom_call.1} parent=1 // pred_fallthru
      _
    // Predicated region
    $region46: #{tpu_custom_call.1} parent=1 // pred_check
      _
    $region47: #{tpu_custom_call.1} parent=1 // pred_check_branch
      %3662 = sbr.rel (0) target = $region49
    $region48: #{tpu_custom_call.1} parent=1 // pred_region
      _
    $region49: #{tpu_custom_call.1} parent=1 // pred_fallthru
      _
    %3663 = vsyncpa [#allocation6], 1
    %3664 = vsyncpa [#allocation8], 1

</llo_original>
